<compile_context>
chip_gen: v7x
topology: tpu7x:2x2x1
jax: 0.10.0
libtpu: 0.0.40
codegen_flags: <defaults>
</compile_context>

<pallas_src>
import functools
import math

import jax
import jax.numpy as jnp
import numpy as np
from jax.experimental import pallas as pl
from jax.experimental.pallas import tpu as pltpu


# --------------------------------------------------------------------------
# Pallas kernel: full NeRF MLP for one tile of TM super-rows (TM*G points).
# --------------------------------------------------------------------------
def _nerf_kernel(pos_ref, dir_ref,
                 wpin, b00, wD, bD, whead, bhead,
                 wr0a, wr0b, br0, wr1, br1,
                 o_ref, *, gd):
    pos = pos_ref[...]     # (TM, G*P)   bf16
    dirs = dir_ref[...]    # (TM, G*DIR) bf16
    cd = pos.dtype         # MXU input dtype

    def mm(x, w):
        # bf16 x bf16 -> f32 accumulation on the MXU
        return jnp.dot(x, w, preferred_element_type=jnp.float32)

    def relu(v):
        return jnp.maximum(v, 0.0)

    # ---- layers0: Linear(P,D)+ReLU, then 3 x (Linear(D,D)+ReLU) -------------
    x = relu(mm(pos, wpin[0]) + b00[...])
    for j in range(3):                       # static unroll
        x = relu(mm(x.astype(cd), wD[j]) + bD[j])

    # ---- layers1: first Linear consumes cat([x, pos]) -> split weights ------
    # Keep the two dots adjacent so v7x can chain accumulation in the MRB.
    x = relu(mm(x.astype(cd), wD[3]) + mm(pos, wpin[1]) + bD[3])
    for j in range(4, 7):
        x = relu(mm(x.astype(cd), wD[j]) + bD[j])

    # ---- fused density + feature heads: one matmul, slice outputs -----------
    head = mm(x.astype(cd), whead[...]) + bhead[...]    # (TM, G*D + G)
    feat = head[:, :gd]                                 # (TM, G*D)  tile-aligned
    density = head[:, gd:]                              # (TM, G)

    # ---- rgb branch: first Linear consumes cat([feat, dir]) -> split weights
    h = relu(mm(feat.astype(cd), wr0a[...]) + mm(dirs, wr0b[...]) + br0[...])
    rgb = mm(h.astype(cd), wr1[...]) + br1[...]         # (TM, G*3)

    # Single merged store: [rgb_pack | density_pack]  -> unscrambled in wrapper
    o_ref[...] = jnp.concatenate([rgb, density], axis=-1).astype(o_ref.dtype)


# --------------------------------------------------------------------------
# Parameter packing: block-diagonal lane-packing (kron(I_G, W)), stacked
# slabs for repeated layers, fused density+feature head.  Weights bf16,
# biases f32.
# --------------------------------------------------------------------------
def _pack_params(params, g, wdtype):
    (w00, b00, w01, b01, w02, b02, w03, b03,
     w10a, w10b, b10, w11, b11, w12, b12, w13, b13,
     wden, bden, wfeat, bfeat,
     wr0a, wr0b, br0, wr1, br1) = params

    eye = jnp.eye(g, dtype=jnp.float32)

    def bd(w):   # block-diag: one copy of W per lane-packed point
        return jnp.kron(eye, w.astype(jnp.float32)).astype(wdtype)

    def bt(b):   # bias tiled per point (kept f32)
        return jnp.tile(b, (1, g))

    # Weights that consume the (packed) positional encoding: (2, G*P, G*D)
    wpin = jnp.stack([bd(w00), bd(w10b)])
    # All D->D hidden weights: [w01,w02,w03, w10a, w11,w12,w13] -> (7, G*D, G*D)
    wD = jnp.stack([bd(w01), bd(w02), bd(w03), bd(w10a),
                    bd(w11), bd(w12), bd(w13)])
    bD = jnp.stack([bt(b01), bt(b02), bt(b03), bt(b10),
                    bt(b11), bt(b12), bt(b13)])          # (7, 1, G*D) f32
    # Fused feature + density head: (G*D, G*D + G)
    whead = jnp.concatenate([bd(wfeat), bd(wden)], axis=1)
    bhead = jnp.concatenate([bt(bfeat), bt(bden)], axis=1)

    return (wpin, bt(b00), wD, bD, whead, bhead,
            bd(wr0a), bd(wr0b), bt(br0), bd(wr1), bt(br1))


# --------------------------------------------------------------------------
# Wrapper: flatten spatial dims, lane-pack G points per row, tile rows,
# feed weights as full (single-block) VMEM operands.
# --------------------------------------------------------------------------
def nerf_forward(pos_enc, dir_enc, params, *, g=4, tm=1024,
                 compute_dtype=jnp.bfloat16):
    H, W, N, P = pos_enc.shape
    DIRC = dir_enc.shape[-1]
    D = params[0].shape[1]
    M = H * W * N

    # Super-rows of g points; clamp the row tile so small inputs keep grid>=2
    # (v7x megacore) without excessive padding.
    msup = pl.cdiv(M, g)
    tm_eff = min(tm, max(8, ((pl.cdiv(msup, 2) + 7) // 8) * 8))
    msup_pad = pl.cdiv(msup, tm_eff) * tm_eff
    m_pad = msup_pad * g

    pos2 = pos_enc.reshape(M, P).astype(compute_dtype)
    dir2 = dir_enc.reshape(M, DIRC).astype(compute_dtype)
    if m_pad != M:
        pos2 = jnp.pad(pos2, ((0, m_pad - M), (0, 0)))
        dir2 = jnp.pad(dir2, ((0, m_pad - M), (0, 0)))
    # Lane-pack: point (s*g + i) occupies lanes [i*C, (i+1)*C) of super-row s.
    pos2 = pos2.reshape(msup_pad, g * P)
    dir2 = dir2.reshape(msup_pad, g * DIRC)

    packed = _pack_params(params, g, compute_dtype)

    def row_spec(c):
        return pl.BlockSpec((tm_eff, c), lambda i: (i, 0))

    def full_spec(a):
        nd = a.ndim
        return pl.BlockSpec(a.shape, lambda i, nd=nd: (0,) * nd)

    in_specs = [row_spec(g * P), row_spec(g * DIRC)] + [full_spec(p) for p in packed]

    out = pl.pallas_call(
        functools.partial(_nerf_kernel, gd=g * D),
        out_shape=jax.ShapeDtypeStruct((msup_pad, g * 4), jnp.float32),
        grid_spec=pltpu.PrefetchScalarGridSpec(
            num_scalar_prefetch=0,
            grid=(msup_pad // tm_eff,),
            in_specs=in_specs,
            out_specs=pl.BlockSpec((tm_eff, g * 4), lambda i: (i, 0)),
        ),
        compiler_params=pltpu.CompilerParams(
            dimension_semantics=("parallel",),     # shard row tiles across TCs
            vmem_limit_bytes=48 * 1024 * 1024,     # headroom under v7x 64 MiB
        ),
    )(pos2, dir2, *packed)

    # Unscramble [rgb0..rgb_{g-1} | den0..den_{g-1}] back to per-point (r,g,b,d)
    rgb = out[:, :g * 3].reshape(msup_pad, g, 3)
    den = out[:, g * 3:].reshape(msup_pad, g, 1)
    full = jnp.concatenate([rgb, den], axis=-1).reshape(m_pad, 4)
    return full[:M].reshape(H, W, N, 4)


# --------------------------------------------------------------------------
# Deterministic parameter init (PyTorch nn.Linear-style uniform bounds).
# --------------------------------------------------------------------------
def init_params(key, pos_in, dir_in, D, dtype=jnp.float32):
    ks = jax.random.split(key, 12)

    def linear(k, fan_in, fan_out):
        bound = 1.0 / math.sqrt(fan_in)
        kw, kb = jax.random.split(k)
        w = jax.random.uniform(kw, (fan_in, fan_out), dtype, -bound, bound)
        b = jax.random.uniform(kb, (1, fan_out), dtype, -bound, bound)
        return w, b

    w00, b00 = linear(ks[0], pos_in, D)
    w01, b01 = linear(ks[1], D, D)
    w02, b02 = linear(ks[2], D, D)
    w03, b03 = linear(ks[3], D, D)

    w10, b10 = linear(ks[4], D + pos_in, D)
    w10a, w10b = w10[:D], w10[D:]
    w11, b11 = linear(ks[5], D, D)
    w12, b12 = linear(ks[6], D, D)
    w13, b13 = linear(ks[7], D, D)

    wden, _ = linear(ks[8], D, 1)
    bden = jnp.array([[0.1]], dtype)               # fc_density.bias = [0.1]
    wfeat, bfeat = linear(ks[9], D, D)

    wr0, br0 = linear(ks[10], D + dir_in, D // 2)
    wr0a, wr0b = wr0[:D], wr0[D:]
    wr1, _ = linear(ks[11], D // 2, 3)
    br1 = jnp.array([[0.02, 0.02, 0.02]], dtype)   # fc_rgb.bias = [0.02]*3

    return (w00, b00, w01, b01, w02, b02, w03, b03,
            w10a, w10b, b10, w11, b11, w12, b12, w13, b13,
            wden, bden, wfeat, bfeat,
            wr0a, wr0b, br0, wr1, br1)


# --------------------------------------------------------------------------
# Pure-JAX reference (mirrors the PyTorch forward; bf16 matmuls + f32 accum
# to match the kernel's numerics).
# --------------------------------------------------------------------------
def nerf_ref(pos_enc, dir_enc, params, compute_dtype=jnp.bfloat16):
    (w00, b00, w01, b01, w02, b02, w03, b03,
     w10a, w10b, b10, w11, b11, w12, b12, w13, b13,
     wden, bden, wfeat, bfeat,
     wr0a, wr0b, br0, wr1, br1) = params

    def mm(x, w):
        return jnp.dot(x.astype(compute_dtype), w.astype(compute_dtype),
                       preferred_element_type=jnp.float32)

    relu = jax.nn.relu
    x = relu(mm(pos_enc, w00) + b00)
    x = relu(mm(x, w01) + b01)
    x = relu(mm(x, w02) + b02)
    x = relu(mm(x, w03) + b03)
    x = relu(mm(x, w10a) + mm(pos_enc, w10b) + b10)     # cat([x, pos_enc]) @ W
    x = relu(mm(x, w11) + b11)
    x = relu(mm(x, w12) + b12)
    x = relu(mm(x, w13) + b13)
    density = mm(x, wden) + bden
    feat = mm(x, wfeat) + bfeat
    h = relu(mm(feat, wr0a) + mm(dir_enc, wr0b) + br0)  # cat([feat, dir]) @ W
    rgb = mm(h, wr1) + br1
    return jnp.concatenate([rgb, density], axis=-1)
    # TODO(synk): density nonlinearity / noise (if any) is applied downstream
    # in the original NeRF pipeline, matching OfficialNerf.forward semantics.


if __name__ == "__main__":
    POS_IN, DIR_IN, D = 60, 24, 32
    H, W, N = 8, 8, 16                                  # M = 1024 points

    key = jax.random.PRNGKey(0)
    kp, kd, kparam = jax.random.split(key, 3)
    pos_enc = jax.random.normal(kp, (H, W, N, POS_IN), jnp.float32)
    dir_enc = jax.random.normal(kd, (H, W, N, DIR_IN), jnp.float32)
    params = init_params(kparam, POS_IN, DIR_IN, D)

    out = nerf_forward(pos_enc, dir_enc, params)        # g=4, tm=1024 defaults
    out = jax.block_until_ready(out)

    ref = nerf_ref(pos_enc, dir_enc, params)
    assert out.shape == (H, W, N, 4)
    np.testing.assert_allclose(np.asarray(out), np.asarray(ref),
                               rtol=1e-2, atol=1e-2)
    print("KERNEL_OK")
</pallas_src>

<mosaic_0001>
module attributes {stable_mosaic.version = 11 : i64} {
  func.func @_nerf_kernel(%arg0: i32, %arg1: memref<128x240xbf16, #tpu.memory_space<vmem>>, %arg2: memref<128x96xbf16, #tpu.memory_space<vmem>>, %arg3: memref<2x240x128xbf16, #tpu.memory_space<vmem>>, %arg4: memref<1x128xf32, #tpu.memory_space<vmem>>, %arg5: memref<7x128x128xbf16, #tpu.memory_space<vmem>>, %arg6: memref<7x1x128xf32, #tpu.memory_space<vmem>>, %arg7: memref<128x132xbf16, #tpu.memory_space<vmem>>, %arg8: memref<1x132xf32, #tpu.memory_space<vmem>>, %arg9: memref<128x64xbf16, #tpu.memory_space<vmem>>, %arg10: memref<96x64xbf16, #tpu.memory_space<vmem>>, %arg11: memref<1x64xf32, #tpu.memory_space<vmem>>, %arg12: memref<64x12xbf16, #tpu.memory_space<vmem>>, %arg13: memref<1x12xf32, #tpu.memory_space<vmem>>, %arg14: memref<128x16xf32, #tpu.memory_space<vmem>>) attributes {dimension_semantics = [#tpu.dimension_semantics<parallel>], iteration_bounds = array<i64: 2>, scalar_prefetch = 0 : i64, scratch_operands = 0 : i64, tpu.core_type = #tpu.core_type<tc>, window_params = [{transform_indices = @transform_0, window_bounds = array<i64: 128, 240>}, {transform_indices = @transform_1, window_bounds = array<i64: 128, 96>}, {pipeline_mode = #tpu.pipeline_mode<synchronous>, transform_indices = @transform_2, window_bounds = array<i64: 2, 240, 128>}, {pipeline_mode = #tpu.pipeline_mode<synchronous>, transform_indices = @transform_3, window_bounds = array<i64: 1, 128>}, {pipeline_mode = #tpu.pipeline_mode<synchronous>, transform_indices = @transform_4, window_bounds = array<i64: 7, 128, 128>}, {pipeline_mode = #tpu.pipeline_mode<synchronous>, transform_indices = @transform_5, window_bounds = array<i64: 7, 1, 128>}, {pipeline_mode = #tpu.pipeline_mode<synchronous>, transform_indices = @transform_6, window_bounds = array<i64: 128, 132>}, {pipeline_mode = #tpu.pipeline_mode<synchronous>, transform_indices = @transform_7, window_bounds = array<i64: 1, 132>}, {pipeline_mode = #tpu.pipeline_mode<synchronous>, transform_indices = @transform_8, window_bounds = array<i64: 128, 64>}, {pipeline_mode = #tpu.pipeline_mode<synchronous>, transform_indices = @transform_9, window_bounds = array<i64: 96, 64>}, {pipeline_mode = #tpu.pipeline_mode<synchronous>, transform_indices = @transform_10, window_bounds = array<i64: 1, 64>}, {pipeline_mode = #tpu.pipeline_mode<synchronous>, transform_indices = @transform_11, window_bounds = array<i64: 64, 12>}, {pipeline_mode = #tpu.pipeline_mode<synchronous>, transform_indices = @transform_12, window_bounds = array<i64: 1, 12>}, {transform_indices = @transform_13, window_bounds = array<i64: 128, 16>}]} {
    %c0 = arith.constant 0 : index
    %c0_0 = arith.constant 0 : index
    %0 = vector.load %arg1[%c0, %c0_0] : memref<128x240xbf16, #tpu.memory_space<vmem>>, vector<128x240xbf16>
    %c0_1 = arith.constant 0 : index
    %c0_2 = arith.constant 0 : index
    %1 = vector.load %arg2[%c0_1, %c0_2] : memref<128x96xbf16, #tpu.memory_space<vmem>>, vector<128x96xbf16>
    %c0_3 = arith.constant 0 : index
    %c0_4 = arith.constant 0 : index
    %c0_5 = arith.constant 0 : index
    %2 = vector.load %arg3[%c0_3, %c0_4, %c0_5] : memref<2x240x128xbf16, #tpu.memory_space<vmem>>, vector<1x240x128xbf16>
    %3 = vector.shape_cast %2 : vector<1x240x128xbf16> to vector<240x128xbf16>
    %cst = arith.constant dense<0.000000e+00> : vector<128x128xf32>
    %4 = tpu.matmul %0, %3, %cst {dimension_numbers = #tpu.dot_dimension_numbers<[1], [0], [0], [1], [0, 0, 1, 1], [], []>} : vector<128x240xbf16>, vector<240x128xbf16>, vector<128x128xf32> -> vector<128x128xf32>
    %c0_6 = arith.constant 0 : index
    %c0_7 = arith.constant 0 : index
    %5 = vector.load %arg4[%c0_6, %c0_7] : memref<1x128xf32, #tpu.memory_space<vmem>>, vector<1x128xf32>
    %6 = vector.broadcast %5 : vector<1x128xf32> to vector<128x128xf32>
    %7 = arith.addf %4, %6 : vector<128x128xf32>
    %cst_8 = arith.constant 0.000000e+00 : f32
    %8 = vector.broadcast %cst_8 : f32 to vector<128x128xf32>
    %9 = arith.maximumf %7, %8 : vector<128x128xf32>
    %10 = arith.truncf %9 : vector<128x128xf32> to vector<128x128xbf16>
    %c0_9 = arith.constant 0 : index
    %c0_10 = arith.constant 0 : index
    %c0_11 = arith.constant 0 : index
    %11 = vector.load %arg5[%c0_9, %c0_10, %c0_11] : memref<7x128x128xbf16, #tpu.memory_space<vmem>>, vector<1x128x128xbf16>
    %12 = vector.shape_cast %11 : vector<1x128x128xbf16> to vector<128x128xbf16>
    %cst_12 = arith.constant dense<0.000000e+00> : vector<128x128xf32>
    %13 = tpu.matmul %10, %12, %cst_12 {dimension_numbers = #tpu.dot_dimension_numbers<[1], [0], [0], [1], [0, 0, 1, 1], [], []>} : vector<128x128xbf16>, vector<128x128xbf16>, vector<128x128xf32> -> vector<128x128xf32>
    %c0_13 = arith.constant 0 : index
    %c0_14 = arith.constant 0 : index
    %c0_15 = arith.constant 0 : index
    %14 = vector.load %arg6[%c0_13, %c0_14, %c0_15] : memref<7x1x128xf32, #tpu.memory_space<vmem>>, vector<1x1x128xf32>
    %15 = vector.shape_cast %14 : vector<1x1x128xf32> to vector<1x128xf32>
    %16 = vector.broadcast %15 : vector<1x128xf32> to vector<128x128xf32>
    %17 = arith.addf %13, %16 : vector<128x128xf32>
    %cst_16 = arith.constant 0.000000e+00 : f32
    %18 = vector.broadcast %cst_16 : f32 to vector<128x128xf32>
    %19 = arith.maximumf %17, %18 : vector<128x128xf32>
    %20 = arith.truncf %19 : vector<128x128xf32> to vector<128x128xbf16>
    %c1 = arith.constant 1 : index
    %c0_17 = arith.constant 0 : index
    %c0_18 = arith.constant 0 : index
    %21 = vector.load %arg5[%c1, %c0_17, %c0_18] : memref<7x128x128xbf16, #tpu.memory_space<vmem>>, vector<1x128x128xbf16>
    %22 = vector.shape_cast %21 : vector<1x128x128xbf16> to vector<128x128xbf16>
    %cst_19 = arith.constant dense<0.000000e+00> : vector<128x128xf32>
    %23 = tpu.matmul %20, %22, %cst_19 {dimension_numbers = #tpu.dot_dimension_numbers<[1], [0], [0], [1], [0, 0, 1, 1], [], []>} : vector<128x128xbf16>, vector<128x128xbf16>, vector<128x128xf32> -> vector<128x128xf32>
    %c1_20 = arith.constant 1 : index
    %c0_21 = arith.constant 0 : index
    %c0_22 = arith.constant 0 : index
    %24 = vector.load %arg6[%c1_20, %c0_21, %c0_22] : memref<7x1x128xf32, #tpu.memory_space<vmem>>, vector<1x1x128xf32>
    %25 = vector.shape_cast %24 : vector<1x1x128xf32> to vector<1x128xf32>
    %26 = vector.broadcast %25 : vector<1x128xf32> to vector<128x128xf32>
    %27 = arith.addf %23, %26 : vector<128x128xf32>
    %cst_23 = arith.constant 0.000000e+00 : f32
    %28 = vector.broadcast %cst_23 : f32 to vector<128x128xf32>
    %29 = arith.maximumf %27, %28 : vector<128x128xf32>
    %30 = arith.truncf %29 : vector<128x128xf32> to vector<128x128xbf16>
    %c2 = arith.constant 2 : index
    %c0_24 = arith.constant 0 : index
    %c0_25 = arith.constant 0 : index
    %31 = vector.load %arg5[%c2, %c0_24, %c0_25] : memref<7x128x128xbf16, #tpu.memory_space<vmem>>, vector<1x128x128xbf16>
    %32 = vector.shape_cast %31 : vector<1x128x128xbf16> to vector<128x128xbf16>
    %cst_26 = arith.constant dense<0.000000e+00> : vector<128x128xf32>
    %33 = tpu.matmul %30, %32, %cst_26 {dimension_numbers = #tpu.dot_dimension_numbers<[1], [0], [0], [1], [0, 0, 1, 1], [], []>} : vector<128x128xbf16>, vector<128x128xbf16>, vector<128x128xf32> -> vector<128x128xf32>
    %c2_27 = arith.constant 2 : index
    %c0_28 = arith.constant 0 : index
    %c0_29 = arith.constant 0 : index
    %34 = vector.load %arg6[%c2_27, %c0_28, %c0_29] : memref<7x1x128xf32, #tpu.memory_space<vmem>>, vector<1x1x128xf32>
    %35 = vector.shape_cast %34 : vector<1x1x128xf32> to vector<1x128xf32>
    %36 = vector.broadcast %35 : vector<1x128xf32> to vector<128x128xf32>
    %37 = arith.addf %33, %36 : vector<128x128xf32>
    %cst_30 = arith.constant 0.000000e+00 : f32
    %38 = vector.broadcast %cst_30 : f32 to vector<128x128xf32>
    %39 = arith.maximumf %37, %38 : vector<128x128xf32>
    %40 = arith.truncf %39 : vector<128x128xf32> to vector<128x128xbf16>
    %c3 = arith.constant 3 : index
    %c0_31 = arith.constant 0 : index
    %c0_32 = arith.constant 0 : index
    %41 = vector.load %arg5[%c3, %c0_31, %c0_32] : memref<7x128x128xbf16, #tpu.memory_space<vmem>>, vector<1x128x128xbf16>
    %42 = vector.shape_cast %41 : vector<1x128x128xbf16> to vector<128x128xbf16>
    %cst_33 = arith.constant dense<0.000000e+00> : vector<128x128xf32>
    %43 = tpu.matmul %40, %42, %cst_33 {dimension_numbers = #tpu.dot_dimension_numbers<[1], [0], [0], [1], [0, 0, 1, 1], [], []>} : vector<128x128xbf16>, vector<128x128xbf16>, vector<128x128xf32> -> vector<128x128xf32>
    %c1_34 = arith.constant 1 : index
    %c0_35 = arith.constant 0 : index
    %c0_36 = arith.constant 0 : index
    %44 = vector.load %arg3[%c1_34, %c0_35, %c0_36] : memref<2x240x128xbf16, #tpu.memory_space<vmem>>, vector<1x240x128xbf16>
    %45 = vector.shape_cast %44 : vector<1x240x128xbf16> to vector<240x128xbf16>
    %cst_37 = arith.constant dense<0.000000e+00> : vector<128x128xf32>
    %46 = tpu.matmul %0, %45, %cst_37 {dimension_numbers = #tpu.dot_dimension_numbers<[1], [0], [0], [1], [0, 0, 1, 1], [], []>} : vector<128x240xbf16>, vector<240x128xbf16>, vector<128x128xf32> -> vector<128x128xf32>
    %47 = arith.addf %43, %46 : vector<128x128xf32>
    %c3_38 = arith.constant 3 : index
    %c0_39 = arith.constant 0 : index
    %c0_40 = arith.constant 0 : index
    %48 = vector.load %arg6[%c3_38, %c0_39, %c0_40] : memref<7x1x128xf32, #tpu.memory_space<vmem>>, vector<1x1x128xf32>
    %49 = vector.shape_cast %48 : vector<1x1x128xf32> to vector<1x128xf32>
    %50 = vector.broadcast %49 : vector<1x128xf32> to vector<128x128xf32>
    %51 = arith.addf %47, %50 : vector<128x128xf32>
    %cst_41 = arith.constant 0.000000e+00 : f32
    %52 = vector.broadcast %cst_41 : f32 to vector<128x128xf32>
    %53 = arith.maximumf %51, %52 : vector<128x128xf32>
    %54 = arith.truncf %53 : vector<128x128xf32> to vector<128x128xbf16>
    %c4 = arith.constant 4 : index
    %c0_42 = arith.constant 0 : index
    %c0_43 = arith.constant 0 : index
    %55 = vector.load %arg5[%c4, %c0_42, %c0_43] : memref<7x128x128xbf16, #tpu.memory_space<vmem>>, vector<1x128x128xbf16>
    %56 = vector.shape_cast %55 : vector<1x128x128xbf16> to vector<128x128xbf16>
    %cst_44 = arith.constant dense<0.000000e+00> : vector<128x128xf32>
    %57 = tpu.matmul %54, %56, %cst_44 {dimension_numbers = #tpu.dot_dimension_numbers<[1], [0], [0], [1], [0, 0, 1, 1], [], []>} : vector<128x128xbf16>, vector<128x128xbf16>, vector<128x128xf32> -> vector<128x128xf32>
    %c4_45 = arith.constant 4 : index
    %c0_46 = arith.constant 0 : index
    %c0_47 = arith.constant 0 : index
    %58 = vector.load %arg6[%c4_45, %c0_46, %c0_47] : memref<7x1x128xf32, #tpu.memory_space<vmem>>, vector<1x1x128xf32>
    %59 = vector.shape_cast %58 : vector<1x1x128xf32> to vector<1x128xf32>
    %60 = vector.broadcast %59 : vector<1x128xf32> to vector<128x128xf32>
    %61 = arith.addf %57, %60 : vector<128x128xf32>
    %cst_48 = arith.constant 0.000000e+00 : f32
    %62 = vector.broadcast %cst_48 : f32 to vector<128x128xf32>
    %63 = arith.maximumf %61, %62 : vector<128x128xf32>
    %64 = arith.truncf %63 : vector<128x128xf32> to vector<128x128xbf16>
    %c5 = arith.constant 5 : index
    %c0_49 = arith.constant 0 : index
    %c0_50 = arith.constant 0 : index
    %65 = vector.load %arg5[%c5, %c0_49, %c0_50] : memref<7x128x128xbf16, #tpu.memory_space<vmem>>, vector<1x128x128xbf16>
    %66 = vector.shape_cast %65 : vector<1x128x128xbf16> to vector<128x128xbf16>
    %cst_51 = arith.constant dense<0.000000e+00> : vector<128x128xf32>
    %67 = tpu.matmul %64, %66, %cst_51 {dimension_numbers = #tpu.dot_dimension_numbers<[1], [0], [0], [1], [0, 0, 1, 1], [], []>} : vector<128x128xbf16>, vector<128x128xbf16>, vector<128x128xf32> -> vector<128x128xf32>
    %c5_52 = arith.constant 5 : index
    %c0_53 = arith.constant 0 : index
    %c0_54 = arith.constant 0 : index
    %68 = vector.load %arg6[%c5_52, %c0_53, %c0_54] : memref<7x1x128xf32, #tpu.memory_space<vmem>>, vector<1x1x128xf32>
    %69 = vector.shape_cast %68 : vector<1x1x128xf32> to vector<1x128xf32>
    %70 = vector.broadcast %69 : vector<1x128xf32> to vector<128x128xf32>
    %71 = arith.addf %67, %70 : vector<128x128xf32>
    %cst_55 = arith.constant 0.000000e+00 : f32
    %72 = vector.broadcast %cst_55 : f32 to vector<128x128xf32>
    %73 = arith.maximumf %71, %72 : vector<128x128xf32>
    %74 = arith.truncf %73 : vector<128x128xf32> to vector<128x128xbf16>
    %c6 = arith.constant 6 : index
    %c0_56 = arith.constant 0 : index
    %c0_57 = arith.constant 0 : index
    %75 = vector.load %arg5[%c6, %c0_56, %c0_57] : memref<7x128x128xbf16, #tpu.memory_space<vmem>>, vector<1x128x128xbf16>
    %76 = vector.shape_cast %75 : vector<1x128x128xbf16> to vector<128x128xbf16>
    %cst_58 = arith.constant dense<0.000000e+00> : vector<128x128xf32>
    %77 = tpu.matmul %74, %76, %cst_58 {dimension_numbers = #tpu.dot_dimension_numbers<[1], [0], [0], [1], [0, 0, 1, 1], [], []>} : vector<128x128xbf16>, vector<128x128xbf16>, vector<128x128xf32> -> vector<128x128xf32>
    %c6_59 = arith.constant 6 : index
    %c0_60 = arith.constant 0 : index
    %c0_61 = arith.constant 0 : index
    %78 = vector.load %arg6[%c6_59, %c0_60, %c0_61] : memref<7x1x128xf32, #tpu.memory_space<vmem>>, vector<1x1x128xf32>
    %79 = vector.shape_cast %78 : vector<1x1x128xf32> to vector<1x128xf32>
    %80 = vector.broadcast %79 : vector<1x128xf32> to vector<128x128xf32>
    %81 = arith.addf %77, %80 : vector<128x128xf32>
    %cst_62 = arith.constant 0.000000e+00 : f32
    %82 = vector.broadcast %cst_62 : f32 to vector<128x128xf32>
    %83 = arith.maximumf %81, %82 : vector<128x128xf32>
    %84 = arith.truncf %83 : vector<128x128xf32> to vector<128x128xbf16>
    %c0_63 = arith.constant 0 : index
    %c0_64 = arith.constant 0 : index
    %85 = vector.load %arg7[%c0_63, %c0_64] : memref<128x132xbf16, #tpu.memory_space<vmem>>, vector<128x132xbf16>
    %cst_65 = arith.constant dense<0.000000e+00> : vector<128x132xf32>
    %86 = tpu.matmul %84, %85, %cst_65 {dimension_numbers = #tpu.dot_dimension_numbers<[1], [0], [0], [1], [0, 0, 1, 1], [], []>} : vector<128x128xbf16>, vector<128x132xbf16>, vector<128x132xf32> -> vector<128x132xf32>
    %c0_66 = arith.constant 0 : index
    %c0_67 = arith.constant 0 : index
    %87 = vector.load %arg8[%c0_66, %c0_67] : memref<1x132xf32, #tpu.memory_space<vmem>>, vector<1x132xf32>
    %88 = vector.broadcast %87 : vector<1x132xf32> to vector<128x132xf32>
    %89 = arith.addf %86, %88 : vector<128x132xf32>
    %90 = vector.extract_strided_slice %89 {offsets = [0, 0], sizes = [128, 128], strides = [1, 1]} : vector<128x132xf32> to vector<128x128xf32>
    %91 = vector.extract_strided_slice %89 {offsets = [0, 128], sizes = [128, 4], strides = [1, 1]} : vector<128x132xf32> to vector<128x4xf32>
    %92 = arith.truncf %90 : vector<128x128xf32> to vector<128x128xbf16>
    %c0_68 = arith.constant 0 : index
    %c0_69 = arith.constant 0 : index
    %93 = vector.load %arg9[%c0_68, %c0_69] : memref<128x64xbf16, #tpu.memory_space<vmem>>, vector<128x64xbf16>
    %cst_70 = arith.constant dense<0.000000e+00> : vector<128x64xf32>
    %94 = tpu.matmul %92, %93, %cst_70 {dimension_numbers = #tpu.dot_dimension_numbers<[1], [0], [0], [1], [0, 0, 1, 1], [], []>} : vector<128x128xbf16>, vector<128x64xbf16>, vector<128x64xf32> -> vector<128x64xf32>
    %c0_71 = arith.constant 0 : index
    %c0_72 = arith.constant 0 : index
    %95 = vector.load %arg10[%c0_71, %c0_72] : memref<96x64xbf16, #tpu.memory_space<vmem>>, vector<96x64xbf16>
    %cst_73 = arith.constant dense<0.000000e+00> : vector<128x64xf32>
    %96 = tpu.matmul %1, %95, %cst_73 {dimension_numbers = #tpu.dot_dimension_numbers<[1], [0], [0], [1], [0, 0, 1, 1], [], []>} : vector<128x96xbf16>, vector<96x64xbf16>, vector<128x64xf32> -> vector<128x64xf32>
    %97 = arith.addf %94, %96 : vector<128x64xf32>
    %c0_74 = arith.constant 0 : index
    %c0_75 = arith.constant 0 : index
    %98 = vector.load %arg11[%c0_74, %c0_75] : memref<1x64xf32, #tpu.memory_space<vmem>>, vector<1x64xf32>
    %99 = vector.broadcast %98 : vector<1x64xf32> to vector<128x64xf32>
    %100 = arith.addf %97, %99 : vector<128x64xf32>
    %cst_76 = arith.constant 0.000000e+00 : f32
    %101 = vector.broadcast %cst_76 : f32 to vector<128x64xf32>
    %102 = arith.maximumf %100, %101 : vector<128x64xf32>
    %103 = arith.truncf %102 : vector<128x64xf32> to vector<128x64xbf16>
    %c0_77 = arith.constant 0 : index
    %c0_78 = arith.constant 0 : index
    %104 = vector.load %arg12[%c0_77, %c0_78] : memref<64x12xbf16, #tpu.memory_space<vmem>>, vector<64x12xbf16>
    %cst_79 = arith.constant dense<0.000000e+00> : vector<128x12xf32>
    %105 = tpu.matmul %103, %104, %cst_79 {dimension_numbers = #tpu.dot_dimension_numbers<[1], [0], [0], [1], [0, 0, 1, 1], [], []>} : vector<128x64xbf16>, vector<64x12xbf16>, vector<128x12xf32> -> vector<128x12xf32>
    %c0_80 = arith.constant 0 : index
    %c0_81 = arith.constant 0 : index
    %106 = vector.load %arg13[%c0_80, %c0_81] : memref<1x12xf32, #tpu.memory_space<vmem>>, vector<1x12xf32>
    %107 = vector.broadcast %106 : vector<1x12xf32> to vector<128x12xf32>
    %108 = arith.addf %105, %107 : vector<128x12xf32>
    %109 = tpu.concatenate %108, %91 in 1 : vector<128x12xf32>, vector<128x4xf32> -> vector<128x16xf32>
    %c0_82 = arith.constant 0 : index
    %c0_83 = arith.constant 0 : index
    %110 = vector.load %arg14[%c0_82, %c0_83] : memref<128x16xf32, #tpu.memory_space<vmem>>, vector<128x16xf32>
    tpu.vector_store %arg14[%c0_82, %c0_83], %109 {strides = array<i32>} : memref<128x16xf32, #tpu.memory_space<vmem>>, vector<128x16xf32>,
    return
  }
  func.func @transform_0(%arg0: i32) -> (i32, i32) {
    %c0_i32 = arith.constant 0 : i32
    %c0_i32_0 = arith.constant 0 : i32
    return %arg0, %c0_i32 : i32, i32
  }
  func.func @transform_1(%arg0: i32) -> (i32, i32) {
    %c0_i32 = arith.constant 0 : i32
    %c0_i32_0 = arith.constant 0 : i32
    return %arg0, %c0_i32 : i32, i32
  }
  func.func @transform_2(%arg0: i32) -> (i32, i32, i32) {
    %c0_i32 = arith.constant 0 : i32
    %c0_i32_0 = arith.constant 0 : i32
    %c0_i32_1 = arith.constant 0 : i32
    %c0_i32_2 = arith.constant 0 : i32
    return %c0_i32, %c0_i32_0, %c0_i32_1 : i32, i32, i32
  }
  func.func @transform_3(%arg0: i32) -> (i32, i32) {
    %c0_i32 = arith.constant 0 : i32
    %c0_i32_0 = arith.constant 0 : i32
    %c0_i32_1 = arith.constant 0 : i32
    return %c0_i32, %c0_i32_0 : i32, i32
  }
  func.func @transform_4(%arg0: i32) -> (i32, i32, i32) {
    %c0_i32 = arith.constant 0 : i32
    %c0_i32_0 = arith.constant 0 : i32
    %c0_i32_1 = arith.constant 0 : i32
    %c0_i32_2 = arith.constant 0 : i32
    return %c0_i32, %c0_i32_0, %c0_i32_1 : i32, i32, i32
  }
  func.func @transform_5(%arg0: i32) -> (i32, i32, i32) {
    %c0_i32 = arith.constant 0 : i32
    %c0_i32_0 = arith.constant 0 : i32
    %c0_i32_1 = arith.constant 0 : i32
    %c0_i32_2 = arith.constant 0 : i32
    return %c0_i32, %c0_i32_0, %c0_i32_1 : i32, i32, i32
  }
  func.func @transform_6(%arg0: i32) -> (i32, i32) {
    %c0_i32 = arith.constant 0 : i32
    %c0_i32_0 = arith.constant 0 : i32
    %c0_i32_1 = arith.constant 0 : i32
    return %c0_i32, %c0_i32_0 : i32, i32
  }
  func.func @transform_7(%arg0: i32) -> (i32, i32) {
    %c0_i32 = arith.constant 0 : i32
    %c0_i32_0 = arith.constant 0 : i32
    %c0_i32_1 = arith.constant 0 : i32
    return %c0_i32, %c0_i32_0 : i32, i32
  }
  func.func @transform_8(%arg0: i32) -> (i32, i32) {
    %c0_i32 = arith.constant 0 : i32
    %c0_i32_0 = arith.constant 0 : i32
    %c0_i32_1 = arith.constant 0 : i32
    return %c0_i32, %c0_i32_0 : i32, i32
  }
  func.func @transform_9(%arg0: i32) -> (i32, i32) {
    %c0_i32 = arith.constant 0 : i32
    %c0_i32_0 = arith.constant 0 : i32
    %c0_i32_1 = arith.constant 0 : i32
    return %c0_i32, %c0_i32_0 : i32, i32
  }
  func.func @transform_10(%arg0: i32) -> (i32, i32) {
    %c0_i32 = arith.constant 0 : i32
    %c0_i32_0 = arith.constant 0 : i32
    %c0_i32_1 = arith.constant 0 : i32
    return %c0_i32, %c0_i32_0 : i32, i32
  }
  func.func @transform_11(%arg0: i32) -> (i32, i32) {
    %c0_i32 = arith.constant 0 : i32
    %c0_i32_0 = arith.constant 0 : i32
    %c0_i32_1 = arith.constant 0 : i32
    return %c0_i32, %c0_i32_0 : i32, i32
  }
  func.func @transform_12(%arg0: i32) -> (i32, i32) {
    %c0_i32 = arith.constant 0 : i32
    %c0_i32_0 = arith.constant 0 : i32
    %c0_i32_1 = arith.constant 0 : i32
    return %c0_i32, %c0_i32_0 : i32, i32
  }
  func.func @transform_13(%arg0: i32) -> (i32, i32) {
    %c0_i32 = arith.constant 0 : i32
    %c0_i32_0 = arith.constant 0 : i32
    return %arg0, %c0_i32 : i32, i32
  }
}

</mosaic_0001>

<llo_original>
// kernel: tpu_custom_call.1
$region0: #{tpu_custom_call.1}
  #allocation0 [shape = 'u32[]', space=smem, size = 0x4, offset = 0x4, fixed_abs, tag = 'smem constant byte address 0x4 - core index']
  #allocation1 [shape = 'u32[144,128]{1,0:T(1,128)}', space=vmem, size = 0x12000, scoped, tag = 'internal scratch']
  %s0 = inlined_call_operand.vmem [shape: bf16[256,240], index: 0, kind: input, shape index: {}]
  %s1 = inlined_call_operand.vmem [shape: bf16[256,96], index: 1, kind: input, shape index: {}]
  %s2 = inlined_call_operand.vmem [shape: bf16[2,240,128], index: 2, kind: input, shape index: {}]
  %s3 = inlined_call_operand.hbm [shape: f32[1,128], index: 3, kind: input, shape index: {}]
  %s4 = inlined_call_operand.vmem [shape: bf16[7,128,128], index: 4, kind: input, shape index: {}]
  %s5 = inlined_call_operand.hbm [shape: f32[7,1,128], index: 5, kind: input, shape index: {}]
  %s6 = inlined_call_operand.vmem [shape: bf16[128,132], index: 6, kind: input, shape index: {}]
  %s7 = inlined_call_operand.vmem [shape: f32[1,132], index: 7, kind: input, shape index: {}]
  %s8 = inlined_call_operand.vmem [shape: bf16[128,64], index: 8, kind: input, shape index: {}]
  %s9 = inlined_call_operand.vmem [shape: bf16[96,64], index: 9, kind: input, shape index: {}]
  %s10 = inlined_call_operand.hbm [shape: f32[1,64], index: 10, kind: input, shape index: {}]
  %s11 = inlined_call_operand.vmem [shape: bf16[64,12], index: 11, kind: input, shape index: {}]
  %s12 = inlined_call_operand.vmem [shape: f32[1,12], index: 12, kind: input, shape index: {}]
  %s13 = inlined_call_operand.vmem [shape: f32[256,16], index: 13, kind: output, shape index: {}]
  %s14 = sld [smem:[#allocation0]]
  $region97: #{tpu_custom_call.1} parent=0
    _
  %s16 = ssub.s32 1, %s14
  %s17 = scalar_select 0, %s16, %s14
  $region1: #{tpu_custom_call.1} parent=0
    #allocation2 [shape = 'u8[512]{0}', space=vmem, size = 0x400, scoped, tag = 'input window, operand 3, single buffered']
    #allocation3 [shape = 's32[2]{0}', space=sflag, size = 0x8, scoped, tag = 'scoped memory for tpu_custom_call.1']
    #allocation4 [shape = 'u8[3584]{0}', space=vmem, size = 0x1000, scoped, tag = 'input window, operand 5, single buffered']
    #allocation5 [shape = 's32[1]{0}', space=sflag, size = 0x4, scoped, tag = 'scoped memory for tpu_custom_call.1']
    #allocation6 [shape = 'u8[512]{0}', space=vmem, size = 0x400, scoped, tag = 'input window, operand 10, single buffered']
    %18 = vsyncpa [#allocation3], 0
    %19 = vsyncpa [#allocation5], 0
    loop: start=0, step=1, limit=4
    $region2: #{tpu_custom_call.1} parent=1 // loop_pre_header
      _
    $region3: #{tpu_custom_call.1} parent=1 // loop_header
      %s21 = sphi 0, %s25
      %p22 = scmp.ge.s32.totalorder %s21, 4
      %s31 = sphi 0, %s33
      %s34 = sphi 0, %s31
      %s35 = sphi 0, %s34
      %s51 = sphi 0, %s35
      %s57 = sphi 0, %s59
      %s60 = sphi 0, %s57
      %s61 = sphi 0, %s60
      %s77 = sphi 0, %s61
      %s81 = sphi 0, %s81
      %s83 = sphi 0, %s81
      %s84 = sphi 0, %s83
      %s98 = sphi 0, %s84
      %s102 = sphi 0, %s102
      %s104 = sphi 0, %s102
      %s105 = sphi 0, %s104
      %s119 = sphi 0, %s105
      %s123 = sphi 0, %s123
      %s125 = sphi 0, %s123
      %s126 = sphi 0, %s125
      %s140 = sphi 0, %s126
      %s144 = sphi 0, %s144
      %s146 = sphi 0, %s144
      %s147 = sphi 0, %s146
      %s161 = sphi 0, %s147
      %s165 = sphi 0, %s165
      %s167 = sphi 0, %s165
      %s168 = sphi 0, %s167
      %s182 = sphi 0, %s168
      %s186 = sphi 0, %s186
      %s188 = sphi 0, %s186
      %s189 = sphi 0, %s188
      %s203 = sphi 0, %s189
      %s207 = sphi 0, %s207
      %s209 = sphi 0, %s207
      %s210 = sphi 0, %s209
      %s224 = sphi 0, %s210
      %s228 = sphi 0, %s228
      %s230 = sphi 0, %s228
      %s231 = sphi 0, %s230
      %s245 = sphi 0, %s231
      %s249 = sphi 0, %s249
      %s251 = sphi 0, %s249
      %s252 = sphi 0, %s251
      %s266 = sphi 0, %s252
      %s270 = sphi 0, %s270
      %s272 = sphi 0, %s270
      %s273 = sphi 0, %s272
      %s287 = sphi 0, %s273
      %s291 = sphi 0, %s291
      %s293 = sphi 0, %s291
      %s294 = sphi 0, %s293
      %s308 = sphi 0, %s294
      %s314 = sphi 0, %s316
      %s317 = sphi 0, %s314
      %s318 = sphi 0, %s317
      %s334 = sphi 0, %s318
    $region4: #{tpu_custom_call.1} parent=1 // loop_header_branch
      %24 = sbr.rel (%p22) target = $region8
    $region5: #{tpu_custom_call.1} parent=1 // loop_body
      %s26 = ssub.s32 %s21, 1
      %s27 = ssub.s32 %s21, 2
      %s28 = sadd.s32 %s21, 1
      %s29 = ssub.s32 %s21, %s28
      %p30 = scmp.eq.s32.totalorder %s29, 0
      %s32 = sadd.s32 %s31, 1
      %s33 = scalar_select %p30, %s31, %s32
      %p36 = pneg %p30
      %p37 = scmp.eq.s32.totalorder %s21, 1
      %p38 = por %p36, %p37
      %p39 = scmp.ne.s32.totalorder %s31, %s34
      %p40 = scmp.eq.s32.totalorder %s21, 0
      %p41 = por %p39, %p40
      %p42 = scmp.ne.s32.totalorder %s31, %s34
      %p43 = scmp.eq.s32.totalorder %s26, 1
      %p44 = por %p42, %p43
      %p45 = scmp.ne.s32.totalorder %s34, %s35
      %p46 = scmp.eq.s32.totalorder %s26, 0
      %p47 = por %p45, %p46
      %p48 = scmp.ne.s32.totalorder %s34, %s35
      %p49 = scmp.eq.s32.totalorder %s27, 1
      %p50 = por %p48, %p49
      %p52 = scmp.ne.s32.totalorder %s35, %s51
      %p53 = scmp.eq.s32.totalorder %s27, 0
      %p54 = por %p52, %p53
      %s55 = ssub.s32 %s21, %s28
      %p56 = scmp.eq.s32.totalorder %s55, 0
      %s58 = sadd.s32 %s57, 1
      %s59 = scalar_select %p56, %s57, %s58
      %p62 = pneg %p56
      %p63 = scmp.eq.s32.totalorder %s21, 1
      %p64 = por %p62, %p63
      %p65 = scmp.ne.s32.totalorder %s57, %s60
      %p66 = scmp.eq.s32.totalorder %s21, 0
      %p67 = por %p65, %p66
      %p68 = scmp.ne.s32.totalorder %s57, %s60
      %p69 = scmp.eq.s32.totalorder %s26, 1
      %p70 = por %p68, %p69
      %p71 = scmp.ne.s32.totalorder %s60, %s61
      %p72 = scmp.eq.s32.totalorder %s26, 0
      %p73 = por %p71, %p72
      %p74 = scmp.ne.s32.totalorder %s60, %s61
      %p75 = scmp.eq.s32.totalorder %s27, 1
      %p76 = por %p74, %p75
      %p78 = scmp.ne.s32.totalorder %s61, %s77
      %p79 = scmp.eq.s32.totalorder %s27, 0
      %p80 = por %p78, %p79
      %s82 = sadd.s32 %s81, 1
      %p85 = scmp.eq.s32.totalorder %s21, 1
      %p86 = scmp.ne.s32.totalorder %s81, %s83
      %p87 = scmp.eq.s32.totalorder %s21, 0
      %p88 = por %p86, %p87
      %p89 = scmp.ne.s32.totalorder %s81, %s83
      %p90 = scmp.eq.s32.totalorder %s26, 1
      %p91 = por %p89, %p90
      %p92 = scmp.ne.s32.totalorder %s83, %s84
      %p93 = scmp.eq.s32.totalorder %s26, 0
      %p94 = por %p92, %p93
      %p95 = scmp.ne.s32.totalorder %s83, %s84
      %p96 = scmp.eq.s32.totalorder %s27, 1
      %p97 = por %p95, %p96
      %p99 = scmp.ne.s32.totalorder %s84, %s98
      %p100 = scmp.eq.s32.totalorder %s27, 0
      %p101 = por %p99, %p100
      %s103 = sadd.s32 %s102, 1
      %p106 = scmp.eq.s32.totalorder %s21, 1
      %p107 = scmp.ne.s32.totalorder %s102, %s104
      %p108 = scmp.eq.s32.totalorder %s21, 0
      %p109 = por %p107, %p108
      %p110 = scmp.ne.s32.totalorder %s102, %s104
      %p111 = scmp.eq.s32.totalorder %s26, 1
      %p112 = por %p110, %p111
      %p113 = scmp.ne.s32.totalorder %s104, %s105
      %p114 = scmp.eq.s32.totalorder %s26, 0
      %p115 = por %p113, %p114
      %p116 = scmp.ne.s32.totalorder %s104, %s105
      %p117 = scmp.eq.s32.totalorder %s27, 1
      %p118 = por %p116, %p117
      %p120 = scmp.ne.s32.totalorder %s105, %s119
      %p121 = scmp.eq.s32.totalorder %s27, 0
      %p122 = por %p120, %p121
      %s124 = sadd.s32 %s123, 1
      %p127 = scmp.eq.s32.totalorder %s21, 1
      %p128 = scmp.ne.s32.totalorder %s123, %s125
      %p129 = scmp.eq.s32.totalorder %s21, 0
      %p130 = por %p128, %p129
      %p131 = scmp.ne.s32.totalorder %s123, %s125
      %p132 = scmp.eq.s32.totalorder %s26, 1
      %p133 = por %p131, %p132
      %p134 = scmp.ne.s32.totalorder %s125, %s126
      %p135 = scmp.eq.s32.totalorder %s26, 0
      %p136 = por %p134, %p135
      %p137 = scmp.ne.s32.totalorder %s125, %s126
      %p138 = scmp.eq.s32.totalorder %s27, 1
      %p139 = por %p137, %p138
      %p141 = scmp.ne.s32.totalorder %s126, %s140
      %p142 = scmp.eq.s32.totalorder %s27, 0
      %p143 = por %p141, %p142
      %s145 = sadd.s32 %s144, 1
      %p148 = scmp.eq.s32.totalorder %s21, 1
      %p149 = scmp.ne.s32.totalorder %s144, %s146
      %p150 = scmp.eq.s32.totalorder %s21, 0
      %p151 = por %p149, %p150
      %p152 = scmp.ne.s32.totalorder %s144, %s146
      %p153 = scmp.eq.s32.totalorder %s26, 1
      %p154 = por %p152, %p153
      %p155 = scmp.ne.s32.totalorder %s146, %s147
      %p156 = scmp.eq.s32.totalorder %s26, 0
      %p157 = por %p155, %p156
      %p158 = scmp.ne.s32.totalorder %s146, %s147
      %p159 = scmp.eq.s32.totalorder %s27, 1
      %p160 = por %p158, %p159
      %p162 = scmp.ne.s32.totalorder %s147, %s161
      %p163 = scmp.eq.s32.totalorder %s27, 0
      %p164 = por %p162, %p163
      %s166 = sadd.s32 %s165, 1
      %p169 = scmp.eq.s32.totalorder %s21, 1
      %p170 = scmp.ne.s32.totalorder %s165, %s167
      %p171 = scmp.eq.s32.totalorder %s21, 0
      %p172 = por %p170, %p171
      %p173 = scmp.ne.s32.totalorder %s165, %s167
      %p174 = scmp.eq.s32.totalorder %s26, 1
      %p175 = por %p173, %p174
      %p176 = scmp.ne.s32.totalorder %s167, %s168
      %p177 = scmp.eq.s32.totalorder %s26, 0
      %p178 = por %p176, %p177
      %p179 = scmp.ne.s32.totalorder %s167, %s168
      %p180 = scmp.eq.s32.totalorder %s27, 1
      %p181 = por %p179, %p180
      %p183 = scmp.ne.s32.totalorder %s168, %s182
      %p184 = scmp.eq.s32.totalorder %s27, 0
      %p185 = por %p183, %p184
      %s187 = sadd.s32 %s186, 1
      %p190 = scmp.eq.s32.totalorder %s21, 1
      %p191 = scmp.ne.s32.totalorder %s186, %s188
      %p192 = scmp.eq.s32.totalorder %s21, 0
      %p193 = por %p191, %p192
      %p194 = scmp.ne.s32.totalorder %s186, %s188
      %p195 = scmp.eq.s32.totalorder %s26, 1
      %p196 = por %p194, %p195
      %p197 = scmp.ne.s32.totalorder %s188, %s189
      %p198 = scmp.eq.s32.totalorder %s26, 0
      %p199 = por %p197, %p198
      %p200 = scmp.ne.s32.totalorder %s188, %s189
      %p201 = scmp.eq.s32.totalorder %s27, 1
      %p202 = por %p200, %p201
      %p204 = scmp.ne.s32.totalorder %s189, %s203
      %p205 = scmp.eq.s32.totalorder %s27, 0
      %p206 = por %p204, %p205
      %s208 = sadd.s32 %s207, 1
      %p211 = scmp.eq.s32.totalorder %s21, 1
      %p212 = scmp.ne.s32.totalorder %s207, %s209
      %p213 = scmp.eq.s32.totalorder %s21, 0
      %p214 = por %p212, %p213
      %p215 = scmp.ne.s32.totalorder %s207, %s209
      %p216 = scmp.eq.s32.totalorder %s26, 1
      %p217 = por %p215, %p216
      %p218 = scmp.ne.s32.totalorder %s209, %s210
      %p219 = scmp.eq.s32.totalorder %s26, 0
      %p220 = por %p218, %p219
      %p221 = scmp.ne.s32.totalorder %s209, %s210
      %p222 = scmp.eq.s32.totalorder %s27, 1
      %p223 = por %p221, %p222
      %p225 = scmp.ne.s32.totalorder %s210, %s224
      %p226 = scmp.eq.s32.totalorder %s27, 0
      %p227 = por %p225, %p226
      %s229 = sadd.s32 %s228, 1
      %p232 = scmp.eq.s32.totalorder %s21, 1
      %p233 = scmp.ne.s32.totalorder %s228, %s230
      %p234 = scmp.eq.s32.totalorder %s21, 0
      %p235 = por %p233, %p234
      %p236 = scmp.ne.s32.totalorder %s228, %s230
      %p237 = scmp.eq.s32.totalorder %s26, 1
      %p238 = por %p236, %p237
      %p239 = scmp.ne.s32.totalorder %s230, %s231
      %p240 = scmp.eq.s32.totalorder %s26, 0
      %p241 = por %p239, %p240
      %p242 = scmp.ne.s32.totalorder %s230, %s231
      %p243 = scmp.eq.s32.totalorder %s27, 1
      %p244 = por %p242, %p243
      %p246 = scmp.ne.s32.totalorder %s231, %s245
      %p247 = scmp.eq.s32.totalorder %s27, 0
      %p248 = por %p246, %p247
      %s250 = sadd.s32 %s249, 1
      %p253 = scmp.eq.s32.totalorder %s21, 1
      %p254 = scmp.ne.s32.totalorder %s249, %s251
      %p255 = scmp.eq.s32.totalorder %s21, 0
      %p256 = por %p254, %p255
      %p257 = scmp.ne.s32.totalorder %s249, %s251
      %p258 = scmp.eq.s32.totalorder %s26, 1
      %p259 = por %p257, %p258
      %p260 = scmp.ne.s32.totalorder %s251, %s252
      %p261 = scmp.eq.s32.totalorder %s26, 0
      %p262 = por %p260, %p261
      %p263 = scmp.ne.s32.totalorder %s251, %s252
      %p264 = scmp.eq.s32.totalorder %s27, 1
      %p265 = por %p263, %p264
      %p267 = scmp.ne.s32.totalorder %s252, %s266
      %p268 = scmp.eq.s32.totalorder %s27, 0
      %p269 = por %p267, %p268
      %s271 = sadd.s32 %s270, 1
      %p274 = scmp.eq.s32.totalorder %s21, 1
      %p275 = scmp.ne.s32.totalorder %s270, %s272
      %p276 = scmp.eq.s32.totalorder %s21, 0
      %p277 = por %p275, %p276
      %p278 = scmp.ne.s32.totalorder %s270, %s272
      %p279 = scmp.eq.s32.totalorder %s26, 1
      %p280 = por %p278, %p279
      %p281 = scmp.ne.s32.totalorder %s272, %s273
      %p282 = scmp.eq.s32.totalorder %s26, 0
      %p283 = por %p281, %p282
      %p284 = scmp.ne.s32.totalorder %s272, %s273
      %p285 = scmp.eq.s32.totalorder %s27, 1
      %p286 = por %p284, %p285
      %p288 = scmp.ne.s32.totalorder %s273, %s287
      %p289 = scmp.eq.s32.totalorder %s27, 0
      %p290 = por %p288, %p289
      %s292 = sadd.s32 %s291, 1
      %p295 = scmp.eq.s32.totalorder %s21, 1
      %p296 = scmp.ne.s32.totalorder %s291, %s293
      %p297 = scmp.eq.s32.totalorder %s21, 0
      %p298 = por %p296, %p297
      %p299 = scmp.ne.s32.totalorder %s291, %s293
      %p300 = scmp.eq.s32.totalorder %s26, 1
      %p301 = por %p299, %p300
      %p302 = scmp.ne.s32.totalorder %s293, %s294
      %p303 = scmp.eq.s32.totalorder %s26, 0
      %p304 = por %p302, %p303
      %p305 = scmp.ne.s32.totalorder %s293, %s294
      %p306 = scmp.eq.s32.totalorder %s27, 1
      %p307 = por %p305, %p306
      %p309 = scmp.ne.s32.totalorder %s294, %s308
      %p310 = scmp.eq.s32.totalorder %s27, 0
      %p311 = por %p309, %p310
      %s312 = ssub.s32 %s21, %s28
      %p313 = scmp.eq.s32.totalorder %s312, 0
      %s315 = sadd.s32 %s314, 1
      %s316 = scalar_select %p313, %s314, %s315
      %p319 = pneg %p313
      %p320 = scmp.eq.s32.totalorder %s21, 1
      %p321 = por %p319, %p320
      %p322 = scmp.ne.s32.totalorder %s314, %s317
      %p323 = scmp.eq.s32.totalorder %s21, 0
      %p324 = por %p322, %p323
      %p325 = scmp.ne.s32.totalorder %s314, %s317
      %p326 = scmp.eq.s32.totalorder %s26, 1
      %p327 = por %p325, %p326
      %p328 = scmp.ne.s32.totalorder %s317, %s318
      %p329 = scmp.eq.s32.totalorder %s26, 0
      %p330 = por %p328, %p329
      %p331 = scmp.ne.s32.totalorder %s317, %s318
      %p332 = scmp.eq.s32.totalorder %s27, 1
      %p333 = por %p331, %p332
      %p335 = scmp.ne.s32.totalorder %s318, %s334
      %p336 = scmp.eq.s32.totalorder %s27, 0
      %p337 = por %p335, %p336
      %p338 = scmp.le.s32.totalorder 1, %s21
      %p339 = scmp.lt.s32.totalorder %s21, 3
      %p340 = pnand %p338, %p339
      %p341 = pneg %p340
      // Predicated region
      $region9: #{tpu_custom_call.1} parent=5 // pred_check
        _
      $region10: #{tpu_custom_call.1} parent=5 // pred_check_branch
        %343 = sbr.rel (%p340) target = $region12
      $region11: #{tpu_custom_call.1} parent=5 // pred_region
        %s344 = ssub.s32 %s21, 1
        // Predicated region
        $region13: #{tpu_custom_call.1} parent=11 // pred_check
          %p345 = pneg %p94
        $region14: #{tpu_custom_call.1} parent=11 // pred_check_branch
          %347 = sbr.rel (%p345) target = $region16
        $region15: #{tpu_custom_call.1} parent=11 // pred_region
          _
        $region16: #{tpu_custom_call.1} parent=11 // pred_fallthru
          _
        // Predicated region
        $region17: #{tpu_custom_call.1} parent=11 // pred_check
          %p348 = pneg %p115
        $region18: #{tpu_custom_call.1} parent=11 // pred_check_branch
          %350 = sbr.rel (%p348) target = $region20
        $region19: #{tpu_custom_call.1} parent=11 // pred_region
          %s352 = ssub.s32 16, 16
          %353 = vsyncadd [#allocation3], %s352
          %s355 = sshll.u32 [#allocation2], 4
          %s356 = int_to_ptr.vmem [resolvable:$true] %s355
          %358 = dma.hbm_to_vmem [thread:$0]  %s3, 16, %s356, [#allocation3]
        $region20: #{tpu_custom_call.1} parent=11 // pred_fallthru
          _
        // Predicated region
        $region21: #{tpu_custom_call.1} parent=11 // pred_check
          %p359 = pneg %p136
        $region22: #{tpu_custom_call.1} parent=11 // pred_check_branch
          %361 = sbr.rel (%p359) target = $region24
        $region23: #{tpu_custom_call.1} parent=11 // pred_region
          _
        $region24: #{tpu_custom_call.1} parent=11 // pred_fallthru
          _
        // Predicated region
        $region25: #{tpu_custom_call.1} parent=11 // pred_check
          %p362 = pneg %p157
        $region26: #{tpu_custom_call.1} parent=11 // pred_check_branch
          %364 = sbr.rel (%p362) target = $region28
        $region27: #{tpu_custom_call.1} parent=11 // pred_region
          %s366 = ssub.s32 112, 112
          %367 = vsyncadd [#allocation5], %s366
          %s368 = sshll.u32 [#allocation4], 4
          %s369 = int_to_ptr.vmem [resolvable:$true] %s368
          %374 = dma.hbm_to_vmem [thread:$0]  %s5, 112, %s369, [#allocation5], 16, 16, 1
        $region28: #{tpu_custom_call.1} parent=11 // pred_fallthru
          _
        // Predicated region
        $region29: #{tpu_custom_call.1} parent=11 // pred_check
          %p375 = pneg %p178
        $region30: #{tpu_custom_call.1} parent=11 // pred_check_branch
          %377 = sbr.rel (%p375) target = $region32
        $region31: #{tpu_custom_call.1} parent=11 // pred_region
          _
        $region32: #{tpu_custom_call.1} parent=11 // pred_fallthru
          _
        // Predicated region
        $region33: #{tpu_custom_call.1} parent=11 // pred_check
          %p378 = pneg %p199
        $region34: #{tpu_custom_call.1} parent=11 // pred_check_branch
          %380 = sbr.rel (%p378) target = $region36
        $region35: #{tpu_custom_call.1} parent=11 // pred_region
          _
        $region36: #{tpu_custom_call.1} parent=11 // pred_fallthru
          _
        // Predicated region
        $region37: #{tpu_custom_call.1} parent=11 // pred_check
          %p381 = pneg %p220
        $region38: #{tpu_custom_call.1} parent=11 // pred_check_branch
          %383 = sbr.rel (%p381) target = $region40
        $region39: #{tpu_custom_call.1} parent=11 // pred_region
          _
        $region40: #{tpu_custom_call.1} parent=11 // pred_fallthru
          _
        // Predicated region
        $region41: #{tpu_custom_call.1} parent=11 // pred_check
          %p384 = pneg %p241
        $region42: #{tpu_custom_call.1} parent=11 // pred_check_branch
          %386 = sbr.rel (%p384) target = $region44
        $region43: #{tpu_custom_call.1} parent=11 // pred_region
          _
        $region44: #{tpu_custom_call.1} parent=11 // pred_fallthru
          _
        // Predicated region
        $region45: #{tpu_custom_call.1} parent=11 // pred_check
          %p387 = pneg %p262
        $region46: #{tpu_custom_call.1} parent=11 // pred_check_branch
          %389 = sbr.rel (%p387) target = $region48
        $region47: #{tpu_custom_call.1} parent=11 // pred_region
          %s391 = ssub.s32 16, 16
          %392 = vsyncadd [#allocation5], %s391
          %s394 = sshll.u32 [#allocation6], 4
          %s395 = int_to_ptr.vmem [resolvable:$true] %s394
          %397 = dma.hbm_to_vmem [thread:$0]  %s10, 16, %s395, [#allocation5]
        $region48: #{tpu_custom_call.1} parent=11 // pred_fallthru
          _
        // Predicated region
        $region49: #{tpu_custom_call.1} parent=11 // pred_check
          %p398 = pneg %p283
        $region50: #{tpu_custom_call.1} parent=11 // pred_check_branch
          %400 = sbr.rel (%p398) target = $region52
        $region51: #{tpu_custom_call.1} parent=11 // pred_region
          _
        $region52: #{tpu_custom_call.1} parent=11 // pred_fallthru
          _
        // Predicated region
        $region53: #{tpu_custom_call.1} parent=11 // pred_check
          %p401 = pneg %p304
        $region54: #{tpu_custom_call.1} parent=11 // pred_check_branch
          %403 = sbr.rel (%p401) target = $region56
        $region55: #{tpu_custom_call.1} parent=11 // pred_region
          _
        $region56: #{tpu_custom_call.1} parent=11 // pred_fallthru
          _
      $region12: #{tpu_custom_call.1} parent=5 // pred_fallthru
        _
      %p404 = scmp.lt.s32.totalorder %s21, 2
      // Predicated region
      $region57: #{tpu_custom_call.1} parent=5 // pred_check
        %p405 = pneg %p404
      $region58: #{tpu_custom_call.1} parent=5 // pred_check_branch
        %407 = sbr.rel (%p405) target = $region60
      $region59: #{tpu_custom_call.1} parent=5 // pred_region
        // Predicated region
        $region61: #{tpu_custom_call.1} parent=59 // pred_check
          %p408 = pneg %p41
        $region62: #{tpu_custom_call.1} parent=59 // pred_check_branch
          %410 = sbr.rel (%p408) target = $region64
        $region63: #{tpu_custom_call.1} parent=59 // pred_region
          %s411 = smul.u32 16, %s21
          %p412 = scmp.lt.s32.totalorder %s411, 31
          %s413 = scalar_select %p412, %s411, 31
          %s414 = smul.addr %s413, 2
          %s415 = smul.addr %s414, 4
          %s416 = scalar_lea.vmem %s0, %s415
          %s417 = smul.u32 16, %s21
        $region64: #{tpu_custom_call.1} parent=59 // pred_fallthru
          _
        // Predicated region
        $region65: #{tpu_custom_call.1} parent=59 // pred_check
          %p418 = pneg %p67
        $region66: #{tpu_custom_call.1} parent=59 // pred_check_branch
          %420 = sbr.rel (%p418) target = $region68
        $region67: #{tpu_custom_call.1} parent=59 // pred_region
          %s421 = smul.u32 16, %s21
          %p422 = scmp.lt.s32.totalorder %s421, 31
          %s423 = scalar_select %p422, %s421, 31
          %s424 = smul.addr %s423, 4
          %s425 = scalar_lea.vmem %s1, %s424
          %s426 = smul.u32 16, %s21
        $region68: #{tpu_custom_call.1} parent=59 // pred_fallthru
          _
      $region60: #{tpu_custom_call.1} parent=5 // pred_fallthru
        _
      %p427 = scmp.le.s32.totalorder 1, %s21
      %p428 = scmp.lt.s32.totalorder %s21, 3
      %p429 = pnand %p427, %p428
      %p430 = pneg %p429
      // Predicated region
      $region69: #{tpu_custom_call.1} parent=5 // pred_check
        _
      $region70: #{tpu_custom_call.1} parent=5 // pred_check_branch
        %432 = sbr.rel (%p429) target = $region72
      $region71: #{tpu_custom_call.1} parent=5 // pred_region
        %s433 = ssub.s32 %s21, 1
        // Predicated region
        $region73: #{tpu_custom_call.1} parent=71 // pred_check
          %p434 = pneg %p115
        $region74: #{tpu_custom_call.1} parent=71 // pred_check_branch
          %436 = sbr.rel (%p434) target = $region76
        $region75: #{tpu_custom_call.1} parent=71 // pred_region
          %437 = dma.done [#allocation3], 16
        $region76: #{tpu_custom_call.1} parent=71 // pred_fallthru
          _
        // Predicated region
        $region77: #{tpu_custom_call.1} parent=71 // pred_check
          %p438 = pneg %p157
        $region78: #{tpu_custom_call.1} parent=71 // pred_check_branch
          %440 = sbr.rel (%p438) target = $region80
        $region79: #{tpu_custom_call.1} parent=71 // pred_region
          %441 = dma.done [#allocation5], 112
        $region80: #{tpu_custom_call.1} parent=71 // pred_fallthru
          _
        // Predicated region
        $region81: #{tpu_custom_call.1} parent=71 // pred_check
          %p442 = pneg %p262
        $region82: #{tpu_custom_call.1} parent=71 // pred_check_branch
          %444 = sbr.rel (%p442) target = $region84
        $region83: #{tpu_custom_call.1} parent=71 // pred_region
          %445 = dma.done [#allocation5], 16
        $region84: #{tpu_custom_call.1} parent=71 // pred_fallthru
          _
        %s446 = smul.u32 16, %s26
        %p447 = scmp.lt.s32.totalorder %s446, 31
        %s448 = scalar_select %p447, %s446, 31
        %s449 = smul.addr %s448, 2
        %s450 = smul.addr %s449, 4
        %s451 = scalar_lea.vmem %s0, %s450
        %p452 = pneg %p47
        %p453 = pneg %p44
        %s454 = smul.u32 16, %s26
        %p455 = scmp.lt.s32.totalorder %s454, 31
        %s456 = scalar_select %p455, %s454, 31
        %s457 = smul.addr %s456, 4
        %s458 = scalar_lea.vmem %s1, %s457
        %p459 = pneg %p73
        %p460 = pneg %p70
        %p461 = pneg %p94
        %p462 = pneg %p91
        %p463 = pneg %p115
        %p464 = pneg %p112
        %p465 = pneg %p136
        %p466 = pneg %p133
        %p467 = pneg %p157
        %p468 = pneg %p154
        %p469 = pneg %p178
        %p470 = pneg %p175
        %p471 = pneg %p199
        %p472 = pneg %p196
        %p473 = pneg %p220
        %p474 = pneg %p217
        %p475 = pneg %p241
        %p476 = pneg %p238
        %p477 = pneg %p262
        %p478 = pneg %p259
        %p479 = pneg %p283
        %p480 = pneg %p280
        %p481 = pneg %p304
        %p482 = pneg %p301
        %p483 = pneg %p330
        %p484 = pneg %p327
        %s485 = smul.u32 16, %s26
        %p486 = scmp.lt.s32.totalorder %s485, 31
        %s487 = scalar_select %p486, %s485, 31
        %s488 = smul.addr %s487, 8
        %s489 = scalar_lea.vmem %s13, %s488
        %s490 = smul.u32 16, %s26
        %p491 = scmp.lt.s32.totalorder %s490, 31
        %s492 = scalar_select %p491, %s490, 31
        %s493 = smul.addr %s492, 2
        %s494 = smul.addr %s493, 4
        %s495 = scalar_lea.vmem %s0, %s494
        %s496 = smul.u32 16, %s26
        %s497 = smul.u32 16, %s26
        %p498 = scmp.lt.s32.totalorder %s497, 31
        %s499 = scalar_select %p498, %s497, 31
        %s500 = smul.addr %s499, 4
        %s501 = scalar_lea.vmem %s1, %s500
        %s502 = smul.u32 16, %s26
        %s503 = smul.u32 16, %s26
        %p504 = scmp.lt.s32.totalorder %s503, 31
        %s505 = scalar_select %p504, %s503, 31
        %s506 = smul.addr %s505, 8
        %s507 = scalar_lea.vmem %s13, %s506
        %s508 = smul.u32 16, %s26
        %v510 = vld [vmem:[%s495] sm:$0xff]
        %v511 = vld [vmem:[%s495 + $0x8] sm:$0xff]
        %v512 = vld [vmem:[%s495 + $0x10] sm:$0xff]
        %v513 = vld [vmem:[%s495 + $0x18] sm:$0xff]
        %v514 = vld [vmem:[%s495 + $0x20] sm:$0xff]
        %v515 = vld [vmem:[%s495 + $0x28] sm:$0xff]
        %v516 = vld [vmem:[%s495 + $0x30] sm:$0xff]
        %v517 = vld [vmem:[%s495 + $0x38] sm:$0xff]
        %v518 = vld [vmem:[%s495 + $0x40] sm:$0xff]
        %v519 = vld [vmem:[%s495 + $0x48] sm:$0xff]
        %v520 = vld [vmem:[%s495 + $0x50] sm:$0xff]
        %v521 = vld [vmem:[%s495 + $0x58] sm:$0xff]
        %v522 = vld [vmem:[%s495 + $0x60] sm:$0xff]
        %v523 = vld [vmem:[%s495 + $0x68] sm:$0xff]
        %v524 = vld [vmem:[%s495 + $0x70] sm:$0xff]
        %v525 = vld [vmem:[%s495 + $0x78] sm:$0xff]
        %v526 = vld [vmem:[%s501] sm:$0xf]
        %v527 = vld [vmem:[%s501 + $0x4] sm:$0xf]
        %v528 = vld [vmem:[%s501 + $0x8] sm:$0xf]
        %v529 = vld [vmem:[%s501 + $0xc] sm:$0xf]
        %v530 = vld [vmem:[%s501 + $0x10] sm:$0xf]
        %v531 = vld [vmem:[%s501 + $0x14] sm:$0xf]
        %v532 = vld [vmem:[%s501 + $0x18] sm:$0xf]
        %v533 = vld [vmem:[%s501 + $0x1c] sm:$0xf]
        %v534 = vld [vmem:[%s501 + $0x20] sm:$0xf]
        %v535 = vld [vmem:[%s501 + $0x24] sm:$0xf]
        %v536 = vld [vmem:[%s501 + $0x28] sm:$0xf]
        %v537 = vld [vmem:[%s501 + $0x2c] sm:$0xf]
        %v538 = vld [vmem:[%s501 + $0x30] sm:$0xf]
        %v539 = vld [vmem:[%s501 + $0x34] sm:$0xf]
        %v540 = vld [vmem:[%s501 + $0x38] sm:$0xf]
        %v541 = vld [vmem:[%s501 + $0x3c] sm:$0xf]
        %v542 = vld [vmem:[%s2] sm:$0xf]
        %v543 = vld [vmem:[%s2 + $0x4] sm:$0xf]
        %v544 = vld [vmem:[%s2 + $0x8] sm:$0xf]
        %v545 = vld [vmem:[%s2 + $0xc] sm:$0xf]
        %v546 = vld [vmem:[%s2 + $0x10] sm:$0xf]
        %v547 = vld [vmem:[%s2 + $0x14] sm:$0xf]
        %v548 = vld [vmem:[%s2 + $0x18] sm:$0xf]
        %v549 = vld [vmem:[%s2 + $0x1c] sm:$0xf]
        %v550 = vld [vmem:[%s2 + $0x20] sm:$0xf]
        %v551 = vld [vmem:[%s2 + $0x24] sm:$0xf]
        %v552 = vld [vmem:[%s2 + $0x28] sm:$0xf]
        %v553 = vld [vmem:[%s2 + $0x2c] sm:$0xf]
        %v554 = vld [vmem:[%s2 + $0x30] sm:$0xf]
        %v555 = vld [vmem:[%s2 + $0x34] sm:$0xf]
        %v556 = vld [vmem:[%s2 + $0x38] sm:$0xf]
        %v557 = vld [vmem:[%s2 + $0x3c] sm:$0xf]
        %v558 = vld [vmem:[%s2 + $0x40] sm:$0xf]
        %v559 = vld [vmem:[%s2 + $0x44] sm:$0xf]
        %v560 = vld [vmem:[%s2 + $0x48] sm:$0xf]
        %v561 = vld [vmem:[%s2 + $0x4c] sm:$0xf]
        %v562 = vld [vmem:[%s2 + $0x50] sm:$0xf]
        %v563 = vld [vmem:[%s2 + $0x54] sm:$0xf]
        %v564 = vld [vmem:[%s2 + $0x58] sm:$0xf]
        %v565 = vld [vmem:[%s2 + $0x5c] sm:$0xf]
        %v566 = vld [vmem:[%s2 + $0x60] sm:$0xf]
        %v567 = vld [vmem:[%s2 + $0x64] sm:$0xf]
        %v568 = vld [vmem:[%s2 + $0x68] sm:$0xf]
        %v569 = vld [vmem:[%s2 + $0x6c] sm:$0xf]
        %v570 = vld [vmem:[%s2 + $0x70] sm:$0xf]
        %v571 = vld [vmem:[%s2 + $0x74] sm:$0xf]
        %v572 = vld [vmem:[#allocation2] sm:$0x1]
        %v574 = vlaneseq
        %v575 = vshrl.u32 %v574, 7
        %v576 = vsub.s32 0, %v575
        %v577 = vrot.slane %v572, %v576
        %v595 = vunpack.c.l.b16 %v510
        %v596 = vunpack.c.h.b16 %v510
        %v597 = vunpack.c.l.b16 %v511
        %v598 = vunpack.c.h.b16 %v511
        %v599 = vunpack.c.l.b16 %v512
        %v600 = vunpack.c.h.b16 %v512
        %v601 = vunpack.c.l.b16 %v513
        %v602 = vunpack.c.h.b16 %v513
        %v603 = vunpack.c.l.b16 %v514
        %v604 = vunpack.c.h.b16 %v514
        %v605 = vunpack.c.l.b16 %v515
        %v606 = vunpack.c.h.b16 %v515
        %v607 = vunpack.c.l.b16 %v516
        %v608 = vunpack.c.h.b16 %v516
        %v609 = vunpack.c.l.b16 %v517
        %v610 = vunpack.c.h.b16 %v517
        %v611 = vunpack.c.l.b16 %v518
        %v612 = vunpack.c.h.b16 %v518
        %v613 = vunpack.c.l.b16 %v519
        %v614 = vunpack.c.h.b16 %v519
        %v615 = vunpack.c.l.b16 %v520
        %v616 = vunpack.c.h.b16 %v520
        %v617 = vunpack.c.l.b16 %v521
        %v618 = vunpack.c.h.b16 %v521
        %v619 = vunpack.c.l.b16 %v522
        %v620 = vunpack.c.h.b16 %v522
        %v621 = vunpack.c.l.b16 %v523
        %v622 = vunpack.c.h.b16 %v523
        %v623 = vunpack.c.l.b16 %v524
        %v624 = vunpack.c.h.b16 %v524
        %v625 = vunpack.c.l.b16 %v525
        %v626 = vunpack.c.h.b16 %v525
        %v627 = vpack.c.b16 %v597, %v595
        %v628 = vpack.c.b16 %v598, %v596
        %v629 = vpack.c.b16 %v601, %v599
        %v630 = vpack.c.b16 %v602, %v600
        %v631 = vpack.c.b16 %v605, %v603
        %v632 = vpack.c.b16 %v606, %v604
        %v633 = vpack.c.b16 %v609, %v607
        %v634 = vpack.c.b16 %v610, %v608
        %v635 = vpack.c.b16 %v613, %v611
        %v636 = vpack.c.b16 %v614, %v612
        %v637 = vpack.c.b16 %v617, %v615
        %v638 = vpack.c.b16 %v618, %v616
        %v639 = vpack.c.b16 %v621, %v619
        %v640 = vpack.c.b16 %v622, %v620
        %v641 = vpack.c.b16 %v625, %v623
        %v642 = vpack.c.b16 %v626, %v624
        %v681 = vunpack.c.l.b16 %v542
        %v682 = vunpack.c.l.b16 %v543
        %v683 = vunpack.c.l.b16 %v544
        %v684 = vunpack.c.l.b16 %v545
        %v685 = vunpack.c.l.b16 %v546
        %v686 = vunpack.c.l.b16 %v547
        %v687 = vunpack.c.l.b16 %v548
        %v688 = vunpack.c.l.b16 %v549
        %v689 = vunpack.c.l.b16 %v550
        %v690 = vunpack.c.l.b16 %v551
        %v691 = vunpack.c.l.b16 %v552
        %v692 = vunpack.c.l.b16 %v553
        %v693 = vunpack.c.l.b16 %v554
        %v694 = vunpack.c.l.b16 %v555
        %v695 = vunpack.c.l.b16 %v556
        %v696 = vunpack.c.l.b16 %v557
        %v697 = vunpack.c.l.b16 %v558
        %v698 = vunpack.c.l.b16 %v559
        %v699 = vunpack.c.l.b16 %v560
        %v700 = vunpack.c.l.b16 %v561
        %v701 = vunpack.c.l.b16 %v562
        %v702 = vunpack.c.l.b16 %v563
        %v703 = vunpack.c.l.b16 %v564
        %v704 = vunpack.c.l.b16 %v565
        %v705 = vunpack.c.l.b16 %v566
        %v706 = vunpack.c.l.b16 %v567
        %v707 = vunpack.c.l.b16 %v568
        %v708 = vunpack.c.l.b16 %v569
        %v709 = vunpack.c.l.b16 %v570
        %v710 = vunpack.c.l.b16 %v571
        %v711 = vpack.c.b16 %v682, %v681
        %v712 = vpack.c.b16 %v684, %v683
        %v713 = vpack.c.b16 %v686, %v685
        %v714 = vpack.c.b16 %v688, %v687
        %v715 = vpack.c.b16 %v690, %v689
        %v716 = vpack.c.b16 %v692, %v691
        %v717 = vpack.c.b16 %v694, %v693
        %v718 = vpack.c.b16 %v696, %v695
        %v719 = vpack.c.b16 %v698, %v697
        %v720 = vpack.c.b16 %v700, %v699
        %v721 = vpack.c.b16 %v702, %v701
        %v722 = vpack.c.b16 %v704, %v703
        %v723 = vpack.c.b16 %v706, %v705
        %v724 = vpack.c.b16 %v708, %v707
        %v725 = vpack.c.b16 %v710, %v709
        %vm741 = vcmask 916480
        %v743 = vsel %vm741, %v628, 0
        %v746 = vsel %vm741, %v630, 0
        %v749 = vsel %vm741, %v632, 0
        %v752 = vsel %vm741, %v634, 0
        %v755 = vsel %vm741, %v636, 0
        %v758 = vsel %vm741, %v638, 0
        %v761 = vsel %vm741, %v640, 0
        %v764 = vsel %vm741, %v642, 0
        %766 = vmatprep.subr.bf16.mxu0 0
        %767 = vmatpush1.bf16.msra.mxu0 %v711
        %768 = vmatprep.subr.bf16.mxu0 0
        %769 = vmatpush1.bf16.msra.mxu0 %v712
        %770 = vmatprep.subr.bf16.mxu0 0
        %771 = vmatpush1.bf16.msra.mxu0 %v713
        %772 = vmatprep.subr.bf16.mxu0 0
        %773 = vmatpush1.bf16.msra.mxu0 %v714
        %774 = vmatprep.subr.bf16.mxu0 0
        %775 = vmatpush1.bf16.msra.mxu0 %v715
        %776 = vmatprep.subr.bf16.mxu0 0
        %777 = vmatpush1.bf16.msra.mxu0 %v716
        %778 = vmatprep.subr.bf16.mxu0 0
        %779 = vmatpush1.bf16.msra.mxu0 %v717
        %780 = vmatprep.subr.bf16.mxu0 0
        %781 = vmatpush1.bf16.msra.mxu0 %v718
        %782 = vmatprep.subr.bf16.mxu0 0
        %783 = vmatpush1.bf16.msra.mxu0 %v719
        %784 = vmatprep.subr.bf16.mxu0 0
        %785 = vmatpush1.bf16.msra.mxu0 %v720
        %786 = vmatprep.subr.bf16.mxu0 0
        %787 = vmatpush1.bf16.msra.mxu0 %v721
        %788 = vmatprep.subr.bf16.mxu0 0
        %789 = vmatpush1.bf16.msra.mxu0 %v722
        %790 = vmatprep.subr.bf16.mxu0 0
        %791 = vmatpush1.bf16.msra.mxu0 %v723
        %792 = vmatprep.subr.bf16.mxu0 0
        %793 = vmatpush1.bf16.msra.mxu0 %v724
        %794 = vmatprep.subr.bf16.mxu0 0
        %795 = vmatpush1.bf16.msra.mxu0 %v725
        %796 = vmatprep.subr.bf16.mxu0 0
        %797 = vmatpush1.bf16.msra.mxu0 0
        %798 = vmatprep.mubr.bf16.mxu0 %v743
        %799 = vmatmul.mubr.bf16.gmra.mrb[0].mxu0 %v627
        %v800 = vpop.f32.mrb[0].mxu0
        %v801 = vadd.f32 %v577, %v800
        %v802 = vpop.f32.mrb[0].mxu0
        %v803 = vpop.f32.mrb[0].mxu0
        %v804 = vadd.f32 %v577, %v803
        %v805 = vpop.f32.mrb[0].mxu0
        %806 = vmatprep.mubr.bf16.mxu0 %v746
        %807 = vmatmul.mubr.bf16.gmra.mrb[0].mxu0 %v629
        %v808 = vpop.f32.mrb[0].mxu0
        %v809 = vadd.f32 %v577, %v808
        %v810 = vpop.f32.mrb[0].mxu0
        %v811 = vpop.f32.mrb[0].mxu0
        %v812 = vadd.f32 %v577, %v811
        %v813 = vpop.f32.mrb[0].mxu0
        %814 = vmatprep.mubr.bf16.mxu0 %v749
        %815 = vmatmul.mubr.bf16.gmra.mrb[0].mxu0 %v631
        %v816 = vpop.f32.mrb[0].mxu0
        %v817 = vadd.f32 %v577, %v816
        %v818 = vpop.f32.mrb[0].mxu0
        %v819 = vpop.f32.mrb[0].mxu0
        %v820 = vadd.f32 %v577, %v819
        %v821 = vpop.f32.mrb[0].mxu0
        %822 = vmatprep.mubr.bf16.mxu0 %v752
        %823 = vmatmul.mubr.bf16.gmra.mrb[0].mxu0 %v633
        %v824 = vpop.f32.mrb[0].mxu0
        %v825 = vadd.f32 %v577, %v824
        %v826 = vpop.f32.mrb[0].mxu0
        %v827 = vpop.f32.mrb[0].mxu0
        %v828 = vadd.f32 %v577, %v827
        %v829 = vpop.f32.mrb[0].mxu0
        %830 = vmatprep.mubr.bf16.mxu0 %v755
        %831 = vmatmul.mubr.bf16.gmra.mrb[0].mxu0 %v635
        %v832 = vpop.f32.mrb[0].mxu0
        %v833 = vadd.f32 %v577, %v832
        %v834 = vpop.f32.mrb[0].mxu0
        %v835 = vpop.f32.mrb[0].mxu0
        %v836 = vadd.f32 %v577, %v835
        %v837 = vpop.f32.mrb[0].mxu0
        %838 = vmatprep.mubr.bf16.mxu0 %v758
        %839 = vmatmul.mubr.bf16.gmra.mrb[0].mxu0 %v637
        %v840 = vpop.f32.mrb[0].mxu0
        %v841 = vadd.f32 %v577, %v840
        %v842 = vpop.f32.mrb[0].mxu0
        %v843 = vpop.f32.mrb[0].mxu0
        %v844 = vadd.f32 %v577, %v843
        %v845 = vpop.f32.mrb[0].mxu0
        %846 = vmatprep.mubr.bf16.mxu0 %v761
        %847 = vmatmul.mubr.bf16.gmra.mrb[0].mxu0 %v639
        %v848 = vpop.f32.mrb[0].mxu0
        %v849 = vadd.f32 %v577, %v848
        %v850 = vpop.f32.mrb[0].mxu0
        %v851 = vpop.f32.mrb[0].mxu0
        %v852 = vadd.f32 %v577, %v851
        %v853 = vpop.f32.mrb[0].mxu0
        %854 = vmatprep.mubr.bf16.mxu0 %v764
        %855 = vmatmul.mubr.bf16.gmra.mrb[0].mxu0 %v641
        %v856 = vpop.f32.mrb[0].mxu0
        %v857 = vadd.f32 %v577, %v856
        %v858 = vpop.f32.mrb[0].mxu0
        %v859 = vpop.f32.mrb[0].mxu0
        %v860 = vadd.f32 %v577, %v859
        %v861 = vpop.f32.mrb[0].mxu0
        %862 = vdwg.mxu0
        %v863 = vmax.f32 %v801, 0.0
        %v864 = vmax.f32 %v804, 0.0
        %v865 = vmax.f32 %v809, 0.0
        %v866 = vmax.f32 %v812, 0.0
        %v867 = vmax.f32 %v817, 0.0
        %v868 = vmax.f32 %v820, 0.0
        %v869 = vmax.f32 %v825, 0.0
        %v870 = vmax.f32 %v828, 0.0
        %v871 = vmax.f32 %v833, 0.0
        %v872 = vmax.f32 %v836, 0.0
        %v873 = vmax.f32 %v841, 0.0
        %v874 = vmax.f32 %v844, 0.0
        %v875 = vmax.f32 %v849, 0.0
        %v876 = vmax.f32 %v852, 0.0
        %v877 = vmax.f32 %v857, 0.0
        %v878 = vmax.f32 %v860, 0.0
        %v879 = vpack.c.bf16 %v864, %v863
        %v880 = vpack.c.bf16 %v866, %v865
        %v881 = vpack.c.bf16 %v868, %v867
        %v882 = vpack.c.bf16 %v870, %v869
        %v883 = vpack.c.bf16 %v872, %v871
        %v884 = vpack.c.bf16 %v874, %v873
        %v885 = vpack.c.bf16 %v876, %v875
        %v886 = vpack.c.bf16 %v878, %v877
        %v887 = vld [vmem:[%s4] sm:$0xf]
        %v888 = vld [vmem:[%s4 + $0x4] sm:$0xf]
        %v889 = vld [vmem:[%s4 + $0x8] sm:$0xf]
        %v890 = vld [vmem:[%s4 + $0xc] sm:$0xf]
        %v891 = vld [vmem:[%s4 + $0x10] sm:$0xf]
        %v892 = vld [vmem:[%s4 + $0x14] sm:$0xf]
        %v893 = vld [vmem:[%s4 + $0x18] sm:$0xf]
        %v894 = vld [vmem:[%s4 + $0x1c] sm:$0xf]
        %v895 = vld [vmem:[%s4 + $0x20] sm:$0xf]
        %v896 = vld [vmem:[%s4 + $0x24] sm:$0xf]
        %v897 = vld [vmem:[%s4 + $0x28] sm:$0xf]
        %v898 = vld [vmem:[%s4 + $0x2c] sm:$0xf]
        %v899 = vld [vmem:[%s4 + $0x30] sm:$0xf]
        %v900 = vld [vmem:[%s4 + $0x34] sm:$0xf]
        %v901 = vld [vmem:[%s4 + $0x38] sm:$0xf]
        %v902 = vld [vmem:[%s4 + $0x3c] sm:$0xf]
        %v903 = vld [vmem:[#allocation4] sm:$0x1]
        %v905 = vlaneseq
        %v906 = vshrl.u32 %v905, 7
        %v907 = vsub.s32 0, %v906
        %v908 = vrot.slane %v903, %v907
        %v926 = vunpack.c.l.b16 %v887
        %v927 = vunpack.c.l.b16 %v888
        %v928 = vunpack.c.l.b16 %v889
        %v929 = vunpack.c.l.b16 %v890
        %v930 = vunpack.c.l.b16 %v891
        %v931 = vunpack.c.l.b16 %v892
        %v932 = vunpack.c.l.b16 %v893
        %v933 = vunpack.c.l.b16 %v894
        %v934 = vunpack.c.l.b16 %v895
        %v935 = vunpack.c.l.b16 %v896
        %v936 = vunpack.c.l.b16 %v897
        %v937 = vunpack.c.l.b16 %v898
        %v938 = vunpack.c.l.b16 %v899
        %v939 = vunpack.c.l.b16 %v900
        %v940 = vunpack.c.l.b16 %v901
        %v941 = vunpack.c.l.b16 %v902
        %v942 = vpack.c.b16 %v927, %v926
        %v943 = vpack.c.b16 %v929, %v928
        %v944 = vpack.c.b16 %v931, %v930
        %v945 = vpack.c.b16 %v933, %v932
        %v946 = vpack.c.b16 %v935, %v934
        %v947 = vpack.c.b16 %v937, %v936
        %v948 = vpack.c.b16 %v939, %v938
        %v949 = vpack.c.b16 %v941, %v940
        %958 = vmatprep.subr.bf16.mxu0 0
        %959 = vmatpush1.bf16.msra.mxu0 %v942
        %960 = vmatprep.subr.bf16.mxu0 0
        %961 = vmatpush1.bf16.msra.mxu0 %v943
        %962 = vmatprep.subr.bf16.mxu0 0
        %963 = vmatpush1.bf16.msra.mxu0 %v944
        %964 = vmatprep.subr.bf16.mxu0 0
        %965 = vmatpush1.bf16.msra.mxu0 %v945
        %966 = vmatprep.subr.bf16.mxu0 0
        %967 = vmatpush1.bf16.msra.mxu0 %v946
        %968 = vmatprep.subr.bf16.mxu0 0
        %969 = vmatpush1.bf16.msra.mxu0 %v947
        %970 = vmatprep.subr.bf16.mxu0 0
        %971 = vmatpush1.bf16.msra.mxu0 %v948
        %972 = vmatprep.subr.bf16.mxu0 0
        %973 = vmatpush1.bf16.msra.mxu0 %v949
        %974 = vmatprep.subr.bf16.mxu0 0
        %975 = vmatpush1.bf16.msra.mxu0 0
        %976 = vmatprep.subr.bf16.mxu0 0
        %977 = vmatpush1.bf16.msra.mxu0 0
        %978 = vmatprep.subr.bf16.mxu0 0
        %979 = vmatpush1.bf16.msra.mxu0 0
        %980 = vmatprep.subr.bf16.mxu0 0
        %981 = vmatpush1.bf16.msra.mxu0 0
        %982 = vmatprep.subr.bf16.mxu0 0
        %983 = vmatpush1.bf16.msra.mxu0 0
        %984 = vmatprep.subr.bf16.mxu0 0
        %985 = vmatpush1.bf16.msra.mxu0 0
        %986 = vmatprep.subr.bf16.mxu0 0
        %987 = vmatpush1.bf16.msra.mxu0 0
        %988 = vmatprep.subr.bf16.mxu0 0
        %989 = vmatpush1.bf16.msra.mxu0 0
        %990 = vmatprep.mubr.bf16.mxu0 0
        %991 = vmatmul.mubr.bf16.gmra.mrb[0].mxu0 %v879
        %v992 = vpop.f32.mrb[0].mxu0
        %v993 = vadd.f32 %v908, %v992
        %v994 = vpop.f32.mrb[0].mxu0
        %v995 = vpop.f32.mrb[0].mxu0
        %v996 = vadd.f32 %v908, %v995
        %v997 = vpop.f32.mrb[0].mxu0
        %998 = vmatprep.mubr.bf16.mxu0 0
        %999 = vmatmul.mubr.bf16.gmra.mrb[0].mxu0 %v880
        %v1000 = vpop.f32.mrb[0].mxu0
        %v1001 = vadd.f32 %v908, %v1000
        %v1002 = vpop.f32.mrb[0].mxu0
        %v1003 = vpop.f32.mrb[0].mxu0
        %v1004 = vadd.f32 %v908, %v1003
        %v1005 = vpop.f32.mrb[0].mxu0
        %1006 = vmatprep.mubr.bf16.mxu0 0
        %1007 = vmatmul.mubr.bf16.gmra.mrb[0].mxu0 %v881
        %v1008 = vpop.f32.mrb[0].mxu0
        %v1009 = vadd.f32 %v908, %v1008
        %v1010 = vpop.f32.mrb[0].mxu0
        %v1011 = vpop.f32.mrb[0].mxu0
        %v1012 = vadd.f32 %v908, %v1011
        %v1013 = vpop.f32.mrb[0].mxu0
        %1014 = vmatprep.mubr.bf16.mxu0 0
        %1015 = vmatmul.mubr.bf16.gmra.mrb[0].mxu0 %v882
        %v1016 = vpop.f32.mrb[0].mxu0
        %v1017 = vadd.f32 %v908, %v1016
        %v1018 = vpop.f32.mrb[0].mxu0
        %v1019 = vpop.f32.mrb[0].mxu0
        %v1020 = vadd.f32 %v908, %v1019
        %v1021 = vpop.f32.mrb[0].mxu0
        %1022 = vmatprep.mubr.bf16.mxu0 0
        %1023 = vmatmul.mubr.bf16.gmra.mrb[0].mxu0 %v883
        %v1024 = vpop.f32.mrb[0].mxu0
        %v1025 = vadd.f32 %v908, %v1024
        %v1026 = vpop.f32.mrb[0].mxu0
        %v1027 = vpop.f32.mrb[0].mxu0
        %v1028 = vadd.f32 %v908, %v1027
        %v1029 = vpop.f32.mrb[0].mxu0
        %1030 = vmatprep.mubr.bf16.mxu0 0
        %1031 = vmatmul.mubr.bf16.gmra.mrb[0].mxu0 %v884
        %v1032 = vpop.f32.mrb[0].mxu0
        %v1033 = vadd.f32 %v908, %v1032
        %v1034 = vpop.f32.mrb[0].mxu0
        %v1035 = vpop.f32.mrb[0].mxu0
        %v1036 = vadd.f32 %v908, %v1035
        %v1037 = vpop.f32.mrb[0].mxu0
        %1038 = vmatprep.mubr.bf16.mxu0 0
        %1039 = vmatmul.mubr.bf16.gmra.mrb[0].mxu0 %v885
        %v1040 = vpop.f32.mrb[0].mxu0
        %v1041 = vadd.f32 %v908, %v1040
        %v1042 = vpop.f32.mrb[0].mxu0
        %v1043 = vpop.f32.mrb[0].mxu0
        %v1044 = vadd.f32 %v908, %v1043
        %v1045 = vpop.f32.mrb[0].mxu0
        %1046 = vmatprep.mubr.bf16.mxu0 0
        %1047 = vmatmul.mubr.bf16.gmra.mrb[0].mxu0 %v886
        %v1048 = vpop.f32.mrb[0].mxu0
        %v1049 = vadd.f32 %v908, %v1048
        %v1050 = vpop.f32.mrb[0].mxu0
        %v1051 = vpop.f32.mrb[0].mxu0
        %v1052 = vadd.f32 %v908, %v1051
        %v1053 = vpop.f32.mrb[0].mxu0
        %1054 = vdwg.mxu0
        %v1055 = vmax.f32 %v993, 0.0
        %v1056 = vmax.f32 %v996, 0.0
        %v1057 = vmax.f32 %v1001, 0.0
        %v1058 = vmax.f32 %v1004, 0.0
        %v1059 = vmax.f32 %v1009, 0.0
        %v1060 = vmax.f32 %v1012, 0.0
        %v1061 = vmax.f32 %v1017, 0.0
        %v1062 = vmax.f32 %v1020, 0.0
        %v1063 = vmax.f32 %v1025, 0.0
        %v1064 = vmax.f32 %v1028, 0.0
        %v1065 = vmax.f32 %v1033, 0.0
        %v1066 = vmax.f32 %v1036, 0.0
        %v1067 = vmax.f32 %v1041, 0.0
        %v1068 = vmax.f32 %v1044, 0.0
        %v1069 = vmax.f32 %v1049, 0.0
        %v1070 = vmax.f32 %v1052, 0.0
        %v1071 = vpack.c.bf16 %v1056, %v1055
        %v1072 = vpack.c.bf16 %v1058, %v1057
        %v1073 = vpack.c.bf16 %v1060, %v1059
        %v1074 = vpack.c.bf16 %v1062, %v1061
        %v1075 = vpack.c.bf16 %v1064, %v1063
        %v1076 = vpack.c.bf16 %v1066, %v1065
        %v1077 = vpack.c.bf16 %v1068, %v1067
        %v1078 = vpack.c.bf16 %v1070, %v1069
        %s1079 = scalar_lea.vmem %s4, 64
        %v1080 = vld [vmem:[%s1079] sm:$0xf]
        %v1081 = vld [vmem:[%s1079 + $0x4] sm:$0xf]
        %v1082 = vld [vmem:[%s1079 + $0x8] sm:$0xf]
        %v1083 = vld [vmem:[%s1079 + $0xc] sm:$0xf]
        %v1084 = vld [vmem:[%s1079 + $0x10] sm:$0xf]
        %v1085 = vld [vmem:[%s1079 + $0x14] sm:$0xf]
        %v1086 = vld [vmem:[%s1079 + $0x18] sm:$0xf]
        %v1087 = vld [vmem:[%s1079 + $0x1c] sm:$0xf]
        %v1088 = vld [vmem:[%s1079 + $0x20] sm:$0xf]
        %v1089 = vld [vmem:[%s1079 + $0x24] sm:$0xf]
        %v1090 = vld [vmem:[%s1079 + $0x28] sm:$0xf]
        %v1091 = vld [vmem:[%s1079 + $0x2c] sm:$0xf]
        %v1092 = vld [vmem:[%s1079 + $0x30] sm:$0xf]
        %v1093 = vld [vmem:[%s1079 + $0x34] sm:$0xf]
        %v1094 = vld [vmem:[%s1079 + $0x38] sm:$0xf]
        %v1095 = vld [vmem:[%s1079 + $0x3c] sm:$0xf]
        %s1096 = scalar_lea.vmem [#allocation4], 1
        %v1097 = vld [vmem:[%s1096] sm:$0x1]
        %v1099 = vlaneseq
        %v1100 = vshrl.u32 %v1099, 7
        %v1101 = vsub.s32 0, %v1100
        %v1102 = vrot.slane %v1097, %v1101
        %v1120 = vunpack.c.l.b16 %v1080
        %v1121 = vunpack.c.l.b16 %v1081
        %v1122 = vunpack.c.l.b16 %v1082
        %v1123 = vunpack.c.l.b16 %v1083
        %v1124 = vunpack.c.l.b16 %v1084
        %v1125 = vunpack.c.l.b16 %v1085
        %v1126 = vunpack.c.l.b16 %v1086
        %v1127 = vunpack.c.l.b16 %v1087
        %v1128 = vunpack.c.l.b16 %v1088
        %v1129 = vunpack.c.l.b16 %v1089
        %v1130 = vunpack.c.l.b16 %v1090
        %v1131 = vunpack.c.l.b16 %v1091
        %v1132 = vunpack.c.l.b16 %v1092
        %v1133 = vunpack.c.l.b16 %v1093
        %v1134 = vunpack.c.l.b16 %v1094
        %v1135 = vunpack.c.l.b16 %v1095
        %v1136 = vpack.c.b16 %v1121, %v1120
        %v1137 = vpack.c.b16 %v1123, %v1122
        %v1138 = vpack.c.b16 %v1125, %v1124
        %v1139 = vpack.c.b16 %v1127, %v1126
        %v1140 = vpack.c.b16 %v1129, %v1128
        %v1141 = vpack.c.b16 %v1131, %v1130
        %v1142 = vpack.c.b16 %v1133, %v1132
        %v1143 = vpack.c.b16 %v1135, %v1134
        %1152 = vmatprep.subr.bf16.mxu0 0
        %1153 = vmatpush1.bf16.msra.mxu0 %v1136
        %1154 = vmatprep.subr.bf16.mxu0 0
        %1155 = vmatpush1.bf16.msra.mxu0 %v1137
        %1156 = vmatprep.subr.bf16.mxu0 0
        %1157 = vmatpush1.bf16.msra.mxu0 %v1138
        %1158 = vmatprep.subr.bf16.mxu0 0
        %1159 = vmatpush1.bf16.msra.mxu0 %v1139
        %1160 = vmatprep.subr.bf16.mxu0 0
        %1161 = vmatpush1.bf16.msra.mxu0 %v1140
        %1162 = vmatprep.subr.bf16.mxu0 0
        %1163 = vmatpush1.bf16.msra.mxu0 %v1141
        %1164 = vmatprep.subr.bf16.mxu0 0
        %1165 = vmatpush1.bf16.msra.mxu0 %v1142
        %1166 = vmatprep.subr.bf16.mxu0 0
        %1167 = vmatpush1.bf16.msra.mxu0 %v1143
        %1168 = vmatprep.subr.bf16.mxu0 0
        %1169 = vmatpush1.bf16.msra.mxu0 0
        %1170 = vmatprep.subr.bf16.mxu0 0
        %1171 = vmatpush1.bf16.msra.mxu0 0
        %1172 = vmatprep.subr.bf16.mxu0 0
        %1173 = vmatpush1.bf16.msra.mxu0 0
        %1174 = vmatprep.subr.bf16.mxu0 0
        %1175 = vmatpush1.bf16.msra.mxu0 0
        %1176 = vmatprep.subr.bf16.mxu0 0
        %1177 = vmatpush1.bf16.msra.mxu0 0
        %1178 = vmatprep.subr.bf16.mxu0 0
        %1179 = vmatpush1.bf16.msra.mxu0 0
        %1180 = vmatprep.subr.bf16.mxu0 0
        %1181 = vmatpush1.bf16.msra.mxu0 0
        %1182 = vmatprep.subr.bf16.mxu0 0
        %1183 = vmatpush1.bf16.msra.mxu0 0
        %1184 = vmatprep.mubr.bf16.mxu0 0
        %1185 = vmatmul.mubr.bf16.gmra.mrb[0].mxu0 %v1071
        %v1186 = vpop.f32.mrb[0].mxu0
        %v1187 = vadd.f32 %v1102, %v1186
        %v1188 = vpop.f32.mrb[0].mxu0
        %v1189 = vpop.f32.mrb[0].mxu0
        %v1190 = vadd.f32 %v1102, %v1189
        %v1191 = vpop.f32.mrb[0].mxu0
        %1192 = vmatprep.mubr.bf16.mxu0 0
        %1193 = vmatmul.mubr.bf16.gmra.mrb[0].mxu0 %v1072
        %v1194 = vpop.f32.mrb[0].mxu0
        %v1195 = vadd.f32 %v1102, %v1194
        %v1196 = vpop.f32.mrb[0].mxu0
        %v1197 = vpop.f32.mrb[0].mxu0
        %v1198 = vadd.f32 %v1102, %v1197
        %v1199 = vpop.f32.mrb[0].mxu0
        %1200 = vmatprep.mubr.bf16.mxu0 0
        %1201 = vmatmul.mubr.bf16.gmra.mrb[0].mxu0 %v1073
        %v1202 = vpop.f32.mrb[0].mxu0
        %v1203 = vadd.f32 %v1102, %v1202
        %v1204 = vpop.f32.mrb[0].mxu0
        %v1205 = vpop.f32.mrb[0].mxu0
        %v1206 = vadd.f32 %v1102, %v1205
        %v1207 = vpop.f32.mrb[0].mxu0
        %1208 = vmatprep.mubr.bf16.mxu0 0
        %1209 = vmatmul.mubr.bf16.gmra.mrb[0].mxu0 %v1074
        %v1210 = vpop.f32.mrb[0].mxu0
        %v1211 = vadd.f32 %v1102, %v1210
        %v1212 = vpop.f32.mrb[0].mxu0
        %v1213 = vpop.f32.mrb[0].mxu0
        %v1214 = vadd.f32 %v1102, %v1213
        %v1215 = vpop.f32.mrb[0].mxu0
        %1216 = vmatprep.mubr.bf16.mxu0 0
        %1217 = vmatmul.mubr.bf16.gmra.mrb[0].mxu0 %v1075
        %v1218 = vpop.f32.mrb[0].mxu0
        %v1219 = vadd.f32 %v1102, %v1218
        %v1220 = vpop.f32.mrb[0].mxu0
        %v1221 = vpop.f32.mrb[0].mxu0
        %v1222 = vadd.f32 %v1102, %v1221
        %v1223 = vpop.f32.mrb[0].mxu0
        %1224 = vmatprep.mubr.bf16.mxu0 0
        %1225 = vmatmul.mubr.bf16.gmra.mrb[0].mxu0 %v1076
        %v1226 = vpop.f32.mrb[0].mxu0
        %v1227 = vadd.f32 %v1102, %v1226
        %v1228 = vpop.f32.mrb[0].mxu0
        %v1229 = vpop.f32.mrb[0].mxu0
        %v1230 = vadd.f32 %v1102, %v1229
        %v1231 = vpop.f32.mrb[0].mxu0
        %1232 = vmatprep.mubr.bf16.mxu0 0
        %1233 = vmatmul.mubr.bf16.gmra.mrb[0].mxu0 %v1077
        %v1234 = vpop.f32.mrb[0].mxu0
        %v1235 = vadd.f32 %v1102, %v1234
        %v1236 = vpop.f32.mrb[0].mxu0
        %v1237 = vpop.f32.mrb[0].mxu0
        %v1238 = vadd.f32 %v1102, %v1237
        %v1239 = vpop.f32.mrb[0].mxu0
        %1240 = vmatprep.mubr.bf16.mxu0 0
        %1241 = vmatmul.mubr.bf16.gmra.mrb[0].mxu0 %v1078
        %v1242 = vpop.f32.mrb[0].mxu0
        %v1243 = vadd.f32 %v1102, %v1242
        %v1244 = vpop.f32.mrb[0].mxu0
        %v1245 = vpop.f32.mrb[0].mxu0
        %v1246 = vadd.f32 %v1102, %v1245
        %v1247 = vpop.f32.mrb[0].mxu0
        %1248 = vdwg.mxu0
        %v1249 = vmax.f32 %v1187, 0.0
        %v1250 = vmax.f32 %v1190, 0.0
        %v1251 = vmax.f32 %v1195, 0.0
        %v1252 = vmax.f32 %v1198, 0.0
        %v1253 = vmax.f32 %v1203, 0.0
        %v1254 = vmax.f32 %v1206, 0.0
        %v1255 = vmax.f32 %v1211, 0.0
        %v1256 = vmax.f32 %v1214, 0.0
        %v1257 = vmax.f32 %v1219, 0.0
        %v1258 = vmax.f32 %v1222, 0.0
        %v1259 = vmax.f32 %v1227, 0.0
        %v1260 = vmax.f32 %v1230, 0.0
        %v1261 = vmax.f32 %v1235, 0.0
        %v1262 = vmax.f32 %v1238, 0.0
        %v1263 = vmax.f32 %v1243, 0.0
        %v1264 = vmax.f32 %v1246, 0.0
        %v1265 = vpack.c.bf16 %v1250, %v1249
        %v1266 = vpack.c.bf16 %v1252, %v1251
        %v1267 = vpack.c.bf16 %v1254, %v1253
        %v1268 = vpack.c.bf16 %v1256, %v1255
        %v1269 = vpack.c.bf16 %v1258, %v1257
        %v1270 = vpack.c.bf16 %v1260, %v1259
        %v1271 = vpack.c.bf16 %v1262, %v1261
        %v1272 = vpack.c.bf16 %v1264, %v1263
        %s1273 = scalar_lea.vmem %s4, 128
        %v1274 = vld [vmem:[%s1273] sm:$0xf]
        %v1275 = vld [vmem:[%s1273 + $0x4] sm:$0xf]
        %v1276 = vld [vmem:[%s1273 + $0x8] sm:$0xf]
        %v1277 = vld [vmem:[%s1273 + $0xc] sm:$0xf]
        %v1278 = vld [vmem:[%s1273 + $0x10] sm:$0xf]
        %v1279 = vld [vmem:[%s1273 + $0x14] sm:$0xf]
        %v1280 = vld [vmem:[%s1273 + $0x18] sm:$0xf]
        %v1281 = vld [vmem:[%s1273 + $0x1c] sm:$0xf]
        %v1282 = vld [vmem:[%s1273 + $0x20] sm:$0xf]
        %v1283 = vld [vmem:[%s1273 + $0x24] sm:$0xf]
        %v1284 = vld [vmem:[%s1273 + $0x28] sm:$0xf]
        %v1285 = vld [vmem:[%s1273 + $0x2c] sm:$0xf]
        %v1286 = vld [vmem:[%s1273 + $0x30] sm:$0xf]
        %v1287 = vld [vmem:[%s1273 + $0x34] sm:$0xf]
        %v1288 = vld [vmem:[%s1273 + $0x38] sm:$0xf]
        %v1289 = vld [vmem:[%s1273 + $0x3c] sm:$0xf]
        %s1290 = scalar_lea.vmem [#allocation4], 2
        %v1291 = vld [vmem:[%s1290] sm:$0x1]
        %v1293 = vlaneseq
        %v1294 = vshrl.u32 %v1293, 7
        %v1295 = vsub.s32 0, %v1294
        %v1296 = vrot.slane %v1291, %v1295
        %v1314 = vunpack.c.l.b16 %v1274
        %v1315 = vunpack.c.l.b16 %v1275
        %v1316 = vunpack.c.l.b16 %v1276
        %v1317 = vunpack.c.l.b16 %v1277
        %v1318 = vunpack.c.l.b16 %v1278
        %v1319 = vunpack.c.l.b16 %v1279
        %v1320 = vunpack.c.l.b16 %v1280
        %v1321 = vunpack.c.l.b16 %v1281
        %v1322 = vunpack.c.l.b16 %v1282
        %v1323 = vunpack.c.l.b16 %v1283
        %v1324 = vunpack.c.l.b16 %v1284
        %v1325 = vunpack.c.l.b16 %v1285
        %v1326 = vunpack.c.l.b16 %v1286
        %v1327 = vunpack.c.l.b16 %v1287
        %v1328 = vunpack.c.l.b16 %v1288
        %v1329 = vunpack.c.l.b16 %v1289
        %v1330 = vpack.c.b16 %v1315, %v1314
        %v1331 = vpack.c.b16 %v1317, %v1316
        %v1332 = vpack.c.b16 %v1319, %v1318
        %v1333 = vpack.c.b16 %v1321, %v1320
        %v1334 = vpack.c.b16 %v1323, %v1322
        %v1335 = vpack.c.b16 %v1325, %v1324
        %v1336 = vpack.c.b16 %v1327, %v1326
        %v1337 = vpack.c.b16 %v1329, %v1328
        %1346 = vmatprep.subr.bf16.mxu0 0
        %1347 = vmatpush1.bf16.msra.mxu0 %v1330
        %1348 = vmatprep.subr.bf16.mxu0 0
        %1349 = vmatpush1.bf16.msra.mxu0 %v1331
        %1350 = vmatprep.subr.bf16.mxu0 0
        %1351 = vmatpush1.bf16.msra.mxu0 %v1332
        %1352 = vmatprep.subr.bf16.mxu0 0
        %1353 = vmatpush1.bf16.msra.mxu0 %v1333
        %1354 = vmatprep.subr.bf16.mxu0 0
        %1355 = vmatpush1.bf16.msra.mxu0 %v1334
        %1356 = vmatprep.subr.bf16.mxu0 0
        %1357 = vmatpush1.bf16.msra.mxu0 %v1335
        %1358 = vmatprep.subr.bf16.mxu0 0
        %1359 = vmatpush1.bf16.msra.mxu0 %v1336
        %1360 = vmatprep.subr.bf16.mxu0 0
        %1361 = vmatpush1.bf16.msra.mxu0 %v1337
        %1362 = vmatprep.subr.bf16.mxu0 0
        %1363 = vmatpush1.bf16.msra.mxu0 0
        %1364 = vmatprep.subr.bf16.mxu0 0
        %1365 = vmatpush1.bf16.msra.mxu0 0
        %1366 = vmatprep.subr.bf16.mxu0 0
        %1367 = vmatpush1.bf16.msra.mxu0 0
        %1368 = vmatprep.subr.bf16.mxu0 0
        %1369 = vmatpush1.bf16.msra.mxu0 0
        %1370 = vmatprep.subr.bf16.mxu0 0
        %1371 = vmatpush1.bf16.msra.mxu0 0
        %1372 = vmatprep.subr.bf16.mxu0 0
        %1373 = vmatpush1.bf16.msra.mxu0 0
        %1374 = vmatprep.subr.bf16.mxu0 0
        %1375 = vmatpush1.bf16.msra.mxu0 0
        %1376 = vmatprep.subr.bf16.mxu0 0
        %1377 = vmatpush1.bf16.msra.mxu0 0
        %1378 = vmatprep.mubr.bf16.mxu0 0
        %1379 = vmatmul.mubr.bf16.gmra.mrb[0].mxu0 %v1265
        %v1380 = vpop.f32.mrb[0].mxu0
        %v1381 = vadd.f32 %v1296, %v1380
        %v1382 = vpop.f32.mrb[0].mxu0
        %v1383 = vpop.f32.mrb[0].mxu0
        %v1384 = vadd.f32 %v1296, %v1383
        %v1385 = vpop.f32.mrb[0].mxu0
        %1386 = vmatprep.mubr.bf16.mxu0 0
        %1387 = vmatmul.mubr.bf16.gmra.mrb[0].mxu0 %v1266
        %v1388 = vpop.f32.mrb[0].mxu0
        %v1389 = vadd.f32 %v1296, %v1388
        %v1390 = vpop.f32.mrb[0].mxu0
        %v1391 = vpop.f32.mrb[0].mxu0
        %v1392 = vadd.f32 %v1296, %v1391
        %v1393 = vpop.f32.mrb[0].mxu0
        %1394 = vmatprep.mubr.bf16.mxu0 0
        %1395 = vmatmul.mubr.bf16.gmra.mrb[0].mxu0 %v1267
        %v1396 = vpop.f32.mrb[0].mxu0
        %v1397 = vadd.f32 %v1296, %v1396
        %v1398 = vpop.f32.mrb[0].mxu0
        %v1399 = vpop.f32.mrb[0].mxu0
        %v1400 = vadd.f32 %v1296, %v1399
        %v1401 = vpop.f32.mrb[0].mxu0
        %1402 = vmatprep.mubr.bf16.mxu0 0
        %1403 = vmatmul.mubr.bf16.gmra.mrb[0].mxu0 %v1268
        %v1404 = vpop.f32.mrb[0].mxu0
        %v1405 = vadd.f32 %v1296, %v1404
        %v1406 = vpop.f32.mrb[0].mxu0
        %v1407 = vpop.f32.mrb[0].mxu0
        %v1408 = vadd.f32 %v1296, %v1407
        %v1409 = vpop.f32.mrb[0].mxu0
        %1410 = vmatprep.mubr.bf16.mxu0 0
        %1411 = vmatmul.mubr.bf16.gmra.mrb[0].mxu0 %v1269
        %v1412 = vpop.f32.mrb[0].mxu0
        %v1413 = vadd.f32 %v1296, %v1412
        %v1414 = vpop.f32.mrb[0].mxu0
        %v1415 = vpop.f32.mrb[0].mxu0
        %v1416 = vadd.f32 %v1296, %v1415
        %v1417 = vpop.f32.mrb[0].mxu0
        %1418 = vmatprep.mubr.bf16.mxu0 0
        %1419 = vmatmul.mubr.bf16.gmra.mrb[0].mxu0 %v1270
        %v1420 = vpop.f32.mrb[0].mxu0
        %v1421 = vadd.f32 %v1296, %v1420
        %v1422 = vpop.f32.mrb[0].mxu0
        %v1423 = vpop.f32.mrb[0].mxu0
        %v1424 = vadd.f32 %v1296, %v1423
        %v1425 = vpop.f32.mrb[0].mxu0
        %1426 = vmatprep.mubr.bf16.mxu0 0
        %1427 = vmatmul.mubr.bf16.gmra.mrb[0].mxu0 %v1271
        %v1428 = vpop.f32.mrb[0].mxu0
        %v1429 = vadd.f32 %v1296, %v1428
        %v1430 = vpop.f32.mrb[0].mxu0
        %v1431 = vpop.f32.mrb[0].mxu0
        %v1432 = vadd.f32 %v1296, %v1431
        %v1433 = vpop.f32.mrb[0].mxu0
        %1434 = vmatprep.mubr.bf16.mxu0 0
        %1435 = vmatmul.mubr.bf16.gmra.mrb[0].mxu0 %v1272
        %v1436 = vpop.f32.mrb[0].mxu0
        %v1437 = vadd.f32 %v1296, %v1436
        %v1438 = vpop.f32.mrb[0].mxu0
        %v1439 = vpop.f32.mrb[0].mxu0
        %v1440 = vadd.f32 %v1296, %v1439
        %v1441 = vpop.f32.mrb[0].mxu0
        %1442 = vdwg.mxu0
        %v1443 = vmax.f32 %v1381, 0.0
        %v1444 = vmax.f32 %v1384, 0.0
        %v1445 = vmax.f32 %v1389, 0.0
        %v1446 = vmax.f32 %v1392, 0.0
        %v1447 = vmax.f32 %v1397, 0.0
        %v1448 = vmax.f32 %v1400, 0.0
        %v1449 = vmax.f32 %v1405, 0.0
        %v1450 = vmax.f32 %v1408, 0.0
        %v1451 = vmax.f32 %v1413, 0.0
        %v1452 = vmax.f32 %v1416, 0.0
        %v1453 = vmax.f32 %v1421, 0.0
        %v1454 = vmax.f32 %v1424, 0.0
        %v1455 = vmax.f32 %v1429, 0.0
        %v1456 = vmax.f32 %v1432, 0.0
        %v1457 = vmax.f32 %v1437, 0.0
        %v1458 = vmax.f32 %v1440, 0.0
        %v1459 = vpack.c.bf16 %v1444, %v1443
        %v1460 = vpack.c.bf16 %v1446, %v1445
        %v1461 = vpack.c.bf16 %v1448, %v1447
        %v1462 = vpack.c.bf16 %v1450, %v1449
        %v1463 = vpack.c.bf16 %v1452, %v1451
        %v1464 = vpack.c.bf16 %v1454, %v1453
        %v1465 = vpack.c.bf16 %v1456, %v1455
        %v1466 = vpack.c.bf16 %v1458, %v1457
        %s1467 = scalar_lea.vmem %s4, 192
        %v1468 = vld [vmem:[%s1467] sm:$0xf]
        %v1469 = vld [vmem:[%s1467 + $0x4] sm:$0xf]
        %v1470 = vld [vmem:[%s1467 + $0x8] sm:$0xf]
        %v1471 = vld [vmem:[%s1467 + $0xc] sm:$0xf]
        %v1472 = vld [vmem:[%s1467 + $0x10] sm:$0xf]
        %v1473 = vld [vmem:[%s1467 + $0x14] sm:$0xf]
        %v1474 = vld [vmem:[%s1467 + $0x18] sm:$0xf]
        %v1475 = vld [vmem:[%s1467 + $0x1c] sm:$0xf]
        %v1476 = vld [vmem:[%s1467 + $0x20] sm:$0xf]
        %v1477 = vld [vmem:[%s1467 + $0x24] sm:$0xf]
        %v1478 = vld [vmem:[%s1467 + $0x28] sm:$0xf]
        %v1479 = vld [vmem:[%s1467 + $0x2c] sm:$0xf]
        %v1480 = vld [vmem:[%s1467 + $0x30] sm:$0xf]
        %v1481 = vld [vmem:[%s1467 + $0x34] sm:$0xf]
        %v1482 = vld [vmem:[%s1467 + $0x38] sm:$0xf]
        %v1483 = vld [vmem:[%s1467 + $0x3c] sm:$0xf]
        %s1484 = scalar_lea.vmem %s2, 120
        %v1485 = vld [vmem:[%s1484] sm:$0xf]
        %v1486 = vld [vmem:[%s1484 + $0x4] sm:$0xf]
        %v1487 = vld [vmem:[%s1484 + $0x8] sm:$0xf]
        %v1488 = vld [vmem:[%s1484 + $0xc] sm:$0xf]
        %v1489 = vld [vmem:[%s1484 + $0x10] sm:$0xf]
        %v1490 = vld [vmem:[%s1484 + $0x14] sm:$0xf]
        %v1491 = vld [vmem:[%s1484 + $0x18] sm:$0xf]
        %v1492 = vld [vmem:[%s1484 + $0x1c] sm:$0xf]
        %v1493 = vld [vmem:[%s1484 + $0x20] sm:$0xf]
        %v1494 = vld [vmem:[%s1484 + $0x24] sm:$0xf]
        %v1495 = vld [vmem:[%s1484 + $0x28] sm:$0xf]
        %v1496 = vld [vmem:[%s1484 + $0x2c] sm:$0xf]
        %v1497 = vld [vmem:[%s1484 + $0x30] sm:$0xf]
        %v1498 = vld [vmem:[%s1484 + $0x34] sm:$0xf]
        %v1499 = vld [vmem:[%s1484 + $0x38] sm:$0xf]
        %v1500 = vld [vmem:[%s1484 + $0x3c] sm:$0xf]
        %v1501 = vld [vmem:[%s1484 + $0x40] sm:$0xf]
        %v1502 = vld [vmem:[%s1484 + $0x44] sm:$0xf]
        %v1503 = vld [vmem:[%s1484 + $0x48] sm:$0xf]
        %v1504 = vld [vmem:[%s1484 + $0x4c] sm:$0xf]
        %v1505 = vld [vmem:[%s1484 + $0x50] sm:$0xf]
        %v1506 = vld [vmem:[%s1484 + $0x54] sm:$0xf]
        %v1507 = vld [vmem:[%s1484 + $0x58] sm:$0xf]
        %v1508 = vld [vmem:[%s1484 + $0x5c] sm:$0xf]
        %v1509 = vld [vmem:[%s1484 + $0x60] sm:$0xf]
        %v1510 = vld [vmem:[%s1484 + $0x64] sm:$0xf]
        %v1511 = vld [vmem:[%s1484 + $0x68] sm:$0xf]
        %v1512 = vld [vmem:[%s1484 + $0x6c] sm:$0xf]
        %v1513 = vld [vmem:[%s1484 + $0x70] sm:$0xf]
        %v1514 = vld [vmem:[%s1484 + $0x74] sm:$0xf]
        %v1545 = vunpack.c.l.b16 %v1485
        %v1546 = vunpack.c.l.b16 %v1486
        %v1547 = vunpack.c.l.b16 %v1487
        %v1548 = vunpack.c.l.b16 %v1488
        %v1549 = vunpack.c.l.b16 %v1489
        %v1550 = vunpack.c.l.b16 %v1490
        %v1551 = vunpack.c.l.b16 %v1491
        %v1552 = vunpack.c.l.b16 %v1492
        %v1553 = vunpack.c.l.b16 %v1493
        %v1554 = vunpack.c.l.b16 %v1494
        %v1555 = vunpack.c.l.b16 %v1495
        %v1556 = vunpack.c.l.b16 %v1496
        %v1557 = vunpack.c.l.b16 %v1497
        %v1558 = vunpack.c.l.b16 %v1498
        %v1559 = vunpack.c.l.b16 %v1499
        %v1560 = vunpack.c.l.b16 %v1500
        %v1561 = vunpack.c.l.b16 %v1501
        %v1562 = vunpack.c.l.b16 %v1502
        %v1563 = vunpack.c.l.b16 %v1503
        %v1564 = vunpack.c.l.b16 %v1504
        %v1565 = vunpack.c.l.b16 %v1505
        %v1566 = vunpack.c.l.b16 %v1506
        %v1567 = vunpack.c.l.b16 %v1507
        %v1568 = vunpack.c.l.b16 %v1508
        %v1569 = vunpack.c.l.b16 %v1509
        %v1570 = vunpack.c.l.b16 %v1510
        %v1571 = vunpack.c.l.b16 %v1511
        %v1572 = vunpack.c.l.b16 %v1512
        %v1573 = vunpack.c.l.b16 %v1513
        %v1574 = vunpack.c.l.b16 %v1514
        %v1575 = vpack.c.b16 %v1546, %v1545
        %v1576 = vpack.c.b16 %v1548, %v1547
        %v1577 = vpack.c.b16 %v1550, %v1549
        %v1578 = vpack.c.b16 %v1552, %v1551
        %v1579 = vpack.c.b16 %v1554, %v1553
        %v1580 = vpack.c.b16 %v1556, %v1555
        %v1581 = vpack.c.b16 %v1558, %v1557
        %v1582 = vpack.c.b16 %v1560, %v1559
        %v1583 = vpack.c.b16 %v1562, %v1561
        %v1584 = vpack.c.b16 %v1564, %v1563
        %v1585 = vpack.c.b16 %v1566, %v1565
        %v1586 = vpack.c.b16 %v1568, %v1567
        %v1587 = vpack.c.b16 %v1570, %v1569
        %v1588 = vpack.c.b16 %v1572, %v1571
        %v1589 = vpack.c.b16 %v1574, %v1573
        %1605 = vmatprep.subr.bf16.mxu0 0
        %1606 = vmatpush1.bf16.msra.mxu0 %v1575
        %1607 = vmatprep.subr.bf16.mxu0 0
        %1608 = vmatpush1.bf16.msra.mxu0 %v1576
        %1609 = vmatprep.subr.bf16.mxu0 0
        %1610 = vmatpush1.bf16.msra.mxu0 %v1577
        %1611 = vmatprep.subr.bf16.mxu0 0
        %1612 = vmatpush1.bf16.msra.mxu0 %v1578
        %1613 = vmatprep.subr.bf16.mxu0 0
        %1614 = vmatpush1.bf16.msra.mxu0 %v1579
        %1615 = vmatprep.subr.bf16.mxu0 0
        %1616 = vmatpush1.bf16.msra.mxu0 %v1580
        %1617 = vmatprep.subr.bf16.mxu0 0
        %1618 = vmatpush1.bf16.msra.mxu0 %v1581
        %1619 = vmatprep.subr.bf16.mxu0 0
        %1620 = vmatpush1.bf16.msra.mxu0 %v1582
        %1621 = vmatprep.subr.bf16.mxu0 0
        %1622 = vmatpush1.bf16.msra.mxu0 %v1583
        %1623 = vmatprep.subr.bf16.mxu0 0
        %1624 = vmatpush1.bf16.msra.mxu0 %v1584
        %1625 = vmatprep.subr.bf16.mxu0 0
        %1626 = vmatpush1.bf16.msra.mxu0 %v1585
        %1627 = vmatprep.subr.bf16.mxu0 0
        %1628 = vmatpush1.bf16.msra.mxu0 %v1586
        %1629 = vmatprep.subr.bf16.mxu0 0
        %1630 = vmatpush1.bf16.msra.mxu0 %v1587
        %1631 = vmatprep.subr.bf16.mxu0 0
        %1632 = vmatpush1.bf16.msra.mxu0 %v1588
        %1633 = vmatprep.subr.bf16.mxu0 0
        %1634 = vmatpush1.bf16.msra.mxu0 %v1589
        %1635 = vmatprep.subr.bf16.mxu0 0
        %1636 = vmatpush1.bf16.msra.mxu0 0
        %1637 = vmatprep.mubr.bf16.mxu0 %v743
        %1638 = vmatmul.mubr.bf16.gmra.mrb[0].mxu0 %v627
        %v1639 = vpop.f32.mrb[0].mxu0
        %v1640 = vadd.f32 0.0, %v1639
        %v1641 = vpop.f32.mrb[0].mxu0
        %v1642 = vpop.f32.mrb[0].mxu0
        %v1643 = vadd.f32 0.0, %v1642
        %v1644 = vpop.f32.mrb[0].mxu0
        %1645 = vmatprep.mubr.bf16.mxu0 %v746
        %1646 = vmatmul.mubr.bf16.gmra.mrb[0].mxu0 %v629
        %v1647 = vpop.f32.mrb[0].mxu0
        %v1648 = vadd.f32 0.0, %v1647
        %v1649 = vpop.f32.mrb[0].mxu0
        %v1650 = vpop.f32.mrb[0].mxu0
        %v1651 = vadd.f32 0.0, %v1650
        %v1652 = vpop.f32.mrb[0].mxu0
        %1653 = vmatprep.mubr.bf16.mxu0 %v749
        %1654 = vmatmul.mubr.bf16.gmra.mrb[0].mxu0 %v631
        %v1655 = vpop.f32.mrb[0].mxu0
        %v1656 = vadd.f32 0.0, %v1655
        %v1657 = vpop.f32.mrb[0].mxu0
        %v1658 = vpop.f32.mrb[0].mxu0
        %v1659 = vadd.f32 0.0, %v1658
        %v1660 = vpop.f32.mrb[0].mxu0
        %1661 = vmatprep.mubr.bf16.mxu0 %v752
        %1662 = vmatmul.mubr.bf16.gmra.mrb[0].mxu0 %v633
        %v1663 = vpop.f32.mrb[0].mxu0
        %v1664 = vadd.f32 0.0, %v1663
        %v1665 = vpop.f32.mrb[0].mxu0
        %v1666 = vpop.f32.mrb[0].mxu0
        %v1667 = vadd.f32 0.0, %v1666
        %v1668 = vpop.f32.mrb[0].mxu0
        %1669 = vmatprep.mubr.bf16.mxu0 %v755
        %1670 = vmatmul.mubr.bf16.gmra.mrb[0].mxu0 %v635
        %v1671 = vpop.f32.mrb[0].mxu0
        %v1672 = vadd.f32 0.0, %v1671
        %v1673 = vpop.f32.mrb[0].mxu0
        %v1674 = vpop.f32.mrb[0].mxu0
        %v1675 = vadd.f32 0.0, %v1674
        %v1676 = vpop.f32.mrb[0].mxu0
        %1677 = vmatprep.mubr.bf16.mxu0 %v758
        %1678 = vmatmul.mubr.bf16.gmra.mrb[0].mxu0 %v637
        %v1679 = vpop.f32.mrb[0].mxu0
        %v1680 = vadd.f32 0.0, %v1679
        %v1681 = vpop.f32.mrb[0].mxu0
        %v1682 = vpop.f32.mrb[0].mxu0
        %v1683 = vadd.f32 0.0, %v1682
        %v1684 = vpop.f32.mrb[0].mxu0
        %1685 = vmatprep.mubr.bf16.mxu0 %v761
        %1686 = vmatmul.mubr.bf16.gmra.mrb[0].mxu0 %v639
        %v1687 = vpop.f32.mrb[0].mxu0
        %v1688 = vadd.f32 0.0, %v1687
        %v1689 = vpop.f32.mrb[0].mxu0
        %v1690 = vpop.f32.mrb[0].mxu0
        %v1691 = vadd.f32 0.0, %v1690
        %v1692 = vpop.f32.mrb[0].mxu0
        %1693 = vmatprep.mubr.bf16.mxu0 %v764
        %1694 = vmatmul.mubr.bf16.gmra.mrb[0].mxu0 %v641
        %v1695 = vpop.f32.mrb[0].mxu0
        %v1696 = vadd.f32 0.0, %v1695
        %v1697 = vpop.f32.mrb[0].mxu0
        %v1698 = vpop.f32.mrb[0].mxu0
        %v1699 = vadd.f32 0.0, %v1698
        %v1700 = vpop.f32.mrb[0].mxu0
        %1701 = vdwg.mxu0
        %v1718 = vunpack.c.l.b16 %v1468
        %v1719 = vunpack.c.l.b16 %v1469
        %v1720 = vunpack.c.l.b16 %v1470
        %v1721 = vunpack.c.l.b16 %v1471
        %v1722 = vunpack.c.l.b16 %v1472
        %v1723 = vunpack.c.l.b16 %v1473
        %v1724 = vunpack.c.l.b16 %v1474
        %v1725 = vunpack.c.l.b16 %v1475
        %v1726 = vunpack.c.l.b16 %v1476
        %v1727 = vunpack.c.l.b16 %v1477
        %v1728 = vunpack.c.l.b16 %v1478
        %v1729 = vunpack.c.l.b16 %v1479
        %v1730 = vunpack.c.l.b16 %v1480
        %v1731 = vunpack.c.l.b16 %v1481
        %v1732 = vunpack.c.l.b16 %v1482
        %v1733 = vunpack.c.l.b16 %v1483
        %v1734 = vpack.c.b16 %v1719, %v1718
        %v1735 = vpack.c.b16 %v1721, %v1720
        %v1736 = vpack.c.b16 %v1723, %v1722
        %v1737 = vpack.c.b16 %v1725, %v1724
        %v1738 = vpack.c.b16 %v1727, %v1726
        %v1739 = vpack.c.b16 %v1729, %v1728
        %v1740 = vpack.c.b16 %v1731, %v1730
        %v1741 = vpack.c.b16 %v1733, %v1732
        %1750 = vmatprep.subr.bf16.mxu0 0
        %1751 = vmatpush1.bf16.msra.mxu0 %v1734
        %1752 = vmatprep.subr.bf16.mxu0 0
        %1753 = vmatpush1.bf16.msra.mxu0 %v1735
        %1754 = vmatprep.subr.bf16.mxu0 0
        %1755 = vmatpush1.bf16.msra.mxu0 %v1736
        %1756 = vmatprep.subr.bf16.mxu0 0
        %1757 = vmatpush1.bf16.msra.mxu0 %v1737
        %1758 = vmatprep.subr.bf16.mxu0 0
        %1759 = vmatpush1.bf16.msra.mxu0 %v1738
        %1760 = vmatprep.subr.bf16.mxu0 0
        %1761 = vmatpush1.bf16.msra.mxu0 %v1739
        %1762 = vmatprep.subr.bf16.mxu0 0
        %1763 = vmatpush1.bf16.msra.mxu0 %v1740
        %1764 = vmatprep.subr.bf16.mxu0 0
        %1765 = vmatpush1.bf16.msra.mxu0 %v1741
        %1766 = vmatprep.subr.bf16.mxu0 0
        %1767 = vmatpush1.bf16.msra.mxu0 0
        %1768 = vmatprep.subr.bf16.mxu0 0
        %1769 = vmatpush1.bf16.msra.mxu0 0
        %1770 = vmatprep.subr.bf16.mxu0 0
        %1771 = vmatpush1.bf16.msra.mxu0 0
        %1772 = vmatprep.subr.bf16.mxu0 0
        %1773 = vmatpush1.bf16.msra.mxu0 0
        %1774 = vmatprep.subr.bf16.mxu0 0
        %1775 = vmatpush1.bf16.msra.mxu0 0
        %1776 = vmatprep.subr.bf16.mxu0 0
        %1777 = vmatpush1.bf16.msra.mxu0 0
        %1778 = vmatprep.subr.bf16.mxu0 0
        %1779 = vmatpush1.bf16.msra.mxu0 0
        %1780 = vmatprep.subr.bf16.mxu0 0
        %1781 = vmatpush1.bf16.msra.mxu0 0
        %1782 = vmatprep.mubr.bf16.mxu0 0
        %1783 = vmatmul.mubr.bf16.gmra.mrb[0].mxu0 %v1459
        %v1784 = vpop.f32.mrb[0].mxu0
        %v1785 = vadd.f32 %v1640, %v1784
        %v1786 = vpop.f32.mrb[0].mxu0
        %v1787 = vpop.f32.mrb[0].mxu0
        %v1788 = vadd.f32 %v1643, %v1787
        %v1789 = vpop.f32.mrb[0].mxu0
        %1790 = vmatprep.mubr.bf16.mxu0 0
        %1791 = vmatmul.mubr.bf16.gmra.mrb[0].mxu0 %v1460
        %v1792 = vpop.f32.mrb[0].mxu0
        %v1793 = vadd.f32 %v1648, %v1792
        %v1794 = vpop.f32.mrb[0].mxu0
        %v1795 = vpop.f32.mrb[0].mxu0
        %v1796 = vadd.f32 %v1651, %v1795
        %v1797 = vpop.f32.mrb[0].mxu0
        %1798 = vmatprep.mubr.bf16.mxu0 0
        %1799 = vmatmul.mubr.bf16.gmra.mrb[0].mxu0 %v1461
        %v1800 = vpop.f32.mrb[0].mxu0
        %v1801 = vadd.f32 %v1656, %v1800
        %v1802 = vpop.f32.mrb[0].mxu0
        %v1803 = vpop.f32.mrb[0].mxu0
        %v1804 = vadd.f32 %v1659, %v1803
        %v1805 = vpop.f32.mrb[0].mxu0
        %1806 = vmatprep.mubr.bf16.mxu0 0
        %1807 = vmatmul.mubr.bf16.gmra.mrb[0].mxu0 %v1462
        %v1808 = vpop.f32.mrb[0].mxu0
        %v1809 = vadd.f32 %v1664, %v1808
        %v1810 = vpop.f32.mrb[0].mxu0
        %v1811 = vpop.f32.mrb[0].mxu0
        %v1812 = vadd.f32 %v1667, %v1811
        %v1813 = vpop.f32.mrb[0].mxu0
        %1814 = vmatprep.mubr.bf16.mxu0 0
        %1815 = vmatmul.mubr.bf16.gmra.mrb[0].mxu0 %v1463
        %v1816 = vpop.f32.mrb[0].mxu0
        %v1817 = vadd.f32 %v1672, %v1816
        %v1818 = vpop.f32.mrb[0].mxu0
        %v1819 = vpop.f32.mrb[0].mxu0
        %v1820 = vadd.f32 %v1675, %v1819
        %v1821 = vpop.f32.mrb[0].mxu0
        %1822 = vmatprep.mubr.bf16.mxu0 0
        %1823 = vmatmul.mubr.bf16.gmra.mrb[0].mxu0 %v1464
        %v1824 = vpop.f32.mrb[0].mxu0
        %v1825 = vadd.f32 %v1680, %v1824
        %v1826 = vpop.f32.mrb[0].mxu0
        %v1827 = vpop.f32.mrb[0].mxu0
        %v1828 = vadd.f32 %v1683, %v1827
        %v1829 = vpop.f32.mrb[0].mxu0
        %1830 = vmatprep.mubr.bf16.mxu0 0
        %1831 = vmatmul.mubr.bf16.gmra.mrb[0].mxu0 %v1465
        %v1832 = vpop.f32.mrb[0].mxu0
        %v1833 = vadd.f32 %v1688, %v1832
        %v1834 = vpop.f32.mrb[0].mxu0
        %v1835 = vpop.f32.mrb[0].mxu0
        %v1836 = vadd.f32 %v1691, %v1835
        %v1837 = vpop.f32.mrb[0].mxu0
        %1838 = vmatprep.mubr.bf16.mxu0 0
        %1839 = vmatmul.mubr.bf16.gmra.mrb[0].mxu0 %v1466
        %v1840 = vpop.f32.mrb[0].mxu0
        %v1841 = vadd.f32 %v1696, %v1840
        %v1842 = vpop.f32.mrb[0].mxu0
        %v1843 = vpop.f32.mrb[0].mxu0
        %v1844 = vadd.f32 %v1699, %v1843
        %v1845 = vpop.f32.mrb[0].mxu0
        %1846 = vdwg.mxu0
        %s1847 = scalar_lea.vmem [#allocation4], 3
        %v1848 = vld [vmem:[%s1847] sm:$0x1]
        %v1850 = vlaneseq
        %v1851 = vshrl.u32 %v1850, 7
        %v1852 = vsub.s32 0, %v1851
        %v1853 = vrot.slane %v1848, %v1852
        %v1855 = vadd.f32 %v1785, %v1853
        %v1856 = vadd.f32 %v1788, %v1853
        %v1857 = vadd.f32 %v1793, %v1853
        %v1858 = vadd.f32 %v1796, %v1853
        %v1859 = vadd.f32 %v1801, %v1853
        %v1860 = vadd.f32 %v1804, %v1853
        %v1861 = vadd.f32 %v1809, %v1853
        %v1862 = vadd.f32 %v1812, %v1853
        %v1863 = vadd.f32 %v1817, %v1853
        %v1864 = vadd.f32 %v1820, %v1853
        %v1865 = vadd.f32 %v1825, %v1853
        %v1866 = vadd.f32 %v1828, %v1853
        %v1867 = vadd.f32 %v1833, %v1853
        %v1868 = vadd.f32 %v1836, %v1853
        %v1869 = vadd.f32 %v1841, %v1853
        %v1870 = vadd.f32 %v1844, %v1853
        %v1871 = vmax.f32 %v1855, 0.0
        %v1872 = vmax.f32 %v1856, 0.0
        %v1873 = vmax.f32 %v1857, 0.0
        %v1874 = vmax.f32 %v1858, 0.0
        %v1875 = vmax.f32 %v1859, 0.0
        %v1876 = vmax.f32 %v1860, 0.0
        %v1877 = vmax.f32 %v1861, 0.0
        %v1878 = vmax.f32 %v1862, 0.0
        %v1879 = vmax.f32 %v1863, 0.0
        %v1880 = vmax.f32 %v1864, 0.0
        %v1881 = vmax.f32 %v1865, 0.0
        %v1882 = vmax.f32 %v1866, 0.0
        %v1883 = vmax.f32 %v1867, 0.0
        %v1884 = vmax.f32 %v1868, 0.0
        %v1885 = vmax.f32 %v1869, 0.0
        %v1886 = vmax.f32 %v1870, 0.0
        %v1887 = vpack.c.bf16 %v1872, %v1871
        %v1888 = vpack.c.bf16 %v1874, %v1873
        %v1889 = vpack.c.bf16 %v1876, %v1875
        %v1890 = vpack.c.bf16 %v1878, %v1877
        %v1891 = vpack.c.bf16 %v1880, %v1879
        %v1892 = vpack.c.bf16 %v1882, %v1881
        %v1893 = vpack.c.bf16 %v1884, %v1883
        %v1894 = vpack.c.bf16 %v1886, %v1885
        %s1895 = scalar_lea.vmem %s4, 256
        %v1896 = vld [vmem:[%s1895] sm:$0xf]
        %v1897 = vld [vmem:[%s1895 + $0x4] sm:$0xf]
        %v1898 = vld [vmem:[%s1895 + $0x8] sm:$0xf]
        %v1899 = vld [vmem:[%s1895 + $0xc] sm:$0xf]
        %v1900 = vld [vmem:[%s1895 + $0x10] sm:$0xf]
        %v1901 = vld [vmem:[%s1895 + $0x14] sm:$0xf]
        %v1902 = vld [vmem:[%s1895 + $0x18] sm:$0xf]
        %v1903 = vld [vmem:[%s1895 + $0x1c] sm:$0xf]
        %v1904 = vld [vmem:[%s1895 + $0x20] sm:$0xf]
        %v1905 = vld [vmem:[%s1895 + $0x24] sm:$0xf]
        %v1906 = vld [vmem:[%s1895 + $0x28] sm:$0xf]
        %v1907 = vld [vmem:[%s1895 + $0x2c] sm:$0xf]
        %v1908 = vld [vmem:[%s1895 + $0x30] sm:$0xf]
        %v1909 = vld [vmem:[%s1895 + $0x34] sm:$0xf]
        %v1910 = vld [vmem:[%s1895 + $0x38] sm:$0xf]
        %v1911 = vld [vmem:[%s1895 + $0x3c] sm:$0xf]
        %s1912 = scalar_lea.vmem [#allocation4], 4
        %v1913 = vld [vmem:[%s1912] sm:$0x1]
        %v1915 = vlaneseq
        %v1916 = vshrl.u32 %v1915, 7
        %v1917 = vsub.s32 0, %v1916
        %v1918 = vrot.slane %v1913, %v1917
        %v1936 = vunpack.c.l.b16 %v1896
        %v1937 = vunpack.c.l.b16 %v1897
        %v1938 = vunpack.c.l.b16 %v1898
        %v1939 = vunpack.c.l.b16 %v1899
        %v1940 = vunpack.c.l.b16 %v1900
        %v1941 = vunpack.c.l.b16 %v1901
        %v1942 = vunpack.c.l.b16 %v1902
        %v1943 = vunpack.c.l.b16 %v1903
        %v1944 = vunpack.c.l.b16 %v1904
        %v1945 = vunpack.c.l.b16 %v1905
        %v1946 = vunpack.c.l.b16 %v1906
        %v1947 = vunpack.c.l.b16 %v1907
        %v1948 = vunpack.c.l.b16 %v1908
        %v1949 = vunpack.c.l.b16 %v1909
        %v1950 = vunpack.c.l.b16 %v1910
        %v1951 = vunpack.c.l.b16 %v1911
        %v1952 = vpack.c.b16 %v1937, %v1936
        %v1953 = vpack.c.b16 %v1939, %v1938
        %v1954 = vpack.c.b16 %v1941, %v1940
        %v1955 = vpack.c.b16 %v1943, %v1942
        %v1956 = vpack.c.b16 %v1945, %v1944
        %v1957 = vpack.c.b16 %v1947, %v1946
        %v1958 = vpack.c.b16 %v1949, %v1948
        %v1959 = vpack.c.b16 %v1951, %v1950
        %1968 = vmatprep.subr.bf16.mxu0 0
        %1969 = vmatpush1.bf16.msra.mxu0 %v1952
        %1970 = vmatprep.subr.bf16.mxu0 0
        %1971 = vmatpush1.bf16.msra.mxu0 %v1953
        %1972 = vmatprep.subr.bf16.mxu0 0
        %1973 = vmatpush1.bf16.msra.mxu0 %v1954
        %1974 = vmatprep.subr.bf16.mxu0 0
        %1975 = vmatpush1.bf16.msra.mxu0 %v1955
        %1976 = vmatprep.subr.bf16.mxu0 0
        %1977 = vmatpush1.bf16.msra.mxu0 %v1956
        %1978 = vmatprep.subr.bf16.mxu0 0
        %1979 = vmatpush1.bf16.msra.mxu0 %v1957
        %1980 = vmatprep.subr.bf16.mxu0 0
        %1981 = vmatpush1.bf16.msra.mxu0 %v1958
        %1982 = vmatprep.subr.bf16.mxu0 0
        %1983 = vmatpush1.bf16.msra.mxu0 %v1959
        %1984 = vmatprep.subr.bf16.mxu0 0
        %1985 = vmatpush1.bf16.msra.mxu0 0
        %1986 = vmatprep.subr.bf16.mxu0 0
        %1987 = vmatpush1.bf16.msra.mxu0 0
        %1988 = vmatprep.subr.bf16.mxu0 0
        %1989 = vmatpush1.bf16.msra.mxu0 0
        %1990 = vmatprep.subr.bf16.mxu0 0
        %1991 = vmatpush1.bf16.msra.mxu0 0
        %1992 = vmatprep.subr.bf16.mxu0 0
        %1993 = vmatpush1.bf16.msra.mxu0 0
        %1994 = vmatprep.subr.bf16.mxu0 0
        %1995 = vmatpush1.bf16.msra.mxu0 0
        %1996 = vmatprep.subr.bf16.mxu0 0
        %1997 = vmatpush1.bf16.msra.mxu0 0
        %1998 = vmatprep.subr.bf16.mxu0 0
        %1999 = vmatpush1.bf16.msra.mxu0 0
        %2000 = vmatprep.mubr.bf16.mxu0 0
        %2001 = vmatmul.mubr.bf16.gmra.mrb[0].mxu0 %v1887
        %v2002 = vpop.f32.mrb[0].mxu0
        %v2003 = vadd.f32 %v1918, %v2002
        %v2004 = vpop.f32.mrb[0].mxu0
        %v2005 = vpop.f32.mrb[0].mxu0
        %v2006 = vadd.f32 %v1918, %v2005
        %v2007 = vpop.f32.mrb[0].mxu0
        %2008 = vmatprep.mubr.bf16.mxu0 0
        %2009 = vmatmul.mubr.bf16.gmra.mrb[0].mxu0 %v1888
        %v2010 = vpop.f32.mrb[0].mxu0
        %v2011 = vadd.f32 %v1918, %v2010
        %v2012 = vpop.f32.mrb[0].mxu0
        %v2013 = vpop.f32.mrb[0].mxu0
        %v2014 = vadd.f32 %v1918, %v2013
        %v2015 = vpop.f32.mrb[0].mxu0
        %2016 = vmatprep.mubr.bf16.mxu0 0
        %2017 = vmatmul.mubr.bf16.gmra.mrb[0].mxu0 %v1889
        %v2018 = vpop.f32.mrb[0].mxu0
        %v2019 = vadd.f32 %v1918, %v2018
        %v2020 = vpop.f32.mrb[0].mxu0
        %v2021 = vpop.f32.mrb[0].mxu0
        %v2022 = vadd.f32 %v1918, %v2021
        %v2023 = vpop.f32.mrb[0].mxu0
        %2024 = vmatprep.mubr.bf16.mxu0 0
        %2025 = vmatmul.mubr.bf16.gmra.mrb[0].mxu0 %v1890
        %v2026 = vpop.f32.mrb[0].mxu0
        %v2027 = vadd.f32 %v1918, %v2026
        %v2028 = vpop.f32.mrb[0].mxu0
        %v2029 = vpop.f32.mrb[0].mxu0
        %v2030 = vadd.f32 %v1918, %v2029
        %v2031 = vpop.f32.mrb[0].mxu0
        %2032 = vmatprep.mubr.bf16.mxu0 0
        %2033 = vmatmul.mubr.bf16.gmra.mrb[0].mxu0 %v1891
        %v2034 = vpop.f32.mrb[0].mxu0
        %v2035 = vadd.f32 %v1918, %v2034
        %v2036 = vpop.f32.mrb[0].mxu0
        %v2037 = vpop.f32.mrb[0].mxu0
        %v2038 = vadd.f32 %v1918, %v2037
        %v2039 = vpop.f32.mrb[0].mxu0
        %2040 = vmatprep.mubr.bf16.mxu0 0
        %2041 = vmatmul.mubr.bf16.gmra.mrb[0].mxu0 %v1892
        %v2042 = vpop.f32.mrb[0].mxu0
        %v2043 = vadd.f32 %v1918, %v2042
        %v2044 = vpop.f32.mrb[0].mxu0
        %v2045 = vpop.f32.mrb[0].mxu0
        %v2046 = vadd.f32 %v1918, %v2045
        %v2047 = vpop.f32.mrb[0].mxu0
        %2048 = vmatprep.mubr.bf16.mxu0 0
        %2049 = vmatmul.mubr.bf16.gmra.mrb[0].mxu0 %v1893
        %v2050 = vpop.f32.mrb[0].mxu0
        %v2051 = vadd.f32 %v1918, %v2050
        %v2052 = vpop.f32.mrb[0].mxu0
        %v2053 = vpop.f32.mrb[0].mxu0
        %v2054 = vadd.f32 %v1918, %v2053
        %v2055 = vpop.f32.mrb[0].mxu0
        %2056 = vmatprep.mubr.bf16.mxu0 0
        %2057 = vmatmul.mubr.bf16.gmra.mrb[0].mxu0 %v1894
        %v2058 = vpop.f32.mrb[0].mxu0
        %v2059 = vadd.f32 %v1918, %v2058
        %v2060 = vpop.f32.mrb[0].mxu0
        %v2061 = vpop.f32.mrb[0].mxu0
        %v2062 = vadd.f32 %v1918, %v2061
        %v2063 = vpop.f32.mrb[0].mxu0
        %2064 = vdwg.mxu0
        %v2065 = vmax.f32 %v2003, 0.0
        %v2066 = vmax.f32 %v2006, 0.0
        %v2067 = vmax.f32 %v2011, 0.0
        %v2068 = vmax.f32 %v2014, 0.0
        %v2069 = vmax.f32 %v2019, 0.0
        %v2070 = vmax.f32 %v2022, 0.0
        %v2071 = vmax.f32 %v2027, 0.0
        %v2072 = vmax.f32 %v2030, 0.0
        %v2073 = vmax.f32 %v2035, 0.0
        %v2074 = vmax.f32 %v2038, 0.0
        %v2075 = vmax.f32 %v2043, 0.0
        %v2076 = vmax.f32 %v2046, 0.0
        %v2077 = vmax.f32 %v2051, 0.0
        %v2078 = vmax.f32 %v2054, 0.0
        %v2079 = vmax.f32 %v2059, 0.0
        %v2080 = vmax.f32 %v2062, 0.0
        %v2081 = vpack.c.bf16 %v2066, %v2065
        %v2082 = vpack.c.bf16 %v2068, %v2067
        %v2083 = vpack.c.bf16 %v2070, %v2069
        %v2084 = vpack.c.bf16 %v2072, %v2071
        %v2085 = vpack.c.bf16 %v2074, %v2073
        %v2086 = vpack.c.bf16 %v2076, %v2075
        %v2087 = vpack.c.bf16 %v2078, %v2077
        %v2088 = vpack.c.bf16 %v2080, %v2079
        %s2089 = scalar_lea.vmem %s4, 320
        %v2090 = vld [vmem:[%s2089] sm:$0xf]
        %v2091 = vld [vmem:[%s2089 + $0x4] sm:$0xf]
        %v2092 = vld [vmem:[%s2089 + $0x8] sm:$0xf]
        %v2093 = vld [vmem:[%s2089 + $0xc] sm:$0xf]
        %v2094 = vld [vmem:[%s2089 + $0x10] sm:$0xf]
        %v2095 = vld [vmem:[%s2089 + $0x14] sm:$0xf]
        %v2096 = vld [vmem:[%s2089 + $0x18] sm:$0xf]
        %v2097 = vld [vmem:[%s2089 + $0x1c] sm:$0xf]
        %v2098 = vld [vmem:[%s2089 + $0x20] sm:$0xf]
        %v2099 = vld [vmem:[%s2089 + $0x24] sm:$0xf]
        %v2100 = vld [vmem:[%s2089 + $0x28] sm:$0xf]
        %v2101 = vld [vmem:[%s2089 + $0x2c] sm:$0xf]
        %v2102 = vld [vmem:[%s2089 + $0x30] sm:$0xf]
        %v2103 = vld [vmem:[%s2089 + $0x34] sm:$0xf]
        %v2104 = vld [vmem:[%s2089 + $0x38] sm:$0xf]
        %v2105 = vld [vmem:[%s2089 + $0x3c] sm:$0xf]
        %s2106 = scalar_lea.vmem [#allocation4], 5
        %v2107 = vld [vmem:[%s2106] sm:$0x1]
        %v2109 = vlaneseq
        %v2110 = vshrl.u32 %v2109, 7
        %v2111 = vsub.s32 0, %v2110
        %v2112 = vrot.slane %v2107, %v2111
        %v2130 = vunpack.c.l.b16 %v2090
        %v2131 = vunpack.c.l.b16 %v2091
        %v2132 = vunpack.c.l.b16 %v2092
        %v2133 = vunpack.c.l.b16 %v2093
        %v2134 = vunpack.c.l.b16 %v2094
        %v2135 = vunpack.c.l.b16 %v2095
        %v2136 = vunpack.c.l.b16 %v2096
        %v2137 = vunpack.c.l.b16 %v2097
        %v2138 = vunpack.c.l.b16 %v2098
        %v2139 = vunpack.c.l.b16 %v2099
        %v2140 = vunpack.c.l.b16 %v2100
        %v2141 = vunpack.c.l.b16 %v2101
        %v2142 = vunpack.c.l.b16 %v2102
        %v2143 = vunpack.c.l.b16 %v2103
        %v2144 = vunpack.c.l.b16 %v2104
        %v2145 = vunpack.c.l.b16 %v2105
        %v2146 = vpack.c.b16 %v2131, %v2130
        %v2147 = vpack.c.b16 %v2133, %v2132
        %v2148 = vpack.c.b16 %v2135, %v2134
        %v2149 = vpack.c.b16 %v2137, %v2136
        %v2150 = vpack.c.b16 %v2139, %v2138
        %v2151 = vpack.c.b16 %v2141, %v2140
        %v2152 = vpack.c.b16 %v2143, %v2142
        %v2153 = vpack.c.b16 %v2145, %v2144
        %2162 = vmatprep.subr.bf16.mxu0 0
        %2163 = vmatpush1.bf16.msra.mxu0 %v2146
        %2164 = vmatprep.subr.bf16.mxu0 0
        %2165 = vmatpush1.bf16.msra.mxu0 %v2147
        %2166 = vmatprep.subr.bf16.mxu0 0
        %2167 = vmatpush1.bf16.msra.mxu0 %v2148
        %2168 = vmatprep.subr.bf16.mxu0 0
        %2169 = vmatpush1.bf16.msra.mxu0 %v2149
        %2170 = vmatprep.subr.bf16.mxu0 0
        %2171 = vmatpush1.bf16.msra.mxu0 %v2150
        %2172 = vmatprep.subr.bf16.mxu0 0
        %2173 = vmatpush1.bf16.msra.mxu0 %v2151
        %2174 = vmatprep.subr.bf16.mxu0 0
        %2175 = vmatpush1.bf16.msra.mxu0 %v2152
        %2176 = vmatprep.subr.bf16.mxu0 0
        %2177 = vmatpush1.bf16.msra.mxu0 %v2153
        %2178 = vmatprep.subr.bf16.mxu0 0
        %2179 = vmatpush1.bf16.msra.mxu0 0
        %2180 = vmatprep.subr.bf16.mxu0 0
        %2181 = vmatpush1.bf16.msra.mxu0 0
        %2182 = vmatprep.subr.bf16.mxu0 0
        %2183 = vmatpush1.bf16.msra.mxu0 0
        %2184 = vmatprep.subr.bf16.mxu0 0
        %2185 = vmatpush1.bf16.msra.mxu0 0
        %2186 = vmatprep.subr.bf16.mxu0 0
        %2187 = vmatpush1.bf16.msra.mxu0 0
        %2188 = vmatprep.subr.bf16.mxu0 0
        %2189 = vmatpush1.bf16.msra.mxu0 0
        %2190 = vmatprep.subr.bf16.mxu0 0
        %2191 = vmatpush1.bf16.msra.mxu0 0
        %2192 = vmatprep.subr.bf16.mxu0 0
        %2193 = vmatpush1.bf16.msra.mxu0 0
        %2194 = vmatprep.mubr.bf16.mxu0 0
        %2195 = vmatmul.mubr.bf16.gmra.mrb[0].mxu0 %v2081
        %v2196 = vpop.f32.mrb[0].mxu0
        %v2197 = vadd.f32 %v2112, %v2196
        %v2198 = vpop.f32.mrb[0].mxu0
        %v2199 = vpop.f32.mrb[0].mxu0
        %v2200 = vadd.f32 %v2112, %v2199
        %v2201 = vpop.f32.mrb[0].mxu0
        %2202 = vmatprep.mubr.bf16.mxu0 0
        %2203 = vmatmul.mubr.bf16.gmra.mrb[0].mxu0 %v2082
        %v2204 = vpop.f32.mrb[0].mxu0
        %v2205 = vadd.f32 %v2112, %v2204
        %v2206 = vpop.f32.mrb[0].mxu0
        %v2207 = vpop.f32.mrb[0].mxu0
        %v2208 = vadd.f32 %v2112, %v2207
        %v2209 = vpop.f32.mrb[0].mxu0
        %2210 = vmatprep.mubr.bf16.mxu0 0
        %2211 = vmatmul.mubr.bf16.gmra.mrb[0].mxu0 %v2083
        %v2212 = vpop.f32.mrb[0].mxu0
        %v2213 = vadd.f32 %v2112, %v2212
        %v2214 = vpop.f32.mrb[0].mxu0
        %v2215 = vpop.f32.mrb[0].mxu0
        %v2216 = vadd.f32 %v2112, %v2215
        %v2217 = vpop.f32.mrb[0].mxu0
        %2218 = vmatprep.mubr.bf16.mxu0 0
        %2219 = vmatmul.mubr.bf16.gmra.mrb[0].mxu0 %v2084
        %v2220 = vpop.f32.mrb[0].mxu0
        %v2221 = vadd.f32 %v2112, %v2220
        %v2222 = vpop.f32.mrb[0].mxu0
        %v2223 = vpop.f32.mrb[0].mxu0
        %v2224 = vadd.f32 %v2112, %v2223
        %v2225 = vpop.f32.mrb[0].mxu0
        %2226 = vmatprep.mubr.bf16.mxu0 0
        %2227 = vmatmul.mubr.bf16.gmra.mrb[0].mxu0 %v2085
        %v2228 = vpop.f32.mrb[0].mxu0
        %v2229 = vadd.f32 %v2112, %v2228
        %v2230 = vpop.f32.mrb[0].mxu0
        %v2231 = vpop.f32.mrb[0].mxu0
        %v2232 = vadd.f32 %v2112, %v2231
        %v2233 = vpop.f32.mrb[0].mxu0
        %2234 = vmatprep.mubr.bf16.mxu0 0
        %2235 = vmatmul.mubr.bf16.gmra.mrb[0].mxu0 %v2086
        %v2236 = vpop.f32.mrb[0].mxu0
        %v2237 = vadd.f32 %v2112, %v2236
        %v2238 = vpop.f32.mrb[0].mxu0
        %v2239 = vpop.f32.mrb[0].mxu0
        %v2240 = vadd.f32 %v2112, %v2239
        %v2241 = vpop.f32.mrb[0].mxu0
        %2242 = vmatprep.mubr.bf16.mxu0 0
        %2243 = vmatmul.mubr.bf16.gmra.mrb[0].mxu0 %v2087
        %v2244 = vpop.f32.mrb[0].mxu0
        %v2245 = vadd.f32 %v2112, %v2244
        %v2246 = vpop.f32.mrb[0].mxu0
        %v2247 = vpop.f32.mrb[0].mxu0
        %v2248 = vadd.f32 %v2112, %v2247
        %v2249 = vpop.f32.mrb[0].mxu0
        %2250 = vmatprep.mubr.bf16.mxu0 0
        %2251 = vmatmul.mubr.bf16.gmra.mrb[0].mxu0 %v2088
        %v2252 = vpop.f32.mrb[0].mxu0
        %v2253 = vadd.f32 %v2112, %v2252
        %v2254 = vpop.f32.mrb[0].mxu0
        %v2255 = vpop.f32.mrb[0].mxu0
        %v2256 = vadd.f32 %v2112, %v2255
        %v2257 = vpop.f32.mrb[0].mxu0
        %2258 = vdwg.mxu0
        %v2259 = vmax.f32 %v2197, 0.0
        %v2260 = vmax.f32 %v2200, 0.0
        %v2261 = vmax.f32 %v2205, 0.0
        %v2262 = vmax.f32 %v2208, 0.0
        %v2263 = vmax.f32 %v2213, 0.0
        %v2264 = vmax.f32 %v2216, 0.0
        %v2265 = vmax.f32 %v2221, 0.0
        %v2266 = vmax.f32 %v2224, 0.0
        %v2267 = vmax.f32 %v2229, 0.0
        %v2268 = vmax.f32 %v2232, 0.0
        %v2269 = vmax.f32 %v2237, 0.0
        %v2270 = vmax.f32 %v2240, 0.0
        %v2271 = vmax.f32 %v2245, 0.0
        %v2272 = vmax.f32 %v2248, 0.0
        %v2273 = vmax.f32 %v2253, 0.0
        %v2274 = vmax.f32 %v2256, 0.0
        %v2275 = vpack.c.bf16 %v2260, %v2259
        %v2276 = vpack.c.bf16 %v2262, %v2261
        %v2277 = vpack.c.bf16 %v2264, %v2263
        %v2278 = vpack.c.bf16 %v2266, %v2265
        %v2279 = vpack.c.bf16 %v2268, %v2267
        %v2280 = vpack.c.bf16 %v2270, %v2269
        %v2281 = vpack.c.bf16 %v2272, %v2271
        %v2282 = vpack.c.bf16 %v2274, %v2273
        %s2283 = scalar_lea.vmem %s4, 384
        %v2284 = vld [vmem:[%s2283] sm:$0xf]
        %v2285 = vld [vmem:[%s2283 + $0x4] sm:$0xf]
        %v2286 = vld [vmem:[%s2283 + $0x8] sm:$0xf]
        %v2287 = vld [vmem:[%s2283 + $0xc] sm:$0xf]
        %v2288 = vld [vmem:[%s2283 + $0x10] sm:$0xf]
        %v2289 = vld [vmem:[%s2283 + $0x14] sm:$0xf]
        %v2290 = vld [vmem:[%s2283 + $0x18] sm:$0xf]
        %v2291 = vld [vmem:[%s2283 + $0x1c] sm:$0xf]
        %v2292 = vld [vmem:[%s2283 + $0x20] sm:$0xf]
        %v2293 = vld [vmem:[%s2283 + $0x24] sm:$0xf]
        %v2294 = vld [vmem:[%s2283 + $0x28] sm:$0xf]
        %v2295 = vld [vmem:[%s2283 + $0x2c] sm:$0xf]
        %v2296 = vld [vmem:[%s2283 + $0x30] sm:$0xf]
        %v2297 = vld [vmem:[%s2283 + $0x34] sm:$0xf]
        %v2298 = vld [vmem:[%s2283 + $0x38] sm:$0xf]
        %v2299 = vld [vmem:[%s2283 + $0x3c] sm:$0xf]
        %s2300 = scalar_lea.vmem [#allocation4], 6
        %v2301 = vld [vmem:[%s2300] sm:$0x1]
        %v2303 = vlaneseq
        %v2304 = vshrl.u32 %v2303, 7
        %v2305 = vsub.s32 0, %v2304
        %v2306 = vrot.slane %v2301, %v2305
        %v2324 = vunpack.c.l.b16 %v2284
        %v2325 = vunpack.c.l.b16 %v2285
        %v2326 = vunpack.c.l.b16 %v2286
        %v2327 = vunpack.c.l.b16 %v2287
        %v2328 = vunpack.c.l.b16 %v2288
        %v2329 = vunpack.c.l.b16 %v2289
        %v2330 = vunpack.c.l.b16 %v2290
        %v2331 = vunpack.c.l.b16 %v2291
        %v2332 = vunpack.c.l.b16 %v2292
        %v2333 = vunpack.c.l.b16 %v2293
        %v2334 = vunpack.c.l.b16 %v2294
        %v2335 = vunpack.c.l.b16 %v2295
        %v2336 = vunpack.c.l.b16 %v2296
        %v2337 = vunpack.c.l.b16 %v2297
        %v2338 = vunpack.c.l.b16 %v2298
        %v2339 = vunpack.c.l.b16 %v2299
        %v2340 = vpack.c.b16 %v2325, %v2324
        %v2341 = vpack.c.b16 %v2327, %v2326
        %v2342 = vpack.c.b16 %v2329, %v2328
        %v2343 = vpack.c.b16 %v2331, %v2330
        %v2344 = vpack.c.b16 %v2333, %v2332
        %v2345 = vpack.c.b16 %v2335, %v2334
        %v2346 = vpack.c.b16 %v2337, %v2336
        %v2347 = vpack.c.b16 %v2339, %v2338
        %2356 = vmatprep.subr.bf16.mxu0 0
        %2357 = vmatpush1.bf16.msra.mxu0 %v2340
        %2358 = vmatprep.subr.bf16.mxu0 0
        %2359 = vmatpush1.bf16.msra.mxu0 %v2341
        %2360 = vmatprep.subr.bf16.mxu0 0
        %2361 = vmatpush1.bf16.msra.mxu0 %v2342
        %2362 = vmatprep.subr.bf16.mxu0 0
        %2363 = vmatpush1.bf16.msra.mxu0 %v2343
        %2364 = vmatprep.subr.bf16.mxu0 0
        %2365 = vmatpush1.bf16.msra.mxu0 %v2344
        %2366 = vmatprep.subr.bf16.mxu0 0
        %2367 = vmatpush1.bf16.msra.mxu0 %v2345
        %2368 = vmatprep.subr.bf16.mxu0 0
        %2369 = vmatpush1.bf16.msra.mxu0 %v2346
        %2370 = vmatprep.subr.bf16.mxu0 0
        %2371 = vmatpush1.bf16.msra.mxu0 %v2347
        %2372 = vmatprep.subr.bf16.mxu0 0
        %2373 = vmatpush1.bf16.msra.mxu0 0
        %2374 = vmatprep.subr.bf16.mxu0 0
        %2375 = vmatpush1.bf16.msra.mxu0 0
        %2376 = vmatprep.subr.bf16.mxu0 0
        %2377 = vmatpush1.bf16.msra.mxu0 0
        %2378 = vmatprep.subr.bf16.mxu0 0
        %2379 = vmatpush1.bf16.msra.mxu0 0
        %2380 = vmatprep.subr.bf16.mxu0 0
        %2381 = vmatpush1.bf16.msra.mxu0 0
        %2382 = vmatprep.subr.bf16.mxu0 0
        %2383 = vmatpush1.bf16.msra.mxu0 0
        %2384 = vmatprep.subr.bf16.mxu0 0
        %2385 = vmatpush1.bf16.msra.mxu0 0
        %2386 = vmatprep.subr.bf16.mxu0 0
        %2387 = vmatpush1.bf16.msra.mxu0 0
        %2388 = vmatprep.mubr.bf16.mxu0 0
        %2389 = vmatmul.mubr.bf16.gmra.mrb[0].mxu0 %v2275
        %v2390 = vpop.f32.mrb[0].mxu0
        %v2391 = vadd.f32 %v2306, %v2390
        %v2392 = vpop.f32.mrb[0].mxu0
        %v2393 = vpop.f32.mrb[0].mxu0
        %v2394 = vadd.f32 %v2306, %v2393
        %v2395 = vpop.f32.mrb[0].mxu0
        %2396 = vmatprep.mubr.bf16.mxu0 0
        %2397 = vmatmul.mubr.bf16.gmra.mrb[0].mxu0 %v2276
        %v2398 = vpop.f32.mrb[0].mxu0
        %v2399 = vadd.f32 %v2306, %v2398
        %v2400 = vpop.f32.mrb[0].mxu0
        %v2401 = vpop.f32.mrb[0].mxu0
        %v2402 = vadd.f32 %v2306, %v2401
        %v2403 = vpop.f32.mrb[0].mxu0
        %2404 = vmatprep.mubr.bf16.mxu0 0
        %2405 = vmatmul.mubr.bf16.gmra.mrb[0].mxu0 %v2277
        %v2406 = vpop.f32.mrb[0].mxu0
        %v2407 = vadd.f32 %v2306, %v2406
        %v2408 = vpop.f32.mrb[0].mxu0
        %v2409 = vpop.f32.mrb[0].mxu0
        %v2410 = vadd.f32 %v2306, %v2409
        %v2411 = vpop.f32.mrb[0].mxu0
        %2412 = vmatprep.mubr.bf16.mxu0 0
        %2413 = vmatmul.mubr.bf16.gmra.mrb[0].mxu0 %v2278
        %v2414 = vpop.f32.mrb[0].mxu0
        %v2415 = vadd.f32 %v2306, %v2414
        %v2416 = vpop.f32.mrb[0].mxu0
        %v2417 = vpop.f32.mrb[0].mxu0
        %v2418 = vadd.f32 %v2306, %v2417
        %v2419 = vpop.f32.mrb[0].mxu0
        %2420 = vmatprep.mubr.bf16.mxu0 0
        %2421 = vmatmul.mubr.bf16.gmra.mrb[0].mxu0 %v2279
        %v2422 = vpop.f32.mrb[0].mxu0
        %v2423 = vadd.f32 %v2306, %v2422
        %v2424 = vpop.f32.mrb[0].mxu0
        %v2425 = vpop.f32.mrb[0].mxu0
        %v2426 = vadd.f32 %v2306, %v2425
        %v2427 = vpop.f32.mrb[0].mxu0
        %2428 = vmatprep.mubr.bf16.mxu0 0
        %2429 = vmatmul.mubr.bf16.gmra.mrb[0].mxu0 %v2280
        %v2430 = vpop.f32.mrb[0].mxu0
        %v2431 = vadd.f32 %v2306, %v2430
        %v2432 = vpop.f32.mrb[0].mxu0
        %v2433 = vpop.f32.mrb[0].mxu0
        %v2434 = vadd.f32 %v2306, %v2433
        %v2435 = vpop.f32.mrb[0].mxu0
        %2436 = vmatprep.mubr.bf16.mxu0 0
        %2437 = vmatmul.mubr.bf16.gmra.mrb[0].mxu0 %v2281
        %v2438 = vpop.f32.mrb[0].mxu0
        %v2439 = vadd.f32 %v2306, %v2438
        %v2440 = vpop.f32.mrb[0].mxu0
        %v2441 = vpop.f32.mrb[0].mxu0
        %v2442 = vadd.f32 %v2306, %v2441
        %v2443 = vpop.f32.mrb[0].mxu0
        %2444 = vmatprep.mubr.bf16.mxu0 0
        %2445 = vmatmul.mubr.bf16.gmra.mrb[0].mxu0 %v2282
        %v2446 = vpop.f32.mrb[0].mxu0
        %v2447 = vadd.f32 %v2306, %v2446
        %v2448 = vpop.f32.mrb[0].mxu0
        %v2449 = vpop.f32.mrb[0].mxu0
        %v2450 = vadd.f32 %v2306, %v2449
        %v2451 = vpop.f32.mrb[0].mxu0
        %2452 = vdwg.mxu0
        %v2453 = vmax.f32 %v2391, 0.0
        %v2454 = vmax.f32 %v2394, 0.0
        %v2455 = vmax.f32 %v2399, 0.0
        %v2456 = vmax.f32 %v2402, 0.0
        %v2457 = vmax.f32 %v2407, 0.0
        %v2458 = vmax.f32 %v2410, 0.0
        %v2459 = vmax.f32 %v2415, 0.0
        %v2460 = vmax.f32 %v2418, 0.0
        %v2461 = vmax.f32 %v2423, 0.0
        %v2462 = vmax.f32 %v2426, 0.0
        %v2463 = vmax.f32 %v2431, 0.0
        %v2464 = vmax.f32 %v2434, 0.0
        %v2465 = vmax.f32 %v2439, 0.0
        %v2466 = vmax.f32 %v2442, 0.0
        %v2467 = vmax.f32 %v2447, 0.0
        %v2468 = vmax.f32 %v2450, 0.0
        %v2469 = vpack.c.bf16 %v2454, %v2453
        %v2470 = vpack.c.bf16 %v2456, %v2455
        %v2471 = vpack.c.bf16 %v2458, %v2457
        %v2472 = vpack.c.bf16 %v2460, %v2459
        %v2473 = vpack.c.bf16 %v2462, %v2461
        %v2474 = vpack.c.bf16 %v2464, %v2463
        %v2475 = vpack.c.bf16 %v2466, %v2465
        %v2476 = vpack.c.bf16 %v2468, %v2467
        %v2477 = vld [vmem:[%s6] sm:$0xff]
        %v2478 = vld [vmem:[%s6 + $0x8] sm:$0xff]
        %v2479 = vld [vmem:[%s6 + $0x10] sm:$0xff]
        %v2480 = vld [vmem:[%s6 + $0x18] sm:$0xff]
        %v2481 = vld [vmem:[%s6 + $0x20] sm:$0xff]
        %v2482 = vld [vmem:[%s6 + $0x28] sm:$0xff]
        %v2483 = vld [vmem:[%s6 + $0x30] sm:$0xff]
        %v2484 = vld [vmem:[%s6 + $0x38] sm:$0xff]
        %v2485 = vld [vmem:[%s6 + $0x40] sm:$0xff]
        %v2486 = vld [vmem:[%s6 + $0x48] sm:$0xff]
        %v2487 = vld [vmem:[%s6 + $0x50] sm:$0xff]
        %v2488 = vld [vmem:[%s6 + $0x58] sm:$0xff]
        %v2489 = vld [vmem:[%s6 + $0x60] sm:$0xff]
        %v2490 = vld [vmem:[%s6 + $0x68] sm:$0xff]
        %v2491 = vld [vmem:[%s6 + $0x70] sm:$0xff]
        %v2492 = vld [vmem:[%s6 + $0x78] sm:$0xff]
        %v2493 = vld [vmem:[%s7] sm:$0x3]
        %v2495 = vlaneseq
        %v2496 = vshrl.u32 %v2495, 7
        %v2497 = vsub.s32 0, %v2496
        %v2498 = vrot.slane %v2493, %v2497
        %v2499 = vlaneseq
        %v2500 = vshrl.u32 %v2499, 7
        %v2501 = vsub.s32 1, %v2500
        %v2502 = vrot.slane %v2493, %v2501
        %v2521 = vunpack.c.l.b16 %v2477
        %v2522 = vunpack.c.h.b16 %v2477
        %v2523 = vunpack.c.l.b16 %v2478
        %v2524 = vunpack.c.h.b16 %v2478
        %v2525 = vunpack.c.l.b16 %v2479
        %v2526 = vunpack.c.h.b16 %v2479
        %v2527 = vunpack.c.l.b16 %v2480
        %v2528 = vunpack.c.h.b16 %v2480
        %v2529 = vunpack.c.l.b16 %v2481
        %v2530 = vunpack.c.h.b16 %v2481
        %v2531 = vunpack.c.l.b16 %v2482
        %v2532 = vunpack.c.h.b16 %v2482
        %v2533 = vunpack.c.l.b16 %v2483
        %v2534 = vunpack.c.h.b16 %v2483
        %v2535 = vunpack.c.l.b16 %v2484
        %v2536 = vunpack.c.h.b16 %v2484
        %v2537 = vunpack.c.l.b16 %v2485
        %v2538 = vunpack.c.h.b16 %v2485
        %v2539 = vunpack.c.l.b16 %v2486
        %v2540 = vunpack.c.h.b16 %v2486
        %v2541 = vunpack.c.l.b16 %v2487
        %v2542 = vunpack.c.h.b16 %v2487
        %v2543 = vunpack.c.l.b16 %v2488
        %v2544 = vunpack.c.h.b16 %v2488
        %v2545 = vunpack.c.l.b16 %v2489
        %v2546 = vunpack.c.h.b16 %v2489
        %v2547 = vunpack.c.l.b16 %v2490
        %v2548 = vunpack.c.h.b16 %v2490
        %v2549 = vunpack.c.l.b16 %v2491
        %v2550 = vunpack.c.h.b16 %v2491
        %v2551 = vunpack.c.l.b16 %v2492
        %v2552 = vunpack.c.h.b16 %v2492
        %v2553 = vpack.c.b16 %v2523, %v2521
        %v2554 = vpack.c.b16 %v2524, %v2522
        %v2555 = vpack.c.b16 %v2527, %v2525
        %v2556 = vpack.c.b16 %v2528, %v2526
        %v2557 = vpack.c.b16 %v2531, %v2529
        %v2558 = vpack.c.b16 %v2532, %v2530
        %v2559 = vpack.c.b16 %v2535, %v2533
        %v2560 = vpack.c.b16 %v2536, %v2534
        %v2561 = vpack.c.b16 %v2539, %v2537
        %v2562 = vpack.c.b16 %v2540, %v2538
        %v2563 = vpack.c.b16 %v2543, %v2541
        %v2564 = vpack.c.b16 %v2544, %v2542
        %v2565 = vpack.c.b16 %v2547, %v2545
        %v2566 = vpack.c.b16 %v2548, %v2546
        %v2567 = vpack.c.b16 %v2551, %v2549
        %v2568 = vpack.c.b16 %v2552, %v2550
        %2585 = vmatprep.subr.bf16.mxu0 %v2554
        %2586 = vmatpush1.bf16.msra.mxu0 %v2553
        %2587 = vmatprep.subr.bf16.mxu0 %v2556
        %2588 = vmatpush1.bf16.msra.mxu0 %v2555
        %2589 = vmatprep.subr.bf16.mxu0 %v2558
        %2590 = vmatpush1.bf16.msra.mxu0 %v2557
        %2591 = vmatprep.subr.bf16.mxu0 %v2560
        %2592 = vmatpush1.bf16.msra.mxu0 %v2559
        %2593 = vmatprep.subr.bf16.mxu0 %v2562
        %2594 = vmatpush1.bf16.msra.mxu0 %v2561
        %2595 = vmatprep.subr.bf16.mxu0 %v2564
        %2596 = vmatpush1.bf16.msra.mxu0 %v2563
        %2597 = vmatprep.subr.bf16.mxu0 %v2566
        %2598 = vmatpush1.bf16.msra.mxu0 %v2565
        %2599 = vmatprep.subr.bf16.mxu0 %v2568
        %2600 = vmatpush1.bf16.msra.mxu0 %v2567
        %2601 = vmatprep.subr.bf16.mxu0 0
        %2602 = vmatpush1.bf16.msra.mxu0 0
        %2603 = vmatprep.subr.bf16.mxu0 0
        %2604 = vmatpush1.bf16.msra.mxu0 0
        %2605 = vmatprep.subr.bf16.mxu0 0
        %2606 = vmatpush1.bf16.msra.mxu0 0
        %2607 = vmatprep.subr.bf16.mxu0 0
        %2608 = vmatpush1.bf16.msra.mxu0 0
        %2609 = vmatprep.subr.bf16.mxu0 0
        %2610 = vmatpush1.bf16.msra.mxu0 0
        %2611 = vmatprep.subr.bf16.mxu0 0
        %2612 = vmatpush1.bf16.msra.mxu0 0
        %2613 = vmatprep.subr.bf16.mxu0 0
        %2614 = vmatpush1.bf16.msra.mxu0 0
        %2615 = vmatprep.subr.bf16.mxu0 0
        %2616 = vmatpush1.bf16.msra.mxu0 0
        %2617 = vmatprep.mubr.bf16.mxu0 0
        %2618 = vmatmul.mubr.bf16.gmra.mrb[0].mxu0 %v2469
        %v2619 = vpop.f32.mrb[0].mxu0
        %v2620 = vadd.f32 %v2498, %v2619
        %v2621 = vpop.f32.mrb[0].mxu0
        %v2622 = vadd.f32 %v2502, %v2621
        %v2623 = vpop.f32.mrb[0].mxu0
        %v2624 = vadd.f32 %v2498, %v2623
        %v2625 = vpop.f32.mrb[0].mxu0
        %v2626 = vadd.f32 %v2502, %v2625
        %2627 = vmatprep.mubr.bf16.mxu0 0
        %2628 = vmatmul.mubr.bf16.gmra.mrb[0].mxu0 %v2470
        %v2629 = vpop.f32.mrb[0].mxu0
        %v2630 = vadd.f32 %v2498, %v2629
        %v2631 = vpop.f32.mrb[0].mxu0
        %v2632 = vadd.f32 %v2502, %v2631
        %v2633 = vpop.f32.mrb[0].mxu0
        %v2634 = vadd.f32 %v2498, %v2633
        %v2635 = vpop.f32.mrb[0].mxu0
        %v2636 = vadd.f32 %v2502, %v2635
        %2637 = vmatprep.mubr.bf16.mxu0 0
        %2638 = vmatmul.mubr.bf16.gmra.mrb[0].mxu0 %v2471
        %v2639 = vpop.f32.mrb[0].mxu0
        %v2640 = vadd.f32 %v2498, %v2639
        %v2641 = vpop.f32.mrb[0].mxu0
        %v2642 = vadd.f32 %v2502, %v2641
        %v2643 = vpop.f32.mrb[0].mxu0
        %v2644 = vadd.f32 %v2498, %v2643
        %v2645 = vpop.f32.mrb[0].mxu0
        %v2646 = vadd.f32 %v2502, %v2645
        %2647 = vmatprep.mubr.bf16.mxu0 0
        %2648 = vmatmul.mubr.bf16.gmra.mrb[0].mxu0 %v2472
        %v2649 = vpop.f32.mrb[0].mxu0
        %v2650 = vadd.f32 %v2498, %v2649
        %v2651 = vpop.f32.mrb[0].mxu0
        %v2652 = vadd.f32 %v2502, %v2651
        %v2653 = vpop.f32.mrb[0].mxu0
        %v2654 = vadd.f32 %v2498, %v2653
        %v2655 = vpop.f32.mrb[0].mxu0
        %v2656 = vadd.f32 %v2502, %v2655
        %2657 = vmatprep.mubr.bf16.mxu0 0
        %2658 = vmatmul.mubr.bf16.gmra.mrb[0].mxu0 %v2473
        %v2659 = vpop.f32.mrb[0].mxu0
        %v2660 = vadd.f32 %v2498, %v2659
        %v2661 = vpop.f32.mrb[0].mxu0
        %v2662 = vadd.f32 %v2502, %v2661
        %v2663 = vpop.f32.mrb[0].mxu0
        %v2664 = vadd.f32 %v2498, %v2663
        %v2665 = vpop.f32.mrb[0].mxu0
        %v2666 = vadd.f32 %v2502, %v2665
        %2667 = vmatprep.mubr.bf16.mxu0 0
        %2668 = vmatmul.mubr.bf16.gmra.mrb[0].mxu0 %v2474
        %v2669 = vpop.f32.mrb[0].mxu0
        %v2670 = vadd.f32 %v2498, %v2669
        %v2671 = vpop.f32.mrb[0].mxu0
        %v2672 = vadd.f32 %v2502, %v2671
        %v2673 = vpop.f32.mrb[0].mxu0
        %v2674 = vadd.f32 %v2498, %v2673
        %v2675 = vpop.f32.mrb[0].mxu0
        %v2676 = vadd.f32 %v2502, %v2675
        %2677 = vmatprep.mubr.bf16.mxu0 0
        %2678 = vmatmul.mubr.bf16.gmra.mrb[0].mxu0 %v2475
        %v2679 = vpop.f32.mrb[0].mxu0
        %v2680 = vadd.f32 %v2498, %v2679
        %v2681 = vpop.f32.mrb[0].mxu0
        %v2682 = vadd.f32 %v2502, %v2681
        %v2683 = vpop.f32.mrb[0].mxu0
        %v2684 = vadd.f32 %v2498, %v2683
        %v2685 = vpop.f32.mrb[0].mxu0
        %v2686 = vadd.f32 %v2502, %v2685
        %2687 = vmatprep.mubr.bf16.mxu0 0
        %2688 = vmatmul.mubr.bf16.gmra.mrb[0].mxu0 %v2476
        %v2689 = vpop.f32.mrb[0].mxu0
        %v2690 = vadd.f32 %v2498, %v2689
        %v2691 = vpop.f32.mrb[0].mxu0
        %v2692 = vadd.f32 %v2502, %v2691
        %v2693 = vpop.f32.mrb[0].mxu0
        %v2694 = vadd.f32 %v2498, %v2693
        %v2695 = vpop.f32.mrb[0].mxu0
        %v2696 = vadd.f32 %v2502, %v2695
        %2697 = vdwg.mxu0
        %v2698 = vpack.c.bf16 %v2624, %v2620
        %v2699 = vpack.c.bf16 %v2634, %v2630
        %v2700 = vpack.c.bf16 %v2644, %v2640
        %v2701 = vpack.c.bf16 %v2654, %v2650
        %v2702 = vpack.c.bf16 %v2664, %v2660
        %v2703 = vpack.c.bf16 %v2674, %v2670
        %v2704 = vpack.c.bf16 %v2684, %v2680
        %v2705 = vpack.c.bf16 %v2694, %v2690
        %v2706 = vld [vmem:[%s8] sm:$0xf]
        %v2707 = vld [vmem:[%s8 + $0x4] sm:$0xf]
        %v2708 = vld [vmem:[%s8 + $0x8] sm:$0xf]
        %v2709 = vld [vmem:[%s8 + $0xc] sm:$0xf]
        %v2710 = vld [vmem:[%s8 + $0x10] sm:$0xf]
        %v2711 = vld [vmem:[%s8 + $0x14] sm:$0xf]
        %v2712 = vld [vmem:[%s8 + $0x18] sm:$0xf]
        %v2713 = vld [vmem:[%s8 + $0x1c] sm:$0xf]
        %v2714 = vld [vmem:[%s8 + $0x20] sm:$0xf]
        %v2715 = vld [vmem:[%s8 + $0x24] sm:$0xf]
        %v2716 = vld [vmem:[%s8 + $0x28] sm:$0xf]
        %v2717 = vld [vmem:[%s8 + $0x2c] sm:$0xf]
        %v2718 = vld [vmem:[%s8 + $0x30] sm:$0xf]
        %v2719 = vld [vmem:[%s8 + $0x34] sm:$0xf]
        %v2720 = vld [vmem:[%s8 + $0x38] sm:$0xf]
        %v2721 = vld [vmem:[%s8 + $0x3c] sm:$0xf]
        %v2722 = vld [vmem:[%s9] sm:$0xf]
        %v2723 = vld [vmem:[%s9 + $0x4] sm:$0xf]
        %v2724 = vld [vmem:[%s9 + $0x8] sm:$0xf]
        %v2725 = vld [vmem:[%s9 + $0xc] sm:$0xf]
        %v2726 = vld [vmem:[%s9 + $0x10] sm:$0xf]
        %v2727 = vld [vmem:[%s9 + $0x14] sm:$0xf]
        %v2728 = vld [vmem:[%s9 + $0x18] sm:$0xf]
        %v2729 = vld [vmem:[%s9 + $0x1c] sm:$0xf]
        %v2730 = vld [vmem:[%s9 + $0x20] sm:$0xf]
        %v2731 = vld [vmem:[%s9 + $0x24] sm:$0xf]
        %v2732 = vld [vmem:[%s9 + $0x28] sm:$0xf]
        %v2733 = vld [vmem:[%s9 + $0x2c] sm:$0xf]
        %v2750 = vunpack.c.l.b16 %v526
        %v2751 = vunpack.c.l.b16 %v527
        %v2752 = vunpack.c.l.b16 %v528
        %v2753 = vunpack.c.l.b16 %v529
        %v2754 = vunpack.c.l.b16 %v530
        %v2755 = vunpack.c.l.b16 %v531
        %v2756 = vunpack.c.l.b16 %v532
        %v2757 = vunpack.c.l.b16 %v533
        %v2758 = vunpack.c.l.b16 %v534
        %v2759 = vunpack.c.l.b16 %v535
        %v2760 = vunpack.c.l.b16 %v536
        %v2761 = vunpack.c.l.b16 %v537
        %v2762 = vunpack.c.l.b16 %v538
        %v2763 = vunpack.c.l.b16 %v539
        %v2764 = vunpack.c.l.b16 %v540
        %v2765 = vunpack.c.l.b16 %v541
        %v2766 = vpack.c.b16 %v2751, %v2750
        %v2767 = vpack.c.b16 %v2753, %v2752
        %v2768 = vpack.c.b16 %v2755, %v2754
        %v2769 = vpack.c.b16 %v2757, %v2756
        %v2770 = vpack.c.b16 %v2759, %v2758
        %v2771 = vpack.c.b16 %v2761, %v2760
        %v2772 = vpack.c.b16 %v2763, %v2762
        %v2773 = vpack.c.b16 %v2765, %v2764
        %v2786 = vunpack.c.l.b16 %v2722
        %v2787 = vunpack.c.l.b16 %v2723
        %v2788 = vunpack.c.l.b16 %v2724
        %v2789 = vunpack.c.l.b16 %v2725
        %v2790 = vunpack.c.l.b16 %v2726
        %v2791 = vunpack.c.l.b16 %v2727
        %v2792 = vunpack.c.l.b16 %v2728
        %v2793 = vunpack.c.l.b16 %v2729
        %v2794 = vunpack.c.l.b16 %v2730
        %v2795 = vunpack.c.l.b16 %v2731
        %v2796 = vunpack.c.l.b16 %v2732
        %v2797 = vunpack.c.l.b16 %v2733
        %v2798 = vpack.c.b16 %v2787, %v2786
        %v2799 = vpack.c.b16 %v2789, %v2788
        %v2800 = vpack.c.b16 %v2791, %v2790
        %v2801 = vpack.c.b16 %v2793, %v2792
        %v2802 = vpack.c.b16 %v2795, %v2794
        %v2803 = vpack.c.b16 %v2797, %v2796
        %vm2810 = vcmask 785408
        %v2812 = vsel %vm2810, %v2766, 0
        %v2815 = vsel %vm2810, %v2767, 0
        %v2818 = vsel %vm2810, %v2768, 0
        %v2821 = vsel %vm2810, %v2769, 0
        %v2824 = vsel %vm2810, %v2770, 0
        %v2827 = vsel %vm2810, %v2771, 0
        %v2830 = vsel %vm2810, %v2772, 0
        %v2833 = vsel %vm2810, %v2773, 0
        %2835 = vmatprep.subr.bf16.mxu0 0
        %2836 = vmatpush1.bf16.msra.mxu0 %v2798
        %2837 = vmatprep.subr.bf16.mxu0 0
        %2838 = vmatpush1.bf16.msra.mxu0 %v2799
        %2839 = vmatprep.subr.bf16.mxu0 0
        %2840 = vmatpush1.bf16.msra.mxu0 %v2800
        %2841 = vmatprep.subr.bf16.mxu0 0
        %2842 = vmatpush1.bf16.msra.mxu0 %v2801
        %2843 = vmatprep.subr.bf16.mxu0 0
        %2844 = vmatpush1.bf16.msra.mxu0 %v2802
        %2845 = vmatprep.subr.bf16.mxu0 0
        %2846 = vmatpush1.bf16.msra.mxu0 %v2803
        %2847 = vmatprep.subr.bf16.mxu0 0
        %2848 = vmatpush1.bf16.msra.mxu0 0
        %2849 = vmatprep.subr.bf16.mxu0 0
        %2850 = vmatpush1.bf16.msra.mxu0 0
        %2851 = vmatprep.subr.bf16.mxu0 0
        %2852 = vmatpush1.bf16.msra.mxu0 0
        %2853 = vmatprep.subr.bf16.mxu0 0
        %2854 = vmatpush1.bf16.msra.mxu0 0
        %2855 = vmatprep.subr.bf16.mxu0 0
        %2856 = vmatpush1.bf16.msra.mxu0 0
        %2857 = vmatprep.subr.bf16.mxu0 0
        %2858 = vmatpush1.bf16.msra.mxu0 0
        %2859 = vmatprep.subr.bf16.mxu0 0
        %2860 = vmatpush1.bf16.msra.mxu0 0
        %2861 = vmatprep.subr.bf16.mxu0 0
        %2862 = vmatpush1.bf16.msra.mxu0 0
        %2863 = vmatprep.subr.bf16.mxu0 0
        %2864 = vmatpush1.bf16.msra.mxu0 0
        %2865 = vmatprep.subr.bf16.mxu0 0
        %2866 = vmatpush1.bf16.msra.mxu0 0
        %2867 = vmatprep.mubr.bf16.mxu0 0
        %2868 = vmatmul.mubr.bf16.gmra.mrb[0].mxu0 %v2812
        %v2869 = vpop.f32.mrb[0].mxu0
        %v2870 = vadd.f32 0.0, %v2869
        %v2871 = vpop.f32.mrb[0].mxu0
        %v2872 = vpop.f32.mrb[0].mxu0
        %v2873 = vadd.f32 0.0, %v2872
        %v2874 = vpop.f32.mrb[0].mxu0
        %2875 = vmatprep.mubr.bf16.mxu0 0
        %2876 = vmatmul.mubr.bf16.gmra.mrb[0].mxu0 %v2815
        %v2877 = vpop.f32.mrb[0].mxu0
        %v2878 = vadd.f32 0.0, %v2877
        %v2879 = vpop.f32.mrb[0].mxu0
        %v2880 = vpop.f32.mrb[0].mxu0
        %v2881 = vadd.f32 0.0, %v2880
        %v2882 = vpop.f32.mrb[0].mxu0
        %2883 = vmatprep.mubr.bf16.mxu0 0
        %2884 = vmatmul.mubr.bf16.gmra.mrb[0].mxu0 %v2818
        %v2885 = vpop.f32.mrb[0].mxu0
        %v2886 = vadd.f32 0.0, %v2885
        %v2887 = vpop.f32.mrb[0].mxu0
        %v2888 = vpop.f32.mrb[0].mxu0
        %v2889 = vadd.f32 0.0, %v2888
        %v2890 = vpop.f32.mrb[0].mxu0
        %2891 = vmatprep.mubr.bf16.mxu0 0
        %2892 = vmatmul.mubr.bf16.gmra.mrb[0].mxu0 %v2821
        %v2893 = vpop.f32.mrb[0].mxu0
        %v2894 = vadd.f32 0.0, %v2893
        %v2895 = vpop.f32.mrb[0].mxu0
        %v2896 = vpop.f32.mrb[0].mxu0
        %v2897 = vadd.f32 0.0, %v2896
        %v2898 = vpop.f32.mrb[0].mxu0
        %2899 = vmatprep.mubr.bf16.mxu0 0
        %2900 = vmatmul.mubr.bf16.gmra.mrb[0].mxu0 %v2824
        %v2901 = vpop.f32.mrb[0].mxu0
        %v2902 = vadd.f32 0.0, %v2901
        %v2903 = vpop.f32.mrb[0].mxu0
        %v2904 = vpop.f32.mrb[0].mxu0
        %v2905 = vadd.f32 0.0, %v2904
        %v2906 = vpop.f32.mrb[0].mxu0
        %2907 = vmatprep.mubr.bf16.mxu0 0
        %2908 = vmatmul.mubr.bf16.gmra.mrb[0].mxu0 %v2827
        %v2909 = vpop.f32.mrb[0].mxu0
        %v2910 = vadd.f32 0.0, %v2909
        %v2911 = vpop.f32.mrb[0].mxu0
        %v2912 = vpop.f32.mrb[0].mxu0
        %v2913 = vadd.f32 0.0, %v2912
        %v2914 = vpop.f32.mrb[0].mxu0
        %2915 = vmatprep.mubr.bf16.mxu0 0
        %2916 = vmatmul.mubr.bf16.gmra.mrb[0].mxu0 %v2830
        %v2917 = vpop.f32.mrb[0].mxu0
        %v2918 = vadd.f32 0.0, %v2917
        %v2919 = vpop.f32.mrb[0].mxu0
        %v2920 = vpop.f32.mrb[0].mxu0
        %v2921 = vadd.f32 0.0, %v2920
        %v2922 = vpop.f32.mrb[0].mxu0
        %2923 = vmatprep.mubr.bf16.mxu0 0
        %2924 = vmatmul.mubr.bf16.gmra.mrb[0].mxu0 %v2833
        %v2925 = vpop.f32.mrb[0].mxu0
        %v2926 = vadd.f32 0.0, %v2925
        %v2927 = vpop.f32.mrb[0].mxu0
        %v2928 = vpop.f32.mrb[0].mxu0
        %v2929 = vadd.f32 0.0, %v2928
        %v2930 = vpop.f32.mrb[0].mxu0
        %2931 = vdwg.mxu0
        %v2948 = vunpack.c.l.b16 %v2706
        %v2949 = vunpack.c.l.b16 %v2707
        %v2950 = vunpack.c.l.b16 %v2708
        %v2951 = vunpack.c.l.b16 %v2709
        %v2952 = vunpack.c.l.b16 %v2710
        %v2953 = vunpack.c.l.b16 %v2711
        %v2954 = vunpack.c.l.b16 %v2712
        %v2955 = vunpack.c.l.b16 %v2713
        %v2956 = vunpack.c.l.b16 %v2714
        %v2957 = vunpack.c.l.b16 %v2715
        %v2958 = vunpack.c.l.b16 %v2716
        %v2959 = vunpack.c.l.b16 %v2717
        %v2960 = vunpack.c.l.b16 %v2718
        %v2961 = vunpack.c.l.b16 %v2719
        %v2962 = vunpack.c.l.b16 %v2720
        %v2963 = vunpack.c.l.b16 %v2721
        %v2964 = vpack.c.b16 %v2949, %v2948
        %v2965 = vpack.c.b16 %v2951, %v2950
        %v2966 = vpack.c.b16 %v2953, %v2952
        %v2967 = vpack.c.b16 %v2955, %v2954
        %v2968 = vpack.c.b16 %v2957, %v2956
        %v2969 = vpack.c.b16 %v2959, %v2958
        %v2970 = vpack.c.b16 %v2961, %v2960
        %v2971 = vpack.c.b16 %v2963, %v2962
        %2980 = vmatprep.subr.bf16.mxu0 0
        %2981 = vmatpush1.bf16.msra.mxu0 %v2964
        %2982 = vmatprep.subr.bf16.mxu0 0
        %2983 = vmatpush1.bf16.msra.mxu0 %v2965
        %2984 = vmatprep.subr.bf16.mxu0 0
        %2985 = vmatpush1.bf16.msra.mxu0 %v2966
        %2986 = vmatprep.subr.bf16.mxu0 0
        %2987 = vmatpush1.bf16.msra.mxu0 %v2967
        %2988 = vmatprep.subr.bf16.mxu0 0
        %2989 = vmatpush1.bf16.msra.mxu0 %v2968
        %2990 = vmatprep.subr.bf16.mxu0 0
        %2991 = vmatpush1.bf16.msra.mxu0 %v2969
        %2992 = vmatprep.subr.bf16.mxu0 0
        %2993 = vmatpush1.bf16.msra.mxu0 %v2970
        %2994 = vmatprep.subr.bf16.mxu0 0
        %2995 = vmatpush1.bf16.msra.mxu0 %v2971
        %2996 = vmatprep.subr.bf16.mxu0 0
        %2997 = vmatpush1.bf16.msra.mxu0 0
        %2998 = vmatprep.subr.bf16.mxu0 0
        %2999 = vmatpush1.bf16.msra.mxu0 0
        %3000 = vmatprep.subr.bf16.mxu0 0
        %3001 = vmatpush1.bf16.msra.mxu0 0
        %3002 = vmatprep.subr.bf16.mxu0 0
        %3003 = vmatpush1.bf16.msra.mxu0 0
        %3004 = vmatprep.subr.bf16.mxu0 0
        %3005 = vmatpush1.bf16.msra.mxu0 0
        %3006 = vmatprep.subr.bf16.mxu0 0
        %3007 = vmatpush1.bf16.msra.mxu0 0
        %3008 = vmatprep.subr.bf16.mxu0 0
        %3009 = vmatpush1.bf16.msra.mxu0 0
        %3010 = vmatprep.subr.bf16.mxu0 0
        %3011 = vmatpush1.bf16.msra.mxu0 0
        %3012 = vmatprep.mubr.bf16.mxu0 0
        %3013 = vmatmul.mubr.bf16.gmra.mrb[0].mxu0 %v2698
        %v3014 = vpop.f32.mrb[0].mxu0
        %v3015 = vadd.f32 %v2870, %v3014
        %v3016 = vpop.f32.mrb[0].mxu0
        %v3017 = vpop.f32.mrb[0].mxu0
        %v3018 = vadd.f32 %v2873, %v3017
        %v3019 = vpop.f32.mrb[0].mxu0
        %3020 = vmatprep.mubr.bf16.mxu0 0
        %3021 = vmatmul.mubr.bf16.gmra.mrb[0].mxu0 %v2699
        %v3022 = vpop.f32.mrb[0].mxu0
        %v3023 = vadd.f32 %v2878, %v3022
        %v3024 = vpop.f32.mrb[0].mxu0
        %v3025 = vpop.f32.mrb[0].mxu0
        %v3026 = vadd.f32 %v2881, %v3025
        %v3027 = vpop.f32.mrb[0].mxu0
        %3028 = vmatprep.mubr.bf16.mxu0 0
        %3029 = vmatmul.mubr.bf16.gmra.mrb[0].mxu0 %v2700
        %v3030 = vpop.f32.mrb[0].mxu0
        %v3031 = vadd.f32 %v2886, %v3030
        %v3032 = vpop.f32.mrb[0].mxu0
        %v3033 = vpop.f32.mrb[0].mxu0
        %v3034 = vadd.f32 %v2889, %v3033
        %v3035 = vpop.f32.mrb[0].mxu0
        %3036 = vmatprep.mubr.bf16.mxu0 0
        %3037 = vmatmul.mubr.bf16.gmra.mrb[0].mxu0 %v2701
        %v3038 = vpop.f32.mrb[0].mxu0
        %v3039 = vadd.f32 %v2894, %v3038
        %v3040 = vpop.f32.mrb[0].mxu0
        %v3041 = vpop.f32.mrb[0].mxu0
        %v3042 = vadd.f32 %v2897, %v3041
        %v3043 = vpop.f32.mrb[0].mxu0
        %3044 = vmatprep.mubr.bf16.mxu0 0
        %3045 = vmatmul.mubr.bf16.gmra.mrb[0].mxu0 %v2702
        %v3046 = vpop.f32.mrb[0].mxu0
        %v3047 = vadd.f32 %v2902, %v3046
        %v3048 = vpop.f32.mrb[0].mxu0
        %v3049 = vpop.f32.mrb[0].mxu0
        %v3050 = vadd.f32 %v2905, %v3049
        %v3051 = vpop.f32.mrb[0].mxu0
        %3052 = vmatprep.mubr.bf16.mxu0 0
        %3053 = vmatmul.mubr.bf16.gmra.mrb[0].mxu0 %v2703
        %v3054 = vpop.f32.mrb[0].mxu0
        %v3055 = vadd.f32 %v2910, %v3054
        %v3056 = vpop.f32.mrb[0].mxu0
        %v3057 = vpop.f32.mrb[0].mxu0
        %v3058 = vadd.f32 %v2913, %v3057
        %v3059 = vpop.f32.mrb[0].mxu0
        %3060 = vmatprep.mubr.bf16.mxu0 0
        %3061 = vmatmul.mubr.bf16.gmra.mrb[0].mxu0 %v2704
        %v3062 = vpop.f32.mrb[0].mxu0
        %v3063 = vadd.f32 %v2918, %v3062
        %v3064 = vpop.f32.mrb[0].mxu0
        %v3065 = vpop.f32.mrb[0].mxu0
        %v3066 = vadd.f32 %v2921, %v3065
        %v3067 = vpop.f32.mrb[0].mxu0
        %3068 = vmatprep.mubr.bf16.mxu0 0
        %3069 = vmatmul.mubr.bf16.gmra.mrb[0].mxu0 %v2705
        %v3070 = vpop.f32.mrb[0].mxu0
        %v3071 = vadd.f32 %v2926, %v3070
        %v3072 = vpop.f32.mrb[0].mxu0
        %v3073 = vpop.f32.mrb[0].mxu0
        %v3074 = vadd.f32 %v2929, %v3073
        %v3075 = vpop.f32.mrb[0].mxu0
        %3076 = vdwg.mxu0
        %v3077 = vld [vmem:[#allocation6] sm:$0x1]
        %v3079 = vlaneseq
        %v3080 = vshrl.u32 %v3079, 7
        %v3081 = vsub.s32 0, %v3080
        %v3082 = vrot.slane %v3077, %v3081
        %v3084 = vadd.f32 %v3015, %v3082
        %v3085 = vadd.f32 %v3018, %v3082
        %v3086 = vadd.f32 %v3023, %v3082
        %v3087 = vadd.f32 %v3026, %v3082
        %v3088 = vadd.f32 %v3031, %v3082
        %v3089 = vadd.f32 %v3034, %v3082
        %v3090 = vadd.f32 %v3039, %v3082
        %v3091 = vadd.f32 %v3042, %v3082
        %v3092 = vadd.f32 %v3047, %v3082
        %v3093 = vadd.f32 %v3050, %v3082
        %v3094 = vadd.f32 %v3055, %v3082
        %v3095 = vadd.f32 %v3058, %v3082
        %v3096 = vadd.f32 %v3063, %v3082
        %v3097 = vadd.f32 %v3066, %v3082
        %v3098 = vadd.f32 %v3071, %v3082
        %v3099 = vadd.f32 %v3074, %v3082
        %v3100 = vmax.f32 %v3084, 0.0
        %v3101 = vmax.f32 %v3085, 0.0
        %v3102 = vmax.f32 %v3086, 0.0
        %v3103 = vmax.f32 %v3087, 0.0
        %v3104 = vmax.f32 %v3088, 0.0
        %v3105 = vmax.f32 %v3089, 0.0
        %v3106 = vmax.f32 %v3090, 0.0
        %v3107 = vmax.f32 %v3091, 0.0
        %v3108 = vmax.f32 %v3092, 0.0
        %v3109 = vmax.f32 %v3093, 0.0
        %v3110 = vmax.f32 %v3094, 0.0
        %v3111 = vmax.f32 %v3095, 0.0
        %v3112 = vmax.f32 %v3096, 0.0
        %v3113 = vmax.f32 %v3097, 0.0
        %v3114 = vmax.f32 %v3098, 0.0
        %v3115 = vmax.f32 %v3099, 0.0
        %v3116 = vpack.c.bf16 %v3101, %v3100
        %v3117 = vpack.c.bf16 %v3103, %v3102
        %v3118 = vpack.c.bf16 %v3105, %v3104
        %v3119 = vpack.c.bf16 %v3107, %v3106
        %v3120 = vpack.c.bf16 %v3109, %v3108
        %v3121 = vpack.c.bf16 %v3111, %v3110
        %v3122 = vpack.c.bf16 %v3113, %v3112
        %v3123 = vpack.c.bf16 %v3115, %v3114
        %v3124 = vld [vmem:[%s11] sm:$0xf]
        %v3125 = vld [vmem:[%s11 + $0x4] sm:$0xf]
        %v3126 = vld [vmem:[%s11 + $0x8] sm:$0xf]
        %v3127 = vld [vmem:[%s11 + $0xc] sm:$0xf]
        %v3128 = vld [vmem:[%s11 + $0x10] sm:$0xf]
        %v3129 = vld [vmem:[%s11 + $0x14] sm:$0xf]
        %v3130 = vld [vmem:[%s11 + $0x18] sm:$0xf]
        %v3131 = vld [vmem:[%s11 + $0x1c] sm:$0xf]
        %v3132 = vld [vmem:[%s12] sm:$0x1]
        %v3134 = vlaneseq
        %v3135 = vshrl.u32 %v3134, 7
        %v3136 = vsub.s32 0, %v3135
        %v3137 = vrot.slane %v3132, %v3136
        %v3147 = vunpack.c.l.b16 %v3124
        %v3148 = vunpack.c.l.b16 %v3125
        %v3149 = vunpack.c.l.b16 %v3126
        %v3150 = vunpack.c.l.b16 %v3127
        %v3151 = vunpack.c.l.b16 %v3128
        %v3152 = vunpack.c.l.b16 %v3129
        %v3153 = vunpack.c.l.b16 %v3130
        %v3154 = vunpack.c.l.b16 %v3131
        %v3155 = vpack.c.b16 %v3148, %v3147
        %v3156 = vpack.c.b16 %v3150, %v3149
        %v3157 = vpack.c.b16 %v3152, %v3151
        %v3158 = vpack.c.b16 %v3154, %v3153
        %vm3163 = vcmask 523264
        %v3165 = vsel %vm3163, %v3116, 0
        %v3168 = vsel %vm3163, %v3117, 0
        %v3171 = vsel %vm3163, %v3118, 0
        %v3174 = vsel %vm3163, %v3119, 0
        %v3177 = vsel %vm3163, %v3120, 0
        %v3180 = vsel %vm3163, %v3121, 0
        %v3183 = vsel %vm3163, %v3122, 0
        %v3186 = vsel %vm3163, %v3123, 0
        %3188 = vmatprep.subr.bf16.mxu0 0
        %3189 = vmatpush1.bf16.msra.mxu0 %v3155
        %3190 = vmatprep.subr.bf16.mxu0 0
        %3191 = vmatpush1.bf16.msra.mxu0 %v3156
        %3192 = vmatprep.subr.bf16.mxu0 0
        %3193 = vmatpush1.bf16.msra.mxu0 %v3157
        %3194 = vmatprep.subr.bf16.mxu0 0
        %3195 = vmatpush1.bf16.msra.mxu0 %v3158
        %3196 = vmatprep.subr.bf16.mxu0 0
        %3197 = vmatpush1.bf16.msra.mxu0 0
        %3198 = vmatprep.subr.bf16.mxu0 0
        %3199 = vmatpush1.bf16.msra.mxu0 0
        %3200 = vmatprep.subr.bf16.mxu0 0
        %3201 = vmatpush1.bf16.msra.mxu0 0
        %3202 = vmatprep.subr.bf16.mxu0 0
        %3203 = vmatpush1.bf16.msra.mxu0 0
        %3204 = vmatprep.subr.bf16.mxu0 0
        %3205 = vmatpush1.bf16.msra.mxu0 0
        %3206 = vmatprep.subr.bf16.mxu0 0
        %3207 = vmatpush1.bf16.msra.mxu0 0
        %3208 = vmatprep.subr.bf16.mxu0 0
        %3209 = vmatpush1.bf16.msra.mxu0 0
        %3210 = vmatprep.subr.bf16.mxu0 0
        %3211 = vmatpush1.bf16.msra.mxu0 0
        %3212 = vmatprep.subr.bf16.mxu0 0
        %3213 = vmatpush1.bf16.msra.mxu0 0
        %3214 = vmatprep.subr.bf16.mxu0 0
        %3215 = vmatpush1.bf16.msra.mxu0 0
        %3216 = vmatprep.subr.bf16.mxu0 0
        %3217 = vmatpush1.bf16.msra.mxu0 0
        %3218 = vmatprep.subr.bf16.mxu0 0
        %3219 = vmatpush1.bf16.msra.mxu0 0
        %3220 = vmatprep.mubr.bf16.mxu0 0
        %3221 = vmatmul.mubr.bf16.gmra.mrb[0].mxu0 %v3165
        %v3222 = vpop.f32.mrb[0].mxu0
        %v3223 = vadd.f32 %v3137, %v3222
        %v3224 = vpop.f32.mrb[0].mxu0
        %v3225 = vpop.f32.mrb[0].mxu0
        %v3226 = vadd.f32 %v3137, %v3225
        %v3227 = vpop.f32.mrb[0].mxu0
        %3228 = vmatprep.mubr.bf16.mxu0 0
        %3229 = vmatmul.mubr.bf16.gmra.mrb[0].mxu0 %v3168
        %v3230 = vpop.f32.mrb[0].mxu0
        %v3231 = vadd.f32 %v3137, %v3230
        %v3232 = vpop.f32.mrb[0].mxu0
        %v3233 = vpop.f32.mrb[0].mxu0
        %v3234 = vadd.f32 %v3137, %v3233
        %v3235 = vpop.f32.mrb[0].mxu0
        %3236 = vmatprep.mubr.bf16.mxu0 0
        %3237 = vmatmul.mubr.bf16.gmra.mrb[0].mxu0 %v3171
        %v3238 = vpop.f32.mrb[0].mxu0
        %v3239 = vadd.f32 %v3137, %v3238
        %v3240 = vpop.f32.mrb[0].mxu0
        %v3241 = vpop.f32.mrb[0].mxu0
        %v3242 = vadd.f32 %v3137, %v3241
        %v3243 = vpop.f32.mrb[0].mxu0
        %3244 = vmatprep.mubr.bf16.mxu0 0
        %3245 = vmatmul.mubr.bf16.gmra.mrb[0].mxu0 %v3174
        %v3246 = vpop.f32.mrb[0].mxu0
        %v3247 = vadd.f32 %v3137, %v3246
        %v3248 = vpop.f32.mrb[0].mxu0
        %v3249 = vpop.f32.mrb[0].mxu0
        %v3250 = vadd.f32 %v3137, %v3249
        %v3251 = vpop.f32.mrb[0].mxu0
        %3252 = vmatprep.mubr.bf16.mxu0 0
        %3253 = vmatmul.mubr.bf16.gmra.mrb[0].mxu0 %v3177
        %v3254 = vpop.f32.mrb[0].mxu0
        %v3255 = vadd.f32 %v3137, %v3254
        %v3256 = vpop.f32.mrb[0].mxu0
        %v3257 = vpop.f32.mrb[0].mxu0
        %v3258 = vadd.f32 %v3137, %v3257
        %v3259 = vpop.f32.mrb[0].mxu0
        %3260 = vmatprep.mubr.bf16.mxu0 0
        %3261 = vmatmul.mubr.bf16.gmra.mrb[0].mxu0 %v3180
        %v3262 = vpop.f32.mrb[0].mxu0
        %v3263 = vadd.f32 %v3137, %v3262
        %v3264 = vpop.f32.mrb[0].mxu0
        %v3265 = vpop.f32.mrb[0].mxu0
        %v3266 = vadd.f32 %v3137, %v3265
        %v3267 = vpop.f32.mrb[0].mxu0
        %3268 = vmatprep.mubr.bf16.mxu0 0
        %3269 = vmatmul.mubr.bf16.gmra.mrb[0].mxu0 %v3183
        %v3270 = vpop.f32.mrb[0].mxu0
        %v3271 = vadd.f32 %v3137, %v3270
        %v3272 = vpop.f32.mrb[0].mxu0
        %v3273 = vpop.f32.mrb[0].mxu0
        %v3274 = vadd.f32 %v3137, %v3273
        %v3275 = vpop.f32.mrb[0].mxu0
        %3276 = vmatprep.mubr.bf16.mxu0 0
        %3277 = vmatmul.mubr.bf16.gmra.mrb[0].mxu0 %v3186
        %v3278 = vpop.f32.mrb[0].mxu0
        %v3279 = vadd.f32 %v3137, %v3278
        %v3280 = vpop.f32.mrb[0].mxu0
        %v3281 = vpop.f32.mrb[0].mxu0
        %v3282 = vadd.f32 %v3137, %v3281
        %v3283 = vpop.f32.mrb[0].mxu0
        %3284 = vdwg.mxu0
        %3301 = vrot.lane.b32.xlu0 %v2622, 12
        %v3302 = vpop.permute.xlu0 %3301
        %3303 = vrot.lane.b32.xlu0 %v2626, 12
        %v3304 = vpop.permute.xlu0 %3303
        %3305 = vrot.lane.b32.xlu0 %v2632, 12
        %v3306 = vpop.permute.xlu0 %3305
        %3307 = vrot.lane.b32.xlu0 %v2636, 12
        %v3308 = vpop.permute.xlu0 %3307
        %3309 = vrot.lane.b32.xlu0 %v2642, 12
        %v3310 = vpop.permute.xlu0 %3309
        %3311 = vrot.lane.b32.xlu0 %v2646, 12
        %v3312 = vpop.permute.xlu0 %3311
        %3313 = vrot.lane.b32.xlu0 %v2652, 12
        %v3314 = vpop.permute.xlu0 %3313
        %3315 = vrot.lane.b32.xlu0 %v2656, 12
        %v3316 = vpop.permute.xlu0 %3315
        %3317 = vrot.lane.b32.xlu0 %v2662, 12
        %v3318 = vpop.permute.xlu0 %3317
        %3319 = vrot.lane.b32.xlu0 %v2666, 12
        %v3320 = vpop.permute.xlu0 %3319
        %3321 = vrot.lane.b32.xlu0 %v2672, 12
        %v3322 = vpop.permute.xlu0 %3321
        %3323 = vrot.lane.b32.xlu0 %v2676, 12
        %v3324 = vpop.permute.xlu0 %3323
        %3325 = vrot.lane.b32.xlu0 %v2682, 12
        %v3326 = vpop.permute.xlu0 %3325
        %3327 = vrot.lane.b32.xlu0 %v2686, 12
        %v3328 = vpop.permute.xlu0 %3327
        %3329 = vrot.lane.b32.xlu0 %v2692, 12
        %v3330 = vpop.permute.xlu0 %3329
        %3331 = vrot.lane.b32.xlu0 %v2696, 12
        %v3332 = vpop.permute.xlu0 %3331
        %vm3349 = vcmask 97280
        %v3350 = vsel %vm3349, %v3223, %v3302
        %v3351 = vsel %vm3349, %v3226, %v3304
        %v3352 = vsel %vm3349, %v3231, %v3306
        %v3353 = vsel %vm3349, %v3234, %v3308
        %v3354 = vsel %vm3349, %v3239, %v3310
        %v3355 = vsel %vm3349, %v3242, %v3312
        %v3356 = vsel %vm3349, %v3247, %v3314
        %v3357 = vsel %vm3349, %v3250, %v3316
        %v3358 = vsel %vm3349, %v3255, %v3318
        %v3359 = vsel %vm3349, %v3258, %v3320
        %v3360 = vsel %vm3349, %v3263, %v3322
        %v3361 = vsel %vm3349, %v3266, %v3324
        %v3362 = vsel %vm3349, %v3271, %v3326
        %v3363 = vsel %vm3349, %v3274, %v3328
        %v3364 = vsel %vm3349, %v3279, %v3330
        %v3365 = vsel %vm3349, %v3282, %v3332
        %vm3366 = vcmask 130048
        %3367 = vst.msk [vmem:[%s507] sm:$0xff] %vm3366, %v3350
        %3368 = vst.msk [vmem:[%s507 + $0x8] sm:$0xff] %vm3366, %v3351
        %3369 = vst.msk [vmem:[%s507 + $0x10] sm:$0xff] %vm3366, %v3352
        %3370 = vst.msk [vmem:[%s507 + $0x18] sm:$0xff] %vm3366, %v3353
        %3371 = vst.msk [vmem:[%s507 + $0x20] sm:$0xff] %vm3366, %v3354
        %3372 = vst.msk [vmem:[%s507 + $0x28] sm:$0xff] %vm3366, %v3355
        %3373 = vst.msk [vmem:[%s507 + $0x30] sm:$0xff] %vm3366, %v3356
        %3374 = vst.msk [vmem:[%s507 + $0x38] sm:$0xff] %vm3366, %v3357
        %3375 = vst.msk [vmem:[%s507 + $0x40] sm:$0xff] %vm3366, %v3358
        %3376 = vst.msk [vmem:[%s507 + $0x48] sm:$0xff] %vm3366, %v3359
        %3377 = vst.msk [vmem:[%s507 + $0x50] sm:$0xff] %vm3366, %v3360
        %3378 = vst.msk [vmem:[%s507 + $0x58] sm:$0xff] %vm3366, %v3361
        %3379 = vst.msk [vmem:[%s507 + $0x60] sm:$0xff] %vm3366, %v3362
        %3380 = vst.msk [vmem:[%s507 + $0x68] sm:$0xff] %vm3366, %v3363
        %3381 = vst.msk [vmem:[%s507 + $0x70] sm:$0xff] %vm3366, %v3364
        %3382 = vst.msk [vmem:[%s507 + $0x78] sm:$0xff] %vm3366, %v3365
        %s3383 = smul.u32 16, %s26
        %p3384 = scmp.lt.s32.totalorder %s3383, 31
        %s3385 = scalar_select %p3384, %s3383, 31
        %s3386 = smul.addr %s3385, 8
        %s3387 = scalar_lea.vmem %s13, %s3386
        // Predicated region
        $region85: #{tpu_custom_call.1} parent=71 // pred_check
          %p3388 = pneg %p327
        $region86: #{tpu_custom_call.1} parent=71 // pred_check_branch
          %3390 = sbr.rel (%p3388) target = $region88
        $region87: #{tpu_custom_call.1} parent=71 // pred_region
          %s3391 = smul.u32 16, %s26
        $region88: #{tpu_custom_call.1} parent=71 // pred_fallthru
          _
      $region72: #{tpu_custom_call.1} parent=5 // pred_fallthru
        _
      %p3392 = scmp.le.s32.totalorder 2, %s21
      // Predicated region
      $region89: #{tpu_custom_call.1} parent=5 // pred_check
        %p3393 = pneg %p3392
      $region90: #{tpu_custom_call.1} parent=5 // pred_check_branch
        %3395 = sbr.rel (%p3393) target = $region92
      $region91: #{tpu_custom_call.1} parent=5 // pred_region
        %s3396 = ssub.s32 %s21, 2
        // Predicated region
        $region93: #{tpu_custom_call.1} parent=91 // pred_check
          %p3397 = pneg %p333
        $region94: #{tpu_custom_call.1} parent=91 // pred_check_branch
          %3399 = sbr.rel (%p3397) target = $region96
        $region95: #{tpu_custom_call.1} parent=91 // pred_region
          %s3400 = smul.u32 16, %s27
          %p3401 = scmp.lt.s32.totalorder %s3400, 31
          %s3402 = scalar_select %p3401, %s3400, 31
          %s3403 = smul.addr %s3402, 8
          %s3404 = scalar_lea.vmem %s13, %s3403
        $region96: #{tpu_custom_call.1} parent=91 // pred_fallthru
          _
      $region92: #{tpu_custom_call.1} parent=5 // pred_fallthru
        _
    $region6: #{tpu_custom_call.1} parent=1 // loop_footer
      %s25 = sadd.s32 1, %s21
    $region7: #{tpu_custom_call.1} parent=1 // loop_footer_branch
      %20 = sbr.rel target = $region3
    $region8: #{tpu_custom_call.1} parent=1 // loop_exit
      _
    %3405 = vsyncpa [#allocation3], 1
    %s3406 = scalar_lea.sflag [#allocation3], 1
    %3407 = vsyncpa %s3406, 1
    %3408 = vsyncpa [#allocation5], 1

</llo_original>
